<compile_context>
chip_gen: v7x
topology: tpu7x:2x2x1
jax: 0.10.0
libtpu: 0.0.40
codegen_flags: <defaults>
</compile_context>

<pallas_src>
import numpy as np
import jax
import jax.numpy as jnp
from jax import lax
from jax.experimental import pallas as pl
from jax.experimental.pallas import tpu as pltpu

# ---------------------------------------------------------------------------
# Static configuration (matches the nn.Module __init__ arithmetic).
# ---------------------------------------------------------------------------
C_IN, C_OUT, FACTOR = 3, 2, 2
RES_IN, RES_OUT_ARG = 32, 16
RES_OUT = RES_OUT_ARG // FACTOR          # 8
FACTORI = RES_IN // RES_OUT              # 4
C0 = FACTORI * FACTORI * C_IN            # 48  (conv1 input channels)
C1, C2 = 16, 32                          # conv1 / conv2 output channels
C3 = FACTOR * C_OUT                      # 4   (conv3 output channels)
H = W = RES_OUT                          # spatial size after squeeze (8)
N = 2                                    # batch
R = N * H * W                            # 128 flattened positions (lanes)

# ---------------------------------------------------------------------------
# Static per-tap lane shifts and boundary-validity masks (host precomputed).
# Column index r = n*H*W + h*W + w.  For tap (dy, dx) with offsets
# dyo = dy-1, dxo = dx-1 the conv output at r reads input at r + dyo*W + dxo
# iff (h+dyo, w+dxo) is inside the image; otherwise zero ('same' padding).
# Roll never leaks across image/batch boundaries because out-of-image taps
# are always masked to zero.
# ---------------------------------------------------------------------------
_col = np.arange(R)
_hh = (_col // W) % H
_ww = _col % W
TAP_SHIFTS = []
_masks = np.zeros((9, 1, R), np.float32)
for _dy in range(3):
    for _dx in range(3):
        _dyo, _dxo = _dy - 1, _dx - 1
        TAP_SHIFTS.append((-(_dyo * W + _dxo)) % R)   # out[r] = in[r + dyo*W + dxo]
        _valid = ((_hh + _dyo >= 0) & (_hh + _dyo < H) &
                  (_ww + _dxo >= 0) & (_ww + _dxo < W))
        _masks[_dy * 3 + _dx, 0, :] = _valid.astype(np.float32)
TAP_MASKS = _masks                        # (9, 1, R) f32 0/1


def squeeze_nchw(z, f):
    """Exact JAX equivalent of the PyTorch `squeeze` helper (NCHW)."""
    n, c, h, w = z.shape
    z = z.reshape(n, c, h // f, f, w // f, f)
    z = jnp.transpose(z, (0, 1, 3, 5, 2, 4))
    return z.reshape(n, f * f * c, h // f, w // f)


# ---------------------------------------------------------------------------
# Kernel: whole network in one invocation (no grid).
#   x_ref    : (C0, R)          f32   activation, column r = n*64 + h*8 + w
#   mask_ref : (9, 1, R)        f32   0/1 boundary-validity per tap
#   w*_ref   : (9, Cout, Cin)   f32   tap-major conv weights
#   b*_ref   : (Cout, 1)        f32
#   o_ref    : (C3, R)          f32   lane-dense output
# ---------------------------------------------------------------------------
def condition_net_kernel(x_ref, mask_ref, w1_ref, b1_ref, w2_ref, b2_ref,
                         w3_ref, b3_ref, o_ref):
    masks = mask_ref[...]                                  # (9, 1, R)

    def conv3x3(a, w_ref, b_ref):
        # a: (Cin, R) f32.  Per-tap accumulation: 9 small f32 matmuls, no
        # im2col concatenate, minimal live vreg set.
        acc = None
        for t, shift in enumerate(TAP_SHIFTS):
            shifted = a if shift == 0 else pltpu.roll(a, shift=shift, axis=1)
            masked = shifted * masks[t]                    # (Cin, R) * (1, R)
            contrib = jnp.dot(w_ref[t], masked,
                              preferred_element_type=jnp.float32)  # (Cout, R)
            acc = contrib if acc is None else acc + contrib
        return acc + b_ref[...]                            # bias (Cout, 1)

    a1 = jnp.maximum(conv3x3(x_ref[...], w1_ref, b1_ref), 0.0)   # (C1, R)
    a2 = jnp.maximum(conv3x3(a1, w2_ref, b2_ref), 0.0)           # (C2, R)
    a3 = conv3x3(a2, w3_ref, b3_ref)                             # (C3, R)

    # Single unmasked full-128-lane store.
    o_ref[...] = jax.nn.sigmoid(a3)


# ---------------------------------------------------------------------------
# Wrapper: NCHW in / NCHW out, like the PyTorch module.
# ---------------------------------------------------------------------------
def condition_net_forward(x_nchw, params):
    w1, b1, w2, b2, w3, b3 = params          # HWIO conv weights, (Cout,) biases
    n = x_nchw.shape[0]
    assert n == N and n * H * W == R

    # Fused squeeze + layout change:
    # (N, C_IN, H*f, W*f) -> (C_IN, f, f, N, H, W) -> (C0, N*H*W)
    # Channel order c*f*f + fy*f + fx matches the PyTorch `squeeze` exactly.
    x6 = x_nchw.reshape(n, C_IN, H, FACTORI, W, FACTORI)
    x_cr = jnp.transpose(x6, (1, 3, 5, 0, 2, 4)).reshape(C0, R)
    x_cr = x_cr.astype(jnp.float32)

    # Weights: HWIO (3,3,Cin,Cout) -> (9, Cout, Cin), tap-major, f32.
    w1r = w1.reshape(9, C0, C1).transpose(0, 2, 1).astype(jnp.float32)
    w2r = w2.reshape(9, C1, C2).transpose(0, 2, 1).astype(jnp.float32)
    w3r = w3.reshape(9, C2, C3).transpose(0, 2, 1).astype(jnp.float32)
    b1r = b1.reshape(C1, 1).astype(jnp.float32)
    b2r = b2.reshape(C2, 1).astype(jnp.float32)
    b3r = b3.reshape(C3, 1).astype(jnp.float32)

    masks = jnp.asarray(TAP_MASKS)           # (9, 1, R) f32

    vmem_spec = pl.BlockSpec(memory_space=pltpu.MemorySpace.VMEM)
    out = pl.pallas_call(
        condition_net_kernel,
        out_shape=jax.ShapeDtypeStruct((C3, R), jnp.float32),
        in_specs=[vmem_spec] * 8,
        out_specs=vmem_spec,
    )(x_cr, masks, w1r, b1r, w2r, b2r, w3r, b3r)

    # (C3, R) -> (C3, N, H, W) is a free reshape; the transpose is 2 KiB.
    return jnp.transpose(out.reshape(C3, n, H, W), (1, 0, 2, 3))


# ---------------------------------------------------------------------------
# Pure-JAX reference (full f32 precision) for the correctness self-check.
# ---------------------------------------------------------------------------
def _conv_same_ref(x_nhwc, w_hwio, b):
    y = lax.conv_general_dilated(
        x_nhwc, w_hwio, window_strides=(1, 1), padding="SAME",
        dimension_numbers=("NHWC", "HWIO", "NHWC"),
        precision=lax.Precision.HIGHEST)
    return y + b


def condition_net_reference(x_nchw, params):
    w1, b1, w2, b2, w3, b3 = params
    x = jnp.transpose(squeeze_nchw(x_nchw, FACTORI), (0, 2, 3, 1))
    x = jax.nn.relu(_conv_same_ref(x, w1, b1))
    x = jax.nn.relu(_conv_same_ref(x, w2, b2))
    x = jax.nn.sigmoid(_conv_same_ref(x, w3, b3))
    return jnp.transpose(x, (0, 3, 1, 2))


if __name__ == "__main__":
    key = jax.random.PRNGKey(0)
    kx, k1, k2, k3, k4, k5, k6 = jax.random.split(key, 7)

    # Deterministic example input (NCHW, like the PyTorch module).
    x = jax.random.normal(kx, (N, C_IN, RES_IN, RES_IN), jnp.float32)

    # Deterministic synthetic parameters (HWIO conv weights, not a checkpoint).
    w1 = jax.random.normal(k1, (3, 3, C0, C1), jnp.float32) / np.sqrt(9 * C0)
    b1 = 0.01 * jax.random.normal(k2, (C1,), jnp.float32)
    w2 = jax.random.normal(k3, (3, 3, C1, C2), jnp.float32) / np.sqrt(9 * C1)
    b2 = 0.01 * jax.random.normal(k4, (C2,), jnp.float32)
    w3 = jax.random.normal(k5, (3, 3, C2, C3), jnp.float32) / np.sqrt(9 * C2)
    b3 = 0.01 * jax.random.normal(k6, (C3,), jnp.float32)
    params = (w1, b1, w2, b2, w3, b3)

    fwd = jax.jit(condition_net_forward)
    out = jax.block_until_ready(fwd(x, params))
    ref = jax.block_until_ready(condition_net_reference(x, params))

    assert out.shape == (N, C3, H, W), out.shape
    # All-f32 kernel vs f32 (HIGHEST) reference; tolerance leaves headroom for
    # the TPU MXU's multi-pass f32 matmul rounding.
    np.testing.assert_allclose(np.asarray(out), np.asarray(ref),
                               atol=1e-2, rtol=1e-2)
    print("KERNEL_OK")
</pallas_src>

<mosaic_0001>
module attributes {stable_mosaic.version = 11 : i64} {
  func.func @condition_net_kernel(%arg0: memref<48x128xf32, #tpu.memory_space<vmem>>, %arg1: memref<9x1x128xf32, #tpu.memory_space<vmem>>, %arg2: memref<9x16x48xf32, #tpu.memory_space<vmem>>, %arg3: memref<16x1xf32, #tpu.memory_space<vmem>>, %arg4: memref<9x32x16xf32, #tpu.memory_space<vmem>>, %arg5: memref<32x1xf32, #tpu.memory_space<vmem>>, %arg6: memref<9x4x32xf32, #tpu.memory_space<vmem>>, %arg7: memref<4x1xf32, #tpu.memory_space<vmem>>, %arg8: memref<4x128xf32, #tpu.memory_space<vmem>>) attributes {dimension_semantics = [], scalar_prefetch = 0 : i64, scratch_operands = 0 : i64, tpu.core_type = #tpu.core_type<tc>} {
    %c0 = arith.constant 0 : index
    %c0_0 = arith.constant 0 : index
    %c0_1 = arith.constant 0 : index
    %0 = vector.load %arg1[%c0, %c0_0, %c0_1] : memref<9x1x128xf32, #tpu.memory_space<vmem>>, vector<9x1x128xf32>
    %c0_2 = arith.constant 0 : index
    %c0_3 = arith.constant 0 : index
    %1 = vector.load %arg0[%c0_2, %c0_3] : memref<48x128xf32, #tpu.memory_space<vmem>>, vector<48x128xf32>
    %c9_i32 = arith.constant 9 : i32
    %2 = tpu.dynamic_rotate %1 by %c9_i32 dim 1 : vector<48x128xf32>, i32 -> vector<48x128xf32>
    %3 = vector.extract_strided_slice %0 {offsets = [0, 0, 0], sizes = [1, 1, 128], strides = [1, 1, 1]} : vector<9x1x128xf32> to vector<1x1x128xf32>
    %4 = vector.shape_cast %3 : vector<1x1x128xf32> to vector<1x128xf32>
    %5 = vector.broadcast %4 : vector<1x128xf32> to vector<48x128xf32>
    %6 = arith.mulf %2, %5 : vector<48x128xf32>
    %c0_4 = arith.constant 0 : index
    %c0_5 = arith.constant 0 : index
    %c0_6 = arith.constant 0 : index
    %7 = vector.load %arg2[%c0_4, %c0_5, %c0_6] : memref<9x16x48xf32, #tpu.memory_space<vmem>>, vector<1x16x48xf32>
    %8 = vector.shape_cast %7 : vector<1x16x48xf32> to vector<16x48xf32>
    %cst = arith.constant dense<0.000000e+00> : vector<16x128xf32>
    %9 = tpu.matmul %8, %6, %cst {dimension_numbers = #tpu.dot_dimension_numbers<[1], [0], [0], [1], [0, 0, 1, 1], [], []>} : vector<16x48xf32>, vector<48x128xf32>, vector<16x128xf32> -> vector<16x128xf32>
    %c8_i32 = arith.constant 8 : i32
    %10 = tpu.dynamic_rotate %1 by %c8_i32 dim 1 : vector<48x128xf32>, i32 -> vector<48x128xf32>
    %11 = vector.extract_strided_slice %0 {offsets = [1, 0, 0], sizes = [1, 1, 128], strides = [1, 1, 1]} : vector<9x1x128xf32> to vector<1x1x128xf32>
    %12 = vector.shape_cast %11 : vector<1x1x128xf32> to vector<1x128xf32>
    %13 = vector.broadcast %12 : vector<1x128xf32> to vector<48x128xf32>
    %14 = arith.mulf %10, %13 : vector<48x128xf32>
    %c1 = arith.constant 1 : index
    %c0_7 = arith.constant 0 : index
    %c0_8 = arith.constant 0 : index
    %15 = vector.load %arg2[%c1, %c0_7, %c0_8] : memref<9x16x48xf32, #tpu.memory_space<vmem>>, vector<1x16x48xf32>
    %16 = vector.shape_cast %15 : vector<1x16x48xf32> to vector<16x48xf32>
    %cst_9 = arith.constant dense<0.000000e+00> : vector<16x128xf32>
    %17 = tpu.matmul %16, %14, %cst_9 {dimension_numbers = #tpu.dot_dimension_numbers<[1], [0], [0], [1], [0, 0, 1, 1], [], []>} : vector<16x48xf32>, vector<48x128xf32>, vector<16x128xf32> -> vector<16x128xf32>
    %18 = arith.addf %9, %17 : vector<16x128xf32>
    %c7_i32 = arith.constant 7 : i32
    %19 = tpu.dynamic_rotate %1 by %c7_i32 dim 1 : vector<48x128xf32>, i32 -> vector<48x128xf32>
    %20 = vector.extract_strided_slice %0 {offsets = [2, 0, 0], sizes = [1, 1, 128], strides = [1, 1, 1]} : vector<9x1x128xf32> to vector<1x1x128xf32>
    %21 = vector.shape_cast %20 : vector<1x1x128xf32> to vector<1x128xf32>
    %22 = vector.broadcast %21 : vector<1x128xf32> to vector<48x128xf32>
    %23 = arith.mulf %19, %22 : vector<48x128xf32>
    %c2 = arith.constant 2 : index
    %c0_10 = arith.constant 0 : index
    %c0_11 = arith.constant 0 : index
    %24 = vector.load %arg2[%c2, %c0_10, %c0_11] : memref<9x16x48xf32, #tpu.memory_space<vmem>>, vector<1x16x48xf32>
    %25 = vector.shape_cast %24 : vector<1x16x48xf32> to vector<16x48xf32>
    %cst_12 = arith.constant dense<0.000000e+00> : vector<16x128xf32>
    %26 = tpu.matmul %25, %23, %cst_12 {dimension_numbers = #tpu.dot_dimension_numbers<[1], [0], [0], [1], [0, 0, 1, 1], [], []>} : vector<16x48xf32>, vector<48x128xf32>, vector<16x128xf32> -> vector<16x128xf32>
    %27 = arith.addf %18, %26 : vector<16x128xf32>
    %c1_i32 = arith.constant 1 : i32
    %28 = tpu.dynamic_rotate %1 by %c1_i32 dim 1 : vector<48x128xf32>, i32 -> vector<48x128xf32>
    %29 = vector.extract_strided_slice %0 {offsets = [3, 0, 0], sizes = [1, 1, 128], strides = [1, 1, 1]} : vector<9x1x128xf32> to vector<1x1x128xf32>
    %30 = vector.shape_cast %29 : vector<1x1x128xf32> to vector<1x128xf32>
    %31 = vector.broadcast %30 : vector<1x128xf32> to vector<48x128xf32>
    %32 = arith.mulf %28, %31 : vector<48x128xf32>
    %c3 = arith.constant 3 : index
    %c0_13 = arith.constant 0 : index
    %c0_14 = arith.constant 0 : index
    %33 = vector.load %arg2[%c3, %c0_13, %c0_14] : memref<9x16x48xf32, #tpu.memory_space<vmem>>, vector<1x16x48xf32>
    %34 = vector.shape_cast %33 : vector<1x16x48xf32> to vector<16x48xf32>
    %cst_15 = arith.constant dense<0.000000e+00> : vector<16x128xf32>
    %35 = tpu.matmul %34, %32, %cst_15 {dimension_numbers = #tpu.dot_dimension_numbers<[1], [0], [0], [1], [0, 0, 1, 1], [], []>} : vector<16x48xf32>, vector<48x128xf32>, vector<16x128xf32> -> vector<16x128xf32>
    %36 = arith.addf %27, %35 : vector<16x128xf32>
    %37 = vector.extract_strided_slice %0 {offsets = [4, 0, 0], sizes = [1, 1, 128], strides = [1, 1, 1]} : vector<9x1x128xf32> to vector<1x1x128xf32>
    %38 = vector.shape_cast %37 : vector<1x1x128xf32> to vector<1x128xf32>
    %39 = vector.broadcast %38 : vector<1x128xf32> to vector<48x128xf32>
    %40 = arith.mulf %1, %39 : vector<48x128xf32>
    %c4 = arith.constant 4 : index
    %c0_16 = arith.constant 0 : index
    %c0_17 = arith.constant 0 : index
    %41 = vector.load %arg2[%c4, %c0_16, %c0_17] : memref<9x16x48xf32, #tpu.memory_space<vmem>>, vector<1x16x48xf32>
    %42 = vector.shape_cast %41 : vector<1x16x48xf32> to vector<16x48xf32>
    %cst_18 = arith.constant dense<0.000000e+00> : vector<16x128xf32>
    %43 = tpu.matmul %42, %40, %cst_18 {dimension_numbers = #tpu.dot_dimension_numbers<[1], [0], [0], [1], [0, 0, 1, 1], [], []>} : vector<16x48xf32>, vector<48x128xf32>, vector<16x128xf32> -> vector<16x128xf32>
    %44 = arith.addf %36, %43 : vector<16x128xf32>
    %c127_i32 = arith.constant 127 : i32
    %45 = tpu.dynamic_rotate %1 by %c127_i32 dim 1 : vector<48x128xf32>, i32 -> vector<48x128xf32>
    %46 = vector.extract_strided_slice %0 {offsets = [5, 0, 0], sizes = [1, 1, 128], strides = [1, 1, 1]} : vector<9x1x128xf32> to vector<1x1x128xf32>
    %47 = vector.shape_cast %46 : vector<1x1x128xf32> to vector<1x128xf32>
    %48 = vector.broadcast %47 : vector<1x128xf32> to vector<48x128xf32>
    %49 = arith.mulf %45, %48 : vector<48x128xf32>
    %c5 = arith.constant 5 : index
    %c0_19 = arith.constant 0 : index
    %c0_20 = arith.constant 0 : index
    %50 = vector.load %arg2[%c5, %c0_19, %c0_20] : memref<9x16x48xf32, #tpu.memory_space<vmem>>, vector<1x16x48xf32>
    %51 = vector.shape_cast %50 : vector<1x16x48xf32> to vector<16x48xf32>
    %cst_21 = arith.constant dense<0.000000e+00> : vector<16x128xf32>
    %52 = tpu.matmul %51, %49, %cst_21 {dimension_numbers = #tpu.dot_dimension_numbers<[1], [0], [0], [1], [0, 0, 1, 1], [], []>} : vector<16x48xf32>, vector<48x128xf32>, vector<16x128xf32> -> vector<16x128xf32>
    %53 = arith.addf %44, %52 : vector<16x128xf32>
    %c121_i32 = arith.constant 121 : i32
    %54 = tpu.dynamic_rotate %1 by %c121_i32 dim 1 : vector<48x128xf32>, i32 -> vector<48x128xf32>
    %55 = vector.extract_strided_slice %0 {offsets = [6, 0, 0], sizes = [1, 1, 128], strides = [1, 1, 1]} : vector<9x1x128xf32> to vector<1x1x128xf32>
    %56 = vector.shape_cast %55 : vector<1x1x128xf32> to vector<1x128xf32>
    %57 = vector.broadcast %56 : vector<1x128xf32> to vector<48x128xf32>
    %58 = arith.mulf %54, %57 : vector<48x128xf32>
    %c6 = arith.constant 6 : index
    %c0_22 = arith.constant 0 : index
    %c0_23 = arith.constant 0 : index
    %59 = vector.load %arg2[%c6, %c0_22, %c0_23] : memref<9x16x48xf32, #tpu.memory_space<vmem>>, vector<1x16x48xf32>
    %60 = vector.shape_cast %59 : vector<1x16x48xf32> to vector<16x48xf32>
    %cst_24 = arith.constant dense<0.000000e+00> : vector<16x128xf32>
    %61 = tpu.matmul %60, %58, %cst_24 {dimension_numbers = #tpu.dot_dimension_numbers<[1], [0], [0], [1], [0, 0, 1, 1], [], []>} : vector<16x48xf32>, vector<48x128xf32>, vector<16x128xf32> -> vector<16x128xf32>
    %62 = arith.addf %53, %61 : vector<16x128xf32>
    %c120_i32 = arith.constant 120 : i32
    %63 = tpu.dynamic_rotate %1 by %c120_i32 dim 1 : vector<48x128xf32>, i32 -> vector<48x128xf32>
    %64 = vector.extract_strided_slice %0 {offsets = [7, 0, 0], sizes = [1, 1, 128], strides = [1, 1, 1]} : vector<9x1x128xf32> to vector<1x1x128xf32>
    %65 = vector.shape_cast %64 : vector<1x1x128xf32> to vector<1x128xf32>
    %66 = vector.broadcast %65 : vector<1x128xf32> to vector<48x128xf32>
    %67 = arith.mulf %63, %66 : vector<48x128xf32>
    %c7 = arith.constant 7 : index
    %c0_25 = arith.constant 0 : index
    %c0_26 = arith.constant 0 : index
    %68 = vector.load %arg2[%c7, %c0_25, %c0_26] : memref<9x16x48xf32, #tpu.memory_space<vmem>>, vector<1x16x48xf32>
    %69 = vector.shape_cast %68 : vector<1x16x48xf32> to vector<16x48xf32>
    %cst_27 = arith.constant dense<0.000000e+00> : vector<16x128xf32>
    %70 = tpu.matmul %69, %67, %cst_27 {dimension_numbers = #tpu.dot_dimension_numbers<[1], [0], [0], [1], [0, 0, 1, 1], [], []>} : vector<16x48xf32>, vector<48x128xf32>, vector<16x128xf32> -> vector<16x128xf32>
    %71 = arith.addf %62, %70 : vector<16x128xf32>
    %c119_i32 = arith.constant 119 : i32
    %72 = tpu.dynamic_rotate %1 by %c119_i32 dim 1 : vector<48x128xf32>, i32 -> vector<48x128xf32>
    %73 = vector.extract_strided_slice %0 {offsets = [8, 0, 0], sizes = [1, 1, 128], strides = [1, 1, 1]} : vector<9x1x128xf32> to vector<1x1x128xf32>
    %74 = vector.shape_cast %73 : vector<1x1x128xf32> to vector<1x128xf32>
    %75 = vector.broadcast %74 : vector<1x128xf32> to vector<48x128xf32>
    %76 = arith.mulf %72, %75 : vector<48x128xf32>
    %c8 = arith.constant 8 : index
    %c0_28 = arith.constant 0 : index
    %c0_29 = arith.constant 0 : index
    %77 = vector.load %arg2[%c8, %c0_28, %c0_29] : memref<9x16x48xf32, #tpu.memory_space<vmem>>, vector<1x16x48xf32>
    %78 = vector.shape_cast %77 : vector<1x16x48xf32> to vector<16x48xf32>
    %cst_30 = arith.constant dense<0.000000e+00> : vector<16x128xf32>
    %79 = tpu.matmul %78, %76, %cst_30 {dimension_numbers = #tpu.dot_dimension_numbers<[1], [0], [0], [1], [0, 0, 1, 1], [], []>} : vector<16x48xf32>, vector<48x128xf32>, vector<16x128xf32> -> vector<16x128xf32>
    %80 = arith.addf %71, %79 : vector<16x128xf32>
    %c0_31 = arith.constant 0 : index
    %c0_32 = arith.constant 0 : index
    %81 = vector.load %arg3[%c0_31, %c0_32] : memref<16x1xf32, #tpu.memory_space<vmem>>, vector<16x1xf32>
    %82 = vector.broadcast %81 : vector<16x1xf32> to vector<16x128xf32>
    %83 = arith.addf %80, %82 : vector<16x128xf32>
    %cst_33 = arith.constant 0.000000e+00 : f32
    %84 = vector.broadcast %cst_33 : f32 to vector<16x128xf32>
    %85 = arith.maximumf %83, %84 : vector<16x128xf32>
    %c9_i32_34 = arith.constant 9 : i32
    %86 = tpu.dynamic_rotate %85 by %c9_i32_34 dim 1 : vector<16x128xf32>, i32 -> vector<16x128xf32>
    %87 = vector.extract_strided_slice %0 {offsets = [0, 0, 0], sizes = [1, 1, 128], strides = [1, 1, 1]} : vector<9x1x128xf32> to vector<1x1x128xf32>
    %88 = vector.shape_cast %87 : vector<1x1x128xf32> to vector<1x128xf32>
    %89 = vector.broadcast %88 : vector<1x128xf32> to vector<16x128xf32>
    %90 = arith.mulf %86, %89 : vector<16x128xf32>
    %c0_35 = arith.constant 0 : index
    %c0_36 = arith.constant 0 : index
    %c0_37 = arith.constant 0 : index
    %91 = vector.load %arg4[%c0_35, %c0_36, %c0_37] : memref<9x32x16xf32, #tpu.memory_space<vmem>>, vector<1x32x16xf32>
    %92 = vector.shape_cast %91 : vector<1x32x16xf32> to vector<32x16xf32>
    %cst_38 = arith.constant dense<0.000000e+00> : vector<32x128xf32>
    %93 = tpu.matmul %92, %90, %cst_38 {dimension_numbers = #tpu.dot_dimension_numbers<[1], [0], [0], [1], [0, 0, 1, 1], [], []>} : vector<32x16xf32>, vector<16x128xf32>, vector<32x128xf32> -> vector<32x128xf32>
    %c8_i32_39 = arith.constant 8 : i32
    %94 = tpu.dynamic_rotate %85 by %c8_i32_39 dim 1 : vector<16x128xf32>, i32 -> vector<16x128xf32>
    %95 = vector.extract_strided_slice %0 {offsets = [1, 0, 0], sizes = [1, 1, 128], strides = [1, 1, 1]} : vector<9x1x128xf32> to vector<1x1x128xf32>
    %96 = vector.shape_cast %95 : vector<1x1x128xf32> to vector<1x128xf32>
    %97 = vector.broadcast %96 : vector<1x128xf32> to vector<16x128xf32>
    %98 = arith.mulf %94, %97 : vector<16x128xf32>
    %c1_40 = arith.constant 1 : index
    %c0_41 = arith.constant 0 : index
    %c0_42 = arith.constant 0 : index
    %99 = vector.load %arg4[%c1_40, %c0_41, %c0_42] : memref<9x32x16xf32, #tpu.memory_space<vmem>>, vector<1x32x16xf32>
    %100 = vector.shape_cast %99 : vector<1x32x16xf32> to vector<32x16xf32>
    %cst_43 = arith.constant dense<0.000000e+00> : vector<32x128xf32>
    %101 = tpu.matmul %100, %98, %cst_43 {dimension_numbers = #tpu.dot_dimension_numbers<[1], [0], [0], [1], [0, 0, 1, 1], [], []>} : vector<32x16xf32>, vector<16x128xf32>, vector<32x128xf32> -> vector<32x128xf32>
    %102 = arith.addf %93, %101 : vector<32x128xf32>
    %c7_i32_44 = arith.constant 7 : i32
    %103 = tpu.dynamic_rotate %85 by %c7_i32_44 dim 1 : vector<16x128xf32>, i32 -> vector<16x128xf32>
    %104 = vector.extract_strided_slice %0 {offsets = [2, 0, 0], sizes = [1, 1, 128], strides = [1, 1, 1]} : vector<9x1x128xf32> to vector<1x1x128xf32>
    %105 = vector.shape_cast %104 : vector<1x1x128xf32> to vector<1x128xf32>
    %106 = vector.broadcast %105 : vector<1x128xf32> to vector<16x128xf32>
    %107 = arith.mulf %103, %106 : vector<16x128xf32>
    %c2_45 = arith.constant 2 : index
    %c0_46 = arith.constant 0 : index
    %c0_47 = arith.constant 0 : index
    %108 = vector.load %arg4[%c2_45, %c0_46, %c0_47] : memref<9x32x16xf32, #tpu.memory_space<vmem>>, vector<1x32x16xf32>
    %109 = vector.shape_cast %108 : vector<1x32x16xf32> to vector<32x16xf32>
    %cst_48 = arith.constant dense<0.000000e+00> : vector<32x128xf32>
    %110 = tpu.matmul %109, %107, %cst_48 {dimension_numbers = #tpu.dot_dimension_numbers<[1], [0], [0], [1], [0, 0, 1, 1], [], []>} : vector<32x16xf32>, vector<16x128xf32>, vector<32x128xf32> -> vector<32x128xf32>
    %111 = arith.addf %102, %110 : vector<32x128xf32>
    %c1_i32_49 = arith.constant 1 : i32
    %112 = tpu.dynamic_rotate %85 by %c1_i32_49 dim 1 : vector<16x128xf32>, i32 -> vector<16x128xf32>
    %113 = vector.extract_strided_slice %0 {offsets = [3, 0, 0], sizes = [1, 1, 128], strides = [1, 1, 1]} : vector<9x1x128xf32> to vector<1x1x128xf32>
    %114 = vector.shape_cast %113 : vector<1x1x128xf32> to vector<1x128xf32>
    %115 = vector.broadcast %114 : vector<1x128xf32> to vector<16x128xf32>
    %116 = arith.mulf %112, %115 : vector<16x128xf32>
    %c3_50 = arith.constant 3 : index
    %c0_51 = arith.constant 0 : index
    %c0_52 = arith.constant 0 : index
    %117 = vector.load %arg4[%c3_50, %c0_51, %c0_52] : memref<9x32x16xf32, #tpu.memory_space<vmem>>, vector<1x32x16xf32>
    %118 = vector.shape_cast %117 : vector<1x32x16xf32> to vector<32x16xf32>
    %cst_53 = arith.constant dense<0.000000e+00> : vector<32x128xf32>
    %119 = tpu.matmul %118, %116, %cst_53 {dimension_numbers = #tpu.dot_dimension_numbers<[1], [0], [0], [1], [0, 0, 1, 1], [], []>} : vector<32x16xf32>, vector<16x128xf32>, vector<32x128xf32> -> vector<32x128xf32>
    %120 = arith.addf %111, %119 : vector<32x128xf32>
    %121 = vector.extract_strided_slice %0 {offsets = [4, 0, 0], sizes = [1, 1, 128], strides = [1, 1, 1]} : vector<9x1x128xf32> to vector<1x1x128xf32>
    %122 = vector.shape_cast %121 : vector<1x1x128xf32> to vector<1x128xf32>
    %123 = vector.broadcast %122 : vector<1x128xf32> to vector<16x128xf32>
    %124 = arith.mulf %85, %123 : vector<16x128xf32>
    %c4_54 = arith.constant 4 : index
    %c0_55 = arith.constant 0 : index
    %c0_56 = arith.constant 0 : index
    %125 = vector.load %arg4[%c4_54, %c0_55, %c0_56] : memref<9x32x16xf32, #tpu.memory_space<vmem>>, vector<1x32x16xf32>
    %126 = vector.shape_cast %125 : vector<1x32x16xf32> to vector<32x16xf32>
    %cst_57 = arith.constant dense<0.000000e+00> : vector<32x128xf32>
    %127 = tpu.matmul %126, %124, %cst_57 {dimension_numbers = #tpu.dot_dimension_numbers<[1], [0], [0], [1], [0, 0, 1, 1], [], []>} : vector<32x16xf32>, vector<16x128xf32>, vector<32x128xf32> -> vector<32x128xf32>
    %128 = arith.addf %120, %127 : vector<32x128xf32>
    %c127_i32_58 = arith.constant 127 : i32
    %129 = tpu.dynamic_rotate %85 by %c127_i32_58 dim 1 : vector<16x128xf32>, i32 -> vector<16x128xf32>
    %130 = vector.extract_strided_slice %0 {offsets = [5, 0, 0], sizes = [1, 1, 128], strides = [1, 1, 1]} : vector<9x1x128xf32> to vector<1x1x128xf32>
    %131 = vector.shape_cast %130 : vector<1x1x128xf32> to vector<1x128xf32>
    %132 = vector.broadcast %131 : vector<1x128xf32> to vector<16x128xf32>
    %133 = arith.mulf %129, %132 : vector<16x128xf32>
    %c5_59 = arith.constant 5 : index
    %c0_60 = arith.constant 0 : index
    %c0_61 = arith.constant 0 : index
    %134 = vector.load %arg4[%c5_59, %c0_60, %c0_61] : memref<9x32x16xf32, #tpu.memory_space<vmem>>, vector<1x32x16xf32>
    %135 = vector.shape_cast %134 : vector<1x32x16xf32> to vector<32x16xf32>
    %cst_62 = arith.constant dense<0.000000e+00> : vector<32x128xf32>
    %136 = tpu.matmul %135, %133, %cst_62 {dimension_numbers = #tpu.dot_dimension_numbers<[1], [0], [0], [1], [0, 0, 1, 1], [], []>} : vector<32x16xf32>, vector<16x128xf32>, vector<32x128xf32> -> vector<32x128xf32>
    %137 = arith.addf %128, %136 : vector<32x128xf32>
    %c121_i32_63 = arith.constant 121 : i32
    %138 = tpu.dynamic_rotate %85 by %c121_i32_63 dim 1 : vector<16x128xf32>, i32 -> vector<16x128xf32>
    %139 = vector.extract_strided_slice %0 {offsets = [6, 0, 0], sizes = [1, 1, 128], strides = [1, 1, 1]} : vector<9x1x128xf32> to vector<1x1x128xf32>
    %140 = vector.shape_cast %139 : vector<1x1x128xf32> to vector<1x128xf32>
    %141 = vector.broadcast %140 : vector<1x128xf32> to vector<16x128xf32>
    %142 = arith.mulf %138, %141 : vector<16x128xf32>
    %c6_64 = arith.constant 6 : index
    %c0_65 = arith.constant 0 : index
    %c0_66 = arith.constant 0 : index
    %143 = vector.load %arg4[%c6_64, %c0_65, %c0_66] : memref<9x32x16xf32, #tpu.memory_space<vmem>>, vector<1x32x16xf32>
    %144 = vector.shape_cast %143 : vector<1x32x16xf32> to vector<32x16xf32>
    %cst_67 = arith.constant dense<0.000000e+00> : vector<32x128xf32>
    %145 = tpu.matmul %144, %142, %cst_67 {dimension_numbers = #tpu.dot_dimension_numbers<[1], [0], [0], [1], [0, 0, 1, 1], [], []>} : vector<32x16xf32>, vector<16x128xf32>, vector<32x128xf32> -> vector<32x128xf32>
    %146 = arith.addf %137, %145 : vector<32x128xf32>
    %c120_i32_68 = arith.constant 120 : i32
    %147 = tpu.dynamic_rotate %85 by %c120_i32_68 dim 1 : vector<16x128xf32>, i32 -> vector<16x128xf32>
    %148 = vector.extract_strided_slice %0 {offsets = [7, 0, 0], sizes = [1, 1, 128], strides = [1, 1, 1]} : vector<9x1x128xf32> to vector<1x1x128xf32>
    %149 = vector.shape_cast %148 : vector<1x1x128xf32> to vector<1x128xf32>
    %150 = vector.broadcast %149 : vector<1x128xf32> to vector<16x128xf32>
    %151 = arith.mulf %147, %150 : vector<16x128xf32>
    %c7_69 = arith.constant 7 : index
    %c0_70 = arith.constant 0 : index
    %c0_71 = arith.constant 0 : index
    %152 = vector.load %arg4[%c7_69, %c0_70, %c0_71] : memref<9x32x16xf32, #tpu.memory_space<vmem>>, vector<1x32x16xf32>
    %153 = vector.shape_cast %152 : vector<1x32x16xf32> to vector<32x16xf32>
    %cst_72 = arith.constant dense<0.000000e+00> : vector<32x128xf32>
    %154 = tpu.matmul %153, %151, %cst_72 {dimension_numbers = #tpu.dot_dimension_numbers<[1], [0], [0], [1], [0, 0, 1, 1], [], []>} : vector<32x16xf32>, vector<16x128xf32>, vector<32x128xf32> -> vector<32x128xf32>
    %155 = arith.addf %146, %154 : vector<32x128xf32>
    %c119_i32_73 = arith.constant 119 : i32
    %156 = tpu.dynamic_rotate %85 by %c119_i32_73 dim 1 : vector<16x128xf32>, i32 -> vector<16x128xf32>
    %157 = vector.extract_strided_slice %0 {offsets = [8, 0, 0], sizes = [1, 1, 128], strides = [1, 1, 1]} : vector<9x1x128xf32> to vector<1x1x128xf32>
    %158 = vector.shape_cast %157 : vector<1x1x128xf32> to vector<1x128xf32>
    %159 = vector.broadcast %158 : vector<1x128xf32> to vector<16x128xf32>
    %160 = arith.mulf %156, %159 : vector<16x128xf32>
    %c8_74 = arith.constant 8 : index
    %c0_75 = arith.constant 0 : index
    %c0_76 = arith.constant 0 : index
    %161 = vector.load %arg4[%c8_74, %c0_75, %c0_76] : memref<9x32x16xf32, #tpu.memory_space<vmem>>, vector<1x32x16xf32>
    %162 = vector.shape_cast %161 : vector<1x32x16xf32> to vector<32x16xf32>
    %cst_77 = arith.constant dense<0.000000e+00> : vector<32x128xf32>
    %163 = tpu.matmul %162, %160, %cst_77 {dimension_numbers = #tpu.dot_dimension_numbers<[1], [0], [0], [1], [0, 0, 1, 1], [], []>} : vector<32x16xf32>, vector<16x128xf32>, vector<32x128xf32> -> vector<32x128xf32>
    %164 = arith.addf %155, %163 : vector<32x128xf32>
    %c0_78 = arith.constant 0 : index
    %c0_79 = arith.constant 0 : index
    %165 = vector.load %arg5[%c0_78, %c0_79] : memref<32x1xf32, #tpu.memory_space<vmem>>, vector<32x1xf32>
    %166 = vector.broadcast %165 : vector<32x1xf32> to vector<32x128xf32>
    %167 = arith.addf %164, %166 : vector<32x128xf32>
    %cst_80 = arith.constant 0.000000e+00 : f32
    %168 = vector.broadcast %cst_80 : f32 to vector<32x128xf32>
    %169 = arith.maximumf %167, %168 : vector<32x128xf32>
    %c9_i32_81 = arith.constant 9 : i32
    %170 = tpu.dynamic_rotate %169 by %c9_i32_81 dim 1 : vector<32x128xf32>, i32 -> vector<32x128xf32>
    %171 = vector.extract_strided_slice %0 {offsets = [0, 0, 0], sizes = [1, 1, 128], strides = [1, 1, 1]} : vector<9x1x128xf32> to vector<1x1x128xf32>
    %172 = vector.shape_cast %171 : vector<1x1x128xf32> to vector<1x128xf32>
    %173 = vector.broadcast %172 : vector<1x128xf32> to vector<32x128xf32>
    %174 = arith.mulf %170, %173 : vector<32x128xf32>
    %c0_82 = arith.constant 0 : index
    %c0_83 = arith.constant 0 : index
    %c0_84 = arith.constant 0 : index
    %175 = vector.load %arg6[%c0_82, %c0_83, %c0_84] : memref<9x4x32xf32, #tpu.memory_space<vmem>>, vector<1x4x32xf32>
    %176 = vector.shape_cast %175 : vector<1x4x32xf32> to vector<4x32xf32>
    %cst_85 = arith.constant dense<0.000000e+00> : vector<4x128xf32>
    %177 = tpu.matmul %176, %174, %cst_85 {dimension_numbers = #tpu.dot_dimension_numbers<[1], [0], [0], [1], [0, 0, 1, 1], [], []>} : vector<4x32xf32>, vector<32x128xf32>, vector<4x128xf32> -> vector<4x128xf32>
    %c8_i32_86 = arith.constant 8 : i32
    %178 = tpu.dynamic_rotate %169 by %c8_i32_86 dim 1 : vector<32x128xf32>, i32 -> vector<32x128xf32>
    %179 = vector.extract_strided_slice %0 {offsets = [1, 0, 0], sizes = [1, 1, 128], strides = [1, 1, 1]} : vector<9x1x128xf32> to vector<1x1x128xf32>
    %180 = vector.shape_cast %179 : vector<1x1x128xf32> to vector<1x128xf32>
    %181 = vector.broadcast %180 : vector<1x128xf32> to vector<32x128xf32>
    %182 = arith.mulf %178, %181 : vector<32x128xf32>
    %c1_87 = arith.constant 1 : index
    %c0_88 = arith.constant 0 : index
    %c0_89 = arith.constant 0 : index
    %183 = vector.load %arg6[%c1_87, %c0_88, %c0_89] : memref<9x4x32xf32, #tpu.memory_space<vmem>>, vector<1x4x32xf32>
    %184 = vector.shape_cast %183 : vector<1x4x32xf32> to vector<4x32xf32>
    %cst_90 = arith.constant dense<0.000000e+00> : vector<4x128xf32>
    %185 = tpu.matmul %184, %182, %cst_90 {dimension_numbers = #tpu.dot_dimension_numbers<[1], [0], [0], [1], [0, 0, 1, 1], [], []>} : vector<4x32xf32>, vector<32x128xf32>, vector<4x128xf32> -> vector<4x128xf32>
    %186 = arith.addf %177, %185 : vector<4x128xf32>
    %c7_i32_91 = arith.constant 7 : i32
    %187 = tpu.dynamic_rotate %169 by %c7_i32_91 dim 1 : vector<32x128xf32>, i32 -> vector<32x128xf32>
    %188 = vector.extract_strided_slice %0 {offsets = [2, 0, 0], sizes = [1, 1, 128], strides = [1, 1, 1]} : vector<9x1x128xf32> to vector<1x1x128xf32>
    %189 = vector.shape_cast %188 : vector<1x1x128xf32> to vector<1x128xf32>
    %190 = vector.broadcast %189 : vector<1x128xf32> to vector<32x128xf32>
    %191 = arith.mulf %187, %190 : vector<32x128xf32>
    %c2_92 = arith.constant 2 : index
    %c0_93 = arith.constant 0 : index
    %c0_94 = arith.constant 0 : index
    %192 = vector.load %arg6[%c2_92, %c0_93, %c0_94] : memref<9x4x32xf32, #tpu.memory_space<vmem>>, vector<1x4x32xf32>
    %193 = vector.shape_cast %192 : vector<1x4x32xf32> to vector<4x32xf32>
    %cst_95 = arith.constant dense<0.000000e+00> : vector<4x128xf32>
    %194 = tpu.matmul %193, %191, %cst_95 {dimension_numbers = #tpu.dot_dimension_numbers<[1], [0], [0], [1], [0, 0, 1, 1], [], []>} : vector<4x32xf32>, vector<32x128xf32>, vector<4x128xf32> -> vector<4x128xf32>
    %195 = arith.addf %186, %194 : vector<4x128xf32>
    %c1_i32_96 = arith.constant 1 : i32
    %196 = tpu.dynamic_rotate %169 by %c1_i32_96 dim 1 : vector<32x128xf32>, i32 -> vector<32x128xf32>
    %197 = vector.extract_strided_slice %0 {offsets = [3, 0, 0], sizes = [1, 1, 128], strides = [1, 1, 1]} : vector<9x1x128xf32> to vector<1x1x128xf32>
    %198 = vector.shape_cast %197 : vector<1x1x128xf32> to vector<1x128xf32>
    %199 = vector.broadcast %198 : vector<1x128xf32> to vector<32x128xf32>
    %200 = arith.mulf %196, %199 : vector<32x128xf32>
    %c3_97 = arith.constant 3 : index
    %c0_98 = arith.constant 0 : index
    %c0_99 = arith.constant 0 : index
    %201 = vector.load %arg6[%c3_97, %c0_98, %c0_99] : memref<9x4x32xf32, #tpu.memory_space<vmem>>, vector<1x4x32xf32>
    %202 = vector.shape_cast %201 : vector<1x4x32xf32> to vector<4x32xf32>
    %cst_100 = arith.constant dense<0.000000e+00> : vector<4x128xf32>
    %203 = tpu.matmul %202, %200, %cst_100 {dimension_numbers = #tpu.dot_dimension_numbers<[1], [0], [0], [1], [0, 0, 1, 1], [], []>} : vector<4x32xf32>, vector<32x128xf32>, vector<4x128xf32> -> vector<4x128xf32>
    %204 = arith.addf %195, %203 : vector<4x128xf32>
    %205 = vector.extract_strided_slice %0 {offsets = [4, 0, 0], sizes = [1, 1, 128], strides = [1, 1, 1]} : vector<9x1x128xf32> to vector<1x1x128xf32>
    %206 = vector.shape_cast %205 : vector<1x1x128xf32> to vector<1x128xf32>
    %207 = vector.broadcast %206 : vector<1x128xf32> to vector<32x128xf32>
    %208 = arith.mulf %169, %207 : vector<32x128xf32>
    %c4_101 = arith.constant 4 : index
    %c0_102 = arith.constant 0 : index
    %c0_103 = arith.constant 0 : index
    %209 = vector.load %arg6[%c4_101, %c0_102, %c0_103] : memref<9x4x32xf32, #tpu.memory_space<vmem>>, vector<1x4x32xf32>
    %210 = vector.shape_cast %209 : vector<1x4x32xf32> to vector<4x32xf32>
    %cst_104 = arith.constant dense<0.000000e+00> : vector<4x128xf32>
    %211 = tpu.matmul %210, %208, %cst_104 {dimension_numbers = #tpu.dot_dimension_numbers<[1], [0], [0], [1], [0, 0, 1, 1], [], []>} : vector<4x32xf32>, vector<32x128xf32>, vector<4x128xf32> -> vector<4x128xf32>
    %212 = arith.addf %204, %211 : vector<4x128xf32>
    %c127_i32_105 = arith.constant 127 : i32
    %213 = tpu.dynamic_rotate %169 by %c127_i32_105 dim 1 : vector<32x128xf32>, i32 -> vector<32x128xf32>
    %214 = vector.extract_strided_slice %0 {offsets = [5, 0, 0], sizes = [1, 1, 128], strides = [1, 1, 1]} : vector<9x1x128xf32> to vector<1x1x128xf32>
    %215 = vector.shape_cast %214 : vector<1x1x128xf32> to vector<1x128xf32>
    %216 = vector.broadcast %215 : vector<1x128xf32> to vector<32x128xf32>
    %217 = arith.mulf %213, %216 : vector<32x128xf32>
    %c5_106 = arith.constant 5 : index
    %c0_107 = arith.constant 0 : index
    %c0_108 = arith.constant 0 : index
    %218 = vector.load %arg6[%c5_106, %c0_107, %c0_108] : memref<9x4x32xf32, #tpu.memory_space<vmem>>, vector<1x4x32xf32>
    %219 = vector.shape_cast %218 : vector<1x4x32xf32> to vector<4x32xf32>
    %cst_109 = arith.constant dense<0.000000e+00> : vector<4x128xf32>
    %220 = tpu.matmul %219, %217, %cst_109 {dimension_numbers = #tpu.dot_dimension_numbers<[1], [0], [0], [1], [0, 0, 1, 1], [], []>} : vector<4x32xf32>, vector<32x128xf32>, vector<4x128xf32> -> vector<4x128xf32>
    %221 = arith.addf %212, %220 : vector<4x128xf32>
    %c121_i32_110 = arith.constant 121 : i32
    %222 = tpu.dynamic_rotate %169 by %c121_i32_110 dim 1 : vector<32x128xf32>, i32 -> vector<32x128xf32>
    %223 = vector.extract_strided_slice %0 {offsets = [6, 0, 0], sizes = [1, 1, 128], strides = [1, 1, 1]} : vector<9x1x128xf32> to vector<1x1x128xf32>
    %224 = vector.shape_cast %223 : vector<1x1x128xf32> to vector<1x128xf32>
    %225 = vector.broadcast %224 : vector<1x128xf32> to vector<32x128xf32>
    %226 = arith.mulf %222, %225 : vector<32x128xf32>
    %c6_111 = arith.constant 6 : index
    %c0_112 = arith.constant 0 : index
    %c0_113 = arith.constant 0 : index
    %227 = vector.load %arg6[%c6_111, %c0_112, %c0_113] : memref<9x4x32xf32, #tpu.memory_space<vmem>>, vector<1x4x32xf32>
    %228 = vector.shape_cast %227 : vector<1x4x32xf32> to vector<4x32xf32>
    %cst_114 = arith.constant dense<0.000000e+00> : vector<4x128xf32>
    %229 = tpu.matmul %228, %226, %cst_114 {dimension_numbers = #tpu.dot_dimension_numbers<[1], [0], [0], [1], [0, 0, 1, 1], [], []>} : vector<4x32xf32>, vector<32x128xf32>, vector<4x128xf32> -> vector<4x128xf32>
    %230 = arith.addf %221, %229 : vector<4x128xf32>
    %c120_i32_115 = arith.constant 120 : i32
    %231 = tpu.dynamic_rotate %169 by %c120_i32_115 dim 1 : vector<32x128xf32>, i32 -> vector<32x128xf32>
    %232 = vector.extract_strided_slice %0 {offsets = [7, 0, 0], sizes = [1, 1, 128], strides = [1, 1, 1]} : vector<9x1x128xf32> to vector<1x1x128xf32>
    %233 = vector.shape_cast %232 : vector<1x1x128xf32> to vector<1x128xf32>
    %234 = vector.broadcast %233 : vector<1x128xf32> to vector<32x128xf32>
    %235 = arith.mulf %231, %234 : vector<32x128xf32>
    %c7_116 = arith.constant 7 : index
    %c0_117 = arith.constant 0 : index
    %c0_118 = arith.constant 0 : index
    %236 = vector.load %arg6[%c7_116, %c0_117, %c0_118] : memref<9x4x32xf32, #tpu.memory_space<vmem>>, vector<1x4x32xf32>
    %237 = vector.shape_cast %236 : vector<1x4x32xf32> to vector<4x32xf32>
    %cst_119 = arith.constant dense<0.000000e+00> : vector<4x128xf32>
    %238 = tpu.matmul %237, %235, %cst_119 {dimension_numbers = #tpu.dot_dimension_numbers<[1], [0], [0], [1], [0, 0, 1, 1], [], []>} : vector<4x32xf32>, vector<32x128xf32>, vector<4x128xf32> -> vector<4x128xf32>
    %239 = arith.addf %230, %238 : vector<4x128xf32>
    %c119_i32_120 = arith.constant 119 : i32
    %240 = tpu.dynamic_rotate %169 by %c119_i32_120 dim 1 : vector<32x128xf32>, i32 -> vector<32x128xf32>
    %241 = vector.extract_strided_slice %0 {offsets = [8, 0, 0], sizes = [1, 1, 128], strides = [1, 1, 1]} : vector<9x1x128xf32> to vector<1x1x128xf32>
    %242 = vector.shape_cast %241 : vector<1x1x128xf32> to vector<1x128xf32>
    %243 = vector.broadcast %242 : vector<1x128xf32> to vector<32x128xf32>
    %244 = arith.mulf %240, %243 : vector<32x128xf32>
    %c8_121 = arith.constant 8 : index
    %c0_122 = arith.constant 0 : index
    %c0_123 = arith.constant 0 : index
    %245 = vector.load %arg6[%c8_121, %c0_122, %c0_123] : memref<9x4x32xf32, #tpu.memory_space<vmem>>, vector<1x4x32xf32>
    %246 = vector.shape_cast %245 : vector<1x4x32xf32> to vector<4x32xf32>
    %cst_124 = arith.constant dense<0.000000e+00> : vector<4x128xf32>
    %247 = tpu.matmul %246, %244, %cst_124 {dimension_numbers = #tpu.dot_dimension_numbers<[1], [0], [0], [1], [0, 0, 1, 1], [], []>} : vector<4x32xf32>, vector<32x128xf32>, vector<4x128xf32> -> vector<4x128xf32>
    %248 = arith.addf %239, %247 : vector<4x128xf32>
    %c0_125 = arith.constant 0 : index
    %c0_126 = arith.constant 0 : index
    %249 = vector.load %arg7[%c0_125, %c0_126] : memref<4x1xf32, #tpu.memory_space<vmem>>, vector<4x1xf32>
    %250 = vector.broadcast %249 : vector<4x1xf32> to vector<4x128xf32>
    %251 = arith.addf %248, %250 : vector<4x128xf32>
    %252 = arith.negf %251 : vector<4x128xf32>
    %253 = math.exp %252 : vector<4x128xf32>
    %cst_127 = arith.constant 1.000000e+00 : f32
    %254 = vector.broadcast %cst_127 : f32 to vector<4x128xf32>
    %255 = arith.addf %254, %253 : vector<4x128xf32>
    %256 = arith.divf %254, %255 : vector<4x128xf32>
    %c0_128 = arith.constant 0 : index
    %c0_129 = arith.constant 0 : index
    %257 = vector.load %arg8[%c0_128, %c0_129] : memref<4x128xf32, #tpu.memory_space<vmem>>, vector<4x128xf32>
    tpu.vector_store %arg8[%c0_128, %c0_129], %256 {strides = array<i32>} : memref<4x128xf32, #tpu.memory_space<vmem>>, vector<4x128xf32>,
    return
  }
}

</mosaic_0001>

<llo_original>
// kernel: condition_net_forward.1
$region0: #{condition_net_forward.1}
  #allocation0 [shape = 'u32[]', space=smem, size = 0x4, offset = 0x4, fixed_abs, tag = 'smem constant byte address 0x4 - core index']
  #allocation1 [shape = 'u32[144,128]{1,0:T(1,128)}', space=vmem, size = 0x12000, scoped, tag = 'internal scratch']
  %s0 = inlined_call_operand.vmem [shape: f32[48,128], index: 0, kind: input, shape index: {}]
  %s1 = inlined_call_operand.vmem [shape: f32[9,1,128], index: 1, kind: input, shape index: {}]
  %s2 = inlined_call_operand.vmem [shape: f32[9,16,48], index: 2, kind: input, shape index: {}]
  %s3 = inlined_call_operand.vmem [shape: f32[16,1], index: 3, kind: input, shape index: {}]
  %s4 = inlined_call_operand.vmem [shape: f32[9,32,16], index: 4, kind: input, shape index: {}]
  %s5 = inlined_call_operand.vmem [shape: f32[32,1], index: 5, kind: input, shape index: {}]
  %s6 = inlined_call_operand.vmem [shape: f32[9,4,32], index: 6, kind: input, shape index: {}]
  %s7 = inlined_call_operand.vmem [shape: f32[4,1], index: 7, kind: input, shape index: {}]
  %s8 = inlined_call_operand.vmem [shape: f32[4,128], index: 8, kind: output, shape index: {}]
  %s9 = sld [smem:[#allocation0]]
  $region42: #{condition_net_forward.1} parent=0
    _
  %s11 = ssub.s32 1, %s9
  %s12 = scalar_select 0, %s11, %s9
  // Predicated region
  $region2: #{condition_net_forward.1} parent=0 // pred_check
    _
  $region3: #{condition_net_forward.1} parent=0 // pred_check_branch
    %14 = sbr.rel (0) target = $region5
  $region4: #{condition_net_forward.1} parent=0 // pred_region
    _
  $region5: #{condition_net_forward.1} parent=0 // pred_fallthru
    _
  // Predicated region
  $region6: #{condition_net_forward.1} parent=0 // pred_check
    _
  $region7: #{condition_net_forward.1} parent=0 // pred_check_branch
    %16 = sbr.rel (0) target = $region9
  $region8: #{condition_net_forward.1} parent=0 // pred_region
    _
  $region9: #{condition_net_forward.1} parent=0 // pred_fallthru
    _
  // Predicated region
  $region10: #{condition_net_forward.1} parent=0 // pred_check
    _
  $region11: #{condition_net_forward.1} parent=0 // pred_check_branch
    %18 = sbr.rel (0) target = $region13
  $region12: #{condition_net_forward.1} parent=0 // pred_region
    _
  $region13: #{condition_net_forward.1} parent=0 // pred_fallthru
    _
  // Predicated region
  $region14: #{condition_net_forward.1} parent=0 // pred_check
    _
  $region15: #{condition_net_forward.1} parent=0 // pred_check_branch
    %20 = sbr.rel (0) target = $region17
  $region16: #{condition_net_forward.1} parent=0 // pred_region
    _
  $region17: #{condition_net_forward.1} parent=0 // pred_fallthru
    _
  // Predicated region
  $region18: #{condition_net_forward.1} parent=0 // pred_check
    _
  $region19: #{condition_net_forward.1} parent=0 // pred_check_branch
    %22 = sbr.rel (0) target = $region21
  $region20: #{condition_net_forward.1} parent=0 // pred_region
    _
  $region21: #{condition_net_forward.1} parent=0 // pred_fallthru
    _
  // Predicated region
  $region22: #{condition_net_forward.1} parent=0 // pred_check
    _
  $region23: #{condition_net_forward.1} parent=0 // pred_check_branch
    %24 = sbr.rel (0) target = $region25
  $region24: #{condition_net_forward.1} parent=0 // pred_region
    _
  $region25: #{condition_net_forward.1} parent=0 // pred_fallthru
    _
  // Predicated region
  $region26: #{condition_net_forward.1} parent=0 // pred_check
    _
  $region27: #{condition_net_forward.1} parent=0 // pred_check_branch
    %26 = sbr.rel (0) target = $region29
  $region28: #{condition_net_forward.1} parent=0 // pred_region
    _
  $region29: #{condition_net_forward.1} parent=0 // pred_fallthru
    _
  // Predicated region
  $region30: #{condition_net_forward.1} parent=0 // pred_check
    _
  $region31: #{condition_net_forward.1} parent=0 // pred_check_branch
    %28 = sbr.rel (0) target = $region33
  $region32: #{condition_net_forward.1} parent=0 // pred_region
    _
  $region33: #{condition_net_forward.1} parent=0 // pred_fallthru
    _
  %v29 = vld [vmem:[%s1] sm:$0x1]
  %v30 = vld [vmem:[%s1 + $0x1] sm:$0x1]
  %v31 = vld [vmem:[%s1 + $0x2] sm:$0x1]
  %v32 = vld [vmem:[%s1 + $0x3] sm:$0x1]
  %v33 = vld [vmem:[%s1 + $0x4] sm:$0x1]
  %v34 = vld [vmem:[%s1 + $0x5] sm:$0x1]
  %v35 = vld [vmem:[%s1 + $0x6] sm:$0x1]
  %v36 = vld [vmem:[%s1 + $0x7] sm:$0x1]
  %v37 = vld [vmem:[%s1 + $0x8] sm:$0x1]
  %v38 = vld [vmem:[%s0] sm:$0xff]
  %v39 = vld [vmem:[%s0 + $0x8] sm:$0xff]
  %v40 = vld [vmem:[%s0 + $0x10] sm:$0xff]
  %v41 = vld [vmem:[%s0 + $0x18] sm:$0xff]
  %v42 = vld [vmem:[%s0 + $0x20] sm:$0xff]
  %v43 = vld [vmem:[%s0 + $0x28] sm:$0xff]
  %44 = vrot.lane.b32.xlu0 %v38, 9
  %v45 = vpop.permute.xlu0 %44
  %46 = vrot.lane.b32.xlu0 %v39, 9
  %v47 = vpop.permute.xlu0 %46
  %48 = vrot.lane.b32.xlu0 %v40, 9
  %v49 = vpop.permute.xlu0 %48
  %50 = vrot.lane.b32.xlu0 %v41, 9
  %v51 = vpop.permute.xlu0 %50
  %52 = vrot.lane.b32.xlu0 %v42, 9
  %v53 = vpop.permute.xlu0 %52
  %54 = vrot.lane.b32.xlu0 %v43, 9
  %v55 = vpop.permute.xlu0 %54
  %v57 = vlaneseq
  %v58 = vshrl.u32 %v57, 7
  %v59 = vsub.s32 0, %v58
  %v60 = vrot.slane %v29, %v59
  %v62 = vmul.f32 %v45, %v60
  %v63 = vmul.f32 %v47, %v60
  %v64 = vmul.f32 %v49, %v60
  %v65 = vmul.f32 %v51, %v60
  %v66 = vmul.f32 %v53, %v60
  %v67 = vmul.f32 %v55, %v60
  %v68 = vld [vmem:[%s2] sm:$0xff]
  %v69 = vld [vmem:[%s2 + $0x8] sm:$0xff]
  %70 = vrot.lane.b32.xlu0 %v38, 8
  %v71 = vpop.permute.xlu0 %70
  %72 = vrot.lane.b32.xlu0 %v39, 8
  %v73 = vpop.permute.xlu0 %72
  %74 = vrot.lane.b32.xlu0 %v40, 8
  %v75 = vpop.permute.xlu0 %74
  %76 = vrot.lane.b32.xlu0 %v41, 8
  %v77 = vpop.permute.xlu0 %76
  %78 = vrot.lane.b32.xlu0 %v42, 8
  %v79 = vpop.permute.xlu0 %78
  %80 = vrot.lane.b32.xlu0 %v43, 8
  %v81 = vpop.permute.xlu0 %80
  %v83 = vlaneseq
  %v84 = vshrl.u32 %v83, 7
  %v85 = vsub.s32 0, %v84
  %v86 = vrot.slane %v30, %v85
  %v88 = vmul.f32 %v71, %v86
  %v89 = vmul.f32 %v73, %v86
  %v90 = vmul.f32 %v75, %v86
  %v91 = vmul.f32 %v77, %v86
  %v92 = vmul.f32 %v79, %v86
  %v93 = vmul.f32 %v81, %v86
  %s94 = scalar_lea.vmem %s2, 16
  %v95 = vld [vmem:[%s94] sm:$0xff]
  %v96 = vld [vmem:[%s94 + $0x8] sm:$0xff]
  %vm97 = vcmask 392192
  %v99 = vsel %vm97, %v95, 0
  %v102 = vsel %vm97, %v96, 0
  %104 = vmatprep.subr.mxu0 0.0
  %105 = vmatpush1.msra.mxu0 %v88
  %106 = vmatprep.subr.mxu0 0.0
  %107 = vmatpush1.msra.mxu0 %v89
  %108 = vmatprep.subr.mxu0 0.0
  %109 = vmatpush1.msra.mxu0 %v90
  %110 = vmatprep.subr.mxu0 0.0
  %111 = vmatpush1.msra.mxu0 %v91
  %112 = vmatprep.subr.mxu0 0.0
  %113 = vmatpush1.msra.mxu0 %v92
  %114 = vmatprep.subr.mxu0 0.0
  %115 = vmatpush1.msra.mxu0 %v93
  %116 = vmatprep.subr.mxu0 0.0
  %117 = vmatpush1.msra.mxu0 0.0
  %118 = vmatprep.subr.mxu0 0.0
  %119 = vmatpush1.msra.mxu0 0.0
  %120 = vmatprep.subr.mxu0 0.0
  %121 = vmatpush1.msra.mxu0 0.0
  %122 = vmatprep.subr.mxu0 0.0
  %123 = vmatpush1.msra.mxu0 0.0
  %124 = vmatprep.subr.mxu0 0.0
  %125 = vmatpush1.msra.mxu0 0.0
  %126 = vmatprep.subr.mxu0 0.0
  %127 = vmatpush1.msra.mxu0 0.0
  %128 = vmatprep.subr.mxu0 0.0
  %129 = vmatpush1.msra.mxu0 0.0
  %130 = vmatprep.subr.mxu0 0.0
  %131 = vmatpush1.msra.mxu0 0.0
  %132 = vmatprep.subr.mxu0 0.0
  %133 = vmatpush1.msra.mxu0 0.0
  %134 = vmatprep.subr.mxu0 0.0
  %135 = vmatpush1.msra.mxu0 0.0
  %136 = vmatprep.subr.mxu0 0.0
  %137 = vmatpush1.msra.mxu0 0.0
  %138 = vmatprep.subr.mxu0 0.0
  %139 = vmatpush1.msra.mxu0 0.0
  %140 = vmatprep.subr.mxu0 0.0
  %141 = vmatpush1.msra.mxu0 0.0
  %142 = vmatprep.subr.mxu0 0.0
  %143 = vmatpush1.msra.mxu0 0.0
  %144 = vmatprep.subr.mxu0 0.0
  %145 = vmatpush1.msra.mxu0 0.0
  %146 = vmatprep.subr.mxu0 0.0
  %147 = vmatpush1.msra.mxu0 0.0
  %148 = vmatprep.subr.mxu0 0.0
  %149 = vmatpush1.msra.mxu0 0.0
  %150 = vmatprep.subr.mxu0 0.0
  %151 = vmatpush1.msra.mxu0 0.0
  %152 = vmatprep.subr.mxu0 0.0
  %153 = vmatpush1.msra.mxu0 0.0
  %154 = vmatprep.subr.mxu0 0.0
  %155 = vmatpush1.msra.mxu0 0.0
  %156 = vmatprep.subr.mxu0 0.0
  %157 = vmatpush1.msra.mxu0 0.0
  %158 = vmatprep.subr.mxu0 0.0
  %159 = vmatpush1.msra.mxu0 0.0
  %160 = vmatprep.subr.mxu0 0.0
  %161 = vmatpush1.msra.mxu0 0.0
  %162 = vmatprep.subr.mxu0 0.0
  %163 = vmatpush1.msra.mxu0 0.0
  %164 = vmatprep.subr.mxu0 0.0
  %165 = vmatpush1.msra.mxu0 0.0
  %166 = vmatprep.subr.mxu0 0.0
  %167 = vmatpush1.msra.mxu0 0.0
  %168 = vmatprep.mubr.f32.mxu0 0.0
  %169 = vmatmul.mubr.f32.gmra.mrb[0].mxu0 %v99
  %v170 = vpop.f32.mrb[0].mxu0
  %v171 = vadd.f32 0.0, %v170
  %v172 = vpop.f32.mrb[0].mxu0
  %173 = vmatprep.mubr.f32.mxu0 0.0
  %174 = vmatmul.mubr.f32.gmra.mrb[0].mxu0 %v102
  %v175 = vpop.f32.mrb[0].mxu0
  %v176 = vadd.f32 0.0, %v175
  %v177 = vpop.f32.mrb[0].mxu0
  %178 = vdwg.mxu0
  %v180 = vsel %vm97, %v68, 0
  %v183 = vsel %vm97, %v69, 0
  %185 = vmatprep.subr.mxu0 0.0
  %186 = vmatpush1.msra.mxu0 %v62
  %187 = vmatprep.subr.mxu0 0.0
  %188 = vmatpush1.msra.mxu0 %v63
  %189 = vmatprep.subr.mxu0 0.0
  %190 = vmatpush1.msra.mxu0 %v64
  %191 = vmatprep.subr.mxu0 0.0
  %192 = vmatpush1.msra.mxu0 %v65
  %193 = vmatprep.subr.mxu0 0.0
  %194 = vmatpush1.msra.mxu0 %v66
  %195 = vmatprep.subr.mxu0 0.0
  %196 = vmatpush1.msra.mxu0 %v67
  %197 = vmatprep.subr.mxu0 0.0
  %198 = vmatpush1.msra.mxu0 0.0
  %199 = vmatprep.subr.mxu0 0.0
  %200 = vmatpush1.msra.mxu0 0.0
  %201 = vmatprep.subr.mxu0 0.0
  %202 = vmatpush1.msra.mxu0 0.0
  %203 = vmatprep.subr.mxu0 0.0
  %204 = vmatpush1.msra.mxu0 0.0
  %205 = vmatprep.subr.mxu0 0.0
  %206 = vmatpush1.msra.mxu0 0.0
  %207 = vmatprep.subr.mxu0 0.0
  %208 = vmatpush1.msra.mxu0 0.0
  %209 = vmatprep.subr.mxu0 0.0
  %210 = vmatpush1.msra.mxu0 0.0
  %211 = vmatprep.subr.mxu0 0.0
  %212 = vmatpush1.msra.mxu0 0.0
  %213 = vmatprep.subr.mxu0 0.0
  %214 = vmatpush1.msra.mxu0 0.0
  %215 = vmatprep.subr.mxu0 0.0
  %216 = vmatpush1.msra.mxu0 0.0
  %217 = vmatprep.subr.mxu0 0.0
  %218 = vmatpush1.msra.mxu0 0.0
  %219 = vmatprep.subr.mxu0 0.0
  %220 = vmatpush1.msra.mxu0 0.0
  %221 = vmatprep.subr.mxu0 0.0
  %222 = vmatpush1.msra.mxu0 0.0
  %223 = vmatprep.subr.mxu0 0.0
  %224 = vmatpush1.msra.mxu0 0.0
  %225 = vmatprep.subr.mxu0 0.0
  %226 = vmatpush1.msra.mxu0 0.0
  %227 = vmatprep.subr.mxu0 0.0
  %228 = vmatpush1.msra.mxu0 0.0
  %229 = vmatprep.subr.mxu0 0.0
  %230 = vmatpush1.msra.mxu0 0.0
  %231 = vmatprep.subr.mxu0 0.0
  %232 = vmatpush1.msra.mxu0 0.0
  %233 = vmatprep.subr.mxu0 0.0
  %234 = vmatpush1.msra.mxu0 0.0
  %235 = vmatprep.subr.mxu0 0.0
  %236 = vmatpush1.msra.mxu0 0.0
  %237 = vmatprep.subr.mxu0 0.0
  %238 = vmatpush1.msra.mxu0 0.0
  %239 = vmatprep.subr.mxu0 0.0
  %240 = vmatpush1.msra.mxu0 0.0
  %241 = vmatprep.subr.mxu0 0.0
  %242 = vmatpush1.msra.mxu0 0.0
  %243 = vmatprep.subr.mxu0 0.0
  %244 = vmatpush1.msra.mxu0 0.0
  %245 = vmatprep.subr.mxu0 0.0
  %246 = vmatpush1.msra.mxu0 0.0
  %247 = vmatprep.subr.mxu0 0.0
  %248 = vmatpush1.msra.mxu0 0.0
  %249 = vmatprep.mubr.f32.mxu0 0.0
  %250 = vmatmul.mubr.f32.gmra.mrb[0].mxu0 %v180
  %v251 = vpop.f32.mrb[0].mxu0
  %v252 = vadd.f32 %v171, %v251
  %v253 = vpop.f32.mrb[0].mxu0
  %254 = vmatprep.mubr.f32.mxu0 0.0
  %255 = vmatmul.mubr.f32.gmra.mrb[0].mxu0 %v183
  %v256 = vpop.f32.mrb[0].mxu0
  %v257 = vadd.f32 %v176, %v256
  %v258 = vpop.f32.mrb[0].mxu0
  %259 = vdwg.mxu0
  %260 = vrot.lane.b32.xlu0 %v38, 7
  %v261 = vpop.permute.xlu0 %260
  %262 = vrot.lane.b32.xlu0 %v39, 7
  %v263 = vpop.permute.xlu0 %262
  %264 = vrot.lane.b32.xlu0 %v40, 7
  %v265 = vpop.permute.xlu0 %264
  %266 = vrot.lane.b32.xlu0 %v41, 7
  %v267 = vpop.permute.xlu0 %266
  %268 = vrot.lane.b32.xlu0 %v42, 7
  %v269 = vpop.permute.xlu0 %268
  %270 = vrot.lane.b32.xlu0 %v43, 7
  %v271 = vpop.permute.xlu0 %270
  %v273 = vlaneseq
  %v274 = vshrl.u32 %v273, 7
  %v275 = vsub.s32 0, %v274
  %v276 = vrot.slane %v31, %v275
  %v278 = vmul.f32 %v261, %v276
  %v279 = vmul.f32 %v263, %v276
  %v280 = vmul.f32 %v265, %v276
  %v281 = vmul.f32 %v267, %v276
  %v282 = vmul.f32 %v269, %v276
  %v283 = vmul.f32 %v271, %v276
  %s284 = scalar_lea.vmem %s2, 32
  %v285 = vld [vmem:[%s284] sm:$0xff]
  %v286 = vld [vmem:[%s284 + $0x8] sm:$0xff]
  %v288 = vsel %vm97, %v285, 0
  %v291 = vsel %vm97, %v286, 0
  %293 = vmatprep.subr.mxu0 0.0
  %294 = vmatpush1.msra.mxu0 %v278
  %295 = vmatprep.subr.mxu0 0.0
  %296 = vmatpush1.msra.mxu0 %v279
  %297 = vmatprep.subr.mxu0 0.0
  %298 = vmatpush1.msra.mxu0 %v280
  %299 = vmatprep.subr.mxu0 0.0
  %300 = vmatpush1.msra.mxu0 %v281
  %301 = vmatprep.subr.mxu0 0.0
  %302 = vmatpush1.msra.mxu0 %v282
  %303 = vmatprep.subr.mxu0 0.0
  %304 = vmatpush1.msra.mxu0 %v283
  %305 = vmatprep.subr.mxu0 0.0
  %306 = vmatpush1.msra.mxu0 0.0
  %307 = vmatprep.subr.mxu0 0.0
  %308 = vmatpush1.msra.mxu0 0.0
  %309 = vmatprep.subr.mxu0 0.0
  %310 = vmatpush1.msra.mxu0 0.0
  %311 = vmatprep.subr.mxu0 0.0
  %312 = vmatpush1.msra.mxu0 0.0
  %313 = vmatprep.subr.mxu0 0.0
  %314 = vmatpush1.msra.mxu0 0.0
  %315 = vmatprep.subr.mxu0 0.0
  %316 = vmatpush1.msra.mxu0 0.0
  %317 = vmatprep.subr.mxu0 0.0
  %318 = vmatpush1.msra.mxu0 0.0
  %319 = vmatprep.subr.mxu0 0.0
  %320 = vmatpush1.msra.mxu0 0.0
  %321 = vmatprep.subr.mxu0 0.0
  %322 = vmatpush1.msra.mxu0 0.0
  %323 = vmatprep.subr.mxu0 0.0
  %324 = vmatpush1.msra.mxu0 0.0
  %325 = vmatprep.subr.mxu0 0.0
  %326 = vmatpush1.msra.mxu0 0.0
  %327 = vmatprep.subr.mxu0 0.0
  %328 = vmatpush1.msra.mxu0 0.0
  %329 = vmatprep.subr.mxu0 0.0
  %330 = vmatpush1.msra.mxu0 0.0
  %331 = vmatprep.subr.mxu0 0.0
  %332 = vmatpush1.msra.mxu0 0.0
  %333 = vmatprep.subr.mxu0 0.0
  %334 = vmatpush1.msra.mxu0 0.0
  %335 = vmatprep.subr.mxu0 0.0
  %336 = vmatpush1.msra.mxu0 0.0
  %337 = vmatprep.subr.mxu0 0.0
  %338 = vmatpush1.msra.mxu0 0.0
  %339 = vmatprep.subr.mxu0 0.0
  %340 = vmatpush1.msra.mxu0 0.0
  %341 = vmatprep.subr.mxu0 0.0
  %342 = vmatpush1.msra.mxu0 0.0
  %343 = vmatprep.subr.mxu0 0.0
  %344 = vmatpush1.msra.mxu0 0.0
  %345 = vmatprep.subr.mxu0 0.0
  %346 = vmatpush1.msra.mxu0 0.0
  %347 = vmatprep.subr.mxu0 0.0
  %348 = vmatpush1.msra.mxu0 0.0
  %349 = vmatprep.subr.mxu0 0.0
  %350 = vmatpush1.msra.mxu0 0.0
  %351 = vmatprep.subr.mxu0 0.0
  %352 = vmatpush1.msra.mxu0 0.0
  %353 = vmatprep.subr.mxu0 0.0
  %354 = vmatpush1.msra.mxu0 0.0
  %355 = vmatprep.subr.mxu0 0.0
  %356 = vmatpush1.msra.mxu0 0.0
  %357 = vmatprep.mubr.f32.mxu0 0.0
  %358 = vmatmul.mubr.f32.gmra.mrb[0].mxu0 %v288
  %v359 = vpop.f32.mrb[0].mxu0
  %v360 = vadd.f32 0.0, %v359
  %v361 = vpop.f32.mrb[0].mxu0
  %362 = vmatprep.mubr.f32.mxu0 0.0
  %363 = vmatmul.mubr.f32.gmra.mrb[0].mxu0 %v291
  %v364 = vpop.f32.mrb[0].mxu0
  %v365 = vadd.f32 0.0, %v364
  %v366 = vpop.f32.mrb[0].mxu0
  %367 = vdwg.mxu0
  %v368 = vadd.f32 %v252, %v360
  %v369 = vadd.f32 %v257, %v365
  %370 = vrot.lane.b32.xlu0 %v38, 1
  %v371 = vpop.permute.xlu0 %370
  %372 = vrot.lane.b32.xlu0 %v39, 1
  %v373 = vpop.permute.xlu0 %372
  %374 = vrot.lane.b32.xlu0 %v40, 1
  %v375 = vpop.permute.xlu0 %374
  %376 = vrot.lane.b32.xlu0 %v41, 1
  %v377 = vpop.permute.xlu0 %376
  %378 = vrot.lane.b32.xlu0 %v42, 1
  %v379 = vpop.permute.xlu0 %378
  %380 = vrot.lane.b32.xlu0 %v43, 1
  %v381 = vpop.permute.xlu0 %380
  %v383 = vlaneseq
  %v384 = vshrl.u32 %v383, 7
  %v385 = vsub.s32 0, %v384
  %v386 = vrot.slane %v32, %v385
  %v388 = vmul.f32 %v371, %v386
  %v389 = vmul.f32 %v373, %v386
  %v390 = vmul.f32 %v375, %v386
  %v391 = vmul.f32 %v377, %v386
  %v392 = vmul.f32 %v379, %v386
  %v393 = vmul.f32 %v381, %v386
  %s394 = scalar_lea.vmem %s2, 48
  %v395 = vld [vmem:[%s394] sm:$0xff]
  %v396 = vld [vmem:[%s394 + $0x8] sm:$0xff]
  %v398 = vsel %vm97, %v395, 0
  %v401 = vsel %vm97, %v396, 0
  %403 = vmatprep.subr.mxu0 0.0
  %404 = vmatpush1.msra.mxu0 %v388
  %405 = vmatprep.subr.mxu0 0.0
  %406 = vmatpush1.msra.mxu0 %v389
  %407 = vmatprep.subr.mxu0 0.0
  %408 = vmatpush1.msra.mxu0 %v390
  %409 = vmatprep.subr.mxu0 0.0
  %410 = vmatpush1.msra.mxu0 %v391
  %411 = vmatprep.subr.mxu0 0.0
  %412 = vmatpush1.msra.mxu0 %v392
  %413 = vmatprep.subr.mxu0 0.0
  %414 = vmatpush1.msra.mxu0 %v393
  %415 = vmatprep.subr.mxu0 0.0
  %416 = vmatpush1.msra.mxu0 0.0
  %417 = vmatprep.subr.mxu0 0.0
  %418 = vmatpush1.msra.mxu0 0.0
  %419 = vmatprep.subr.mxu0 0.0
  %420 = vmatpush1.msra.mxu0 0.0
  %421 = vmatprep.subr.mxu0 0.0
  %422 = vmatpush1.msra.mxu0 0.0
  %423 = vmatprep.subr.mxu0 0.0
  %424 = vmatpush1.msra.mxu0 0.0
  %425 = vmatprep.subr.mxu0 0.0
  %426 = vmatpush1.msra.mxu0 0.0
  %427 = vmatprep.subr.mxu0 0.0
  %428 = vmatpush1.msra.mxu0 0.0
  %429 = vmatprep.subr.mxu0 0.0
  %430 = vmatpush1.msra.mxu0 0.0
  %431 = vmatprep.subr.mxu0 0.0
  %432 = vmatpush1.msra.mxu0 0.0
  %433 = vmatprep.subr.mxu0 0.0
  %434 = vmatpush1.msra.mxu0 0.0
  %435 = vmatprep.subr.mxu0 0.0
  %436 = vmatpush1.msra.mxu0 0.0
  %437 = vmatprep.subr.mxu0 0.0
  %438 = vmatpush1.msra.mxu0 0.0
  %439 = vmatprep.subr.mxu0 0.0
  %440 = vmatpush1.msra.mxu0 0.0
  %441 = vmatprep.subr.mxu0 0.0
  %442 = vmatpush1.msra.mxu0 0.0
  %443 = vmatprep.subr.mxu0 0.0
  %444 = vmatpush1.msra.mxu0 0.0
  %445 = vmatprep.subr.mxu0 0.0
  %446 = vmatpush1.msra.mxu0 0.0
  %447 = vmatprep.subr.mxu0 0.0
  %448 = vmatpush1.msra.mxu0 0.0
  %449 = vmatprep.subr.mxu0 0.0
  %450 = vmatpush1.msra.mxu0 0.0
  %451 = vmatprep.subr.mxu0 0.0
  %452 = vmatpush1.msra.mxu0 0.0
  %453 = vmatprep.subr.mxu0 0.0
  %454 = vmatpush1.msra.mxu0 0.0
  %455 = vmatprep.subr.mxu0 0.0
  %456 = vmatpush1.msra.mxu0 0.0
  %457 = vmatprep.subr.mxu0 0.0
  %458 = vmatpush1.msra.mxu0 0.0
  %459 = vmatprep.subr.mxu0 0.0
  %460 = vmatpush1.msra.mxu0 0.0
  %461 = vmatprep.subr.mxu0 0.0
  %462 = vmatpush1.msra.mxu0 0.0
  %463 = vmatprep.subr.mxu0 0.0
  %464 = vmatpush1.msra.mxu0 0.0
  %465 = vmatprep.subr.mxu0 0.0
  %466 = vmatpush1.msra.mxu0 0.0
  %467 = vmatprep.mubr.f32.mxu0 0.0
  %468 = vmatmul.mubr.f32.gmra.mrb[0].mxu0 %v398
  %v469 = vpop.f32.mrb[0].mxu0
  %v470 = vadd.f32 0.0, %v469
  %v471 = vpop.f32.mrb[0].mxu0
  %472 = vmatprep.mubr.f32.mxu0 0.0
  %473 = vmatmul.mubr.f32.gmra.mrb[0].mxu0 %v401
  %v474 = vpop.f32.mrb[0].mxu0
  %v475 = vadd.f32 0.0, %v474
  %v476 = vpop.f32.mrb[0].mxu0
  %477 = vdwg.mxu0
  %v478 = vadd.f32 %v368, %v470
  %v479 = vadd.f32 %v369, %v475
  %v481 = vlaneseq
  %v482 = vshrl.u32 %v481, 7
  %v483 = vsub.s32 0, %v482
  %v484 = vrot.slane %v33, %v483
  %v486 = vmul.f32 %v38, %v484
  %v487 = vmul.f32 %v39, %v484
  %v488 = vmul.f32 %v40, %v484
  %v489 = vmul.f32 %v41, %v484
  %v490 = vmul.f32 %v42, %v484
  %v491 = vmul.f32 %v43, %v484
  %s492 = scalar_lea.vmem %s2, 64
  %v493 = vld [vmem:[%s492] sm:$0xff]
  %v494 = vld [vmem:[%s492 + $0x8] sm:$0xff]
  %v496 = vsel %vm97, %v493, 0
  %v499 = vsel %vm97, %v494, 0
  %501 = vmatprep.subr.mxu0 0.0
  %502 = vmatpush1.msra.mxu0 %v486
  %503 = vmatprep.subr.mxu0 0.0
  %504 = vmatpush1.msra.mxu0 %v487
  %505 = vmatprep.subr.mxu0 0.0
  %506 = vmatpush1.msra.mxu0 %v488
  %507 = vmatprep.subr.mxu0 0.0
  %508 = vmatpush1.msra.mxu0 %v489
  %509 = vmatprep.subr.mxu0 0.0
  %510 = vmatpush1.msra.mxu0 %v490
  %511 = vmatprep.subr.mxu0 0.0
  %512 = vmatpush1.msra.mxu0 %v491
  %513 = vmatprep.subr.mxu0 0.0
  %514 = vmatpush1.msra.mxu0 0.0
  %515 = vmatprep.subr.mxu0 0.0
  %516 = vmatpush1.msra.mxu0 0.0
  %517 = vmatprep.subr.mxu0 0.0
  %518 = vmatpush1.msra.mxu0 0.0
  %519 = vmatprep.subr.mxu0 0.0
  %520 = vmatpush1.msra.mxu0 0.0
  %521 = vmatprep.subr.mxu0 0.0
  %522 = vmatpush1.msra.mxu0 0.0
  %523 = vmatprep.subr.mxu0 0.0
  %524 = vmatpush1.msra.mxu0 0.0
  %525 = vmatprep.subr.mxu0 0.0
  %526 = vmatpush1.msra.mxu0 0.0
  %527 = vmatprep.subr.mxu0 0.0
  %528 = vmatpush1.msra.mxu0 0.0
  %529 = vmatprep.subr.mxu0 0.0
  %530 = vmatpush1.msra.mxu0 0.0
  %531 = vmatprep.subr.mxu0 0.0
  %532 = vmatpush1.msra.mxu0 0.0
  %533 = vmatprep.subr.mxu0 0.0
  %534 = vmatpush1.msra.mxu0 0.0
  %535 = vmatprep.subr.mxu0 0.0
  %536 = vmatpush1.msra.mxu0 0.0
  %537 = vmatprep.subr.mxu0 0.0
  %538 = vmatpush1.msra.mxu0 0.0
  %539 = vmatprep.subr.mxu0 0.0
  %540 = vmatpush1.msra.mxu0 0.0
  %541 = vmatprep.subr.mxu0 0.0
  %542 = vmatpush1.msra.mxu0 0.0
  %543 = vmatprep.subr.mxu0 0.0
  %544 = vmatpush1.msra.mxu0 0.0
  %545 = vmatprep.subr.mxu0 0.0
  %546 = vmatpush1.msra.mxu0 0.0
  %547 = vmatprep.subr.mxu0 0.0
  %548 = vmatpush1.msra.mxu0 0.0
  %549 = vmatprep.subr.mxu0 0.0
  %550 = vmatpush1.msra.mxu0 0.0
  %551 = vmatprep.subr.mxu0 0.0
  %552 = vmatpush1.msra.mxu0 0.0
  %553 = vmatprep.subr.mxu0 0.0
  %554 = vmatpush1.msra.mxu0 0.0
  %555 = vmatprep.subr.mxu0 0.0
  %556 = vmatpush1.msra.mxu0 0.0
  %557 = vmatprep.subr.mxu0 0.0
  %558 = vmatpush1.msra.mxu0 0.0
  %559 = vmatprep.subr.mxu0 0.0
  %560 = vmatpush1.msra.mxu0 0.0
  %561 = vmatprep.subr.mxu0 0.0
  %562 = vmatpush1.msra.mxu0 0.0
  %563 = vmatprep.subr.mxu0 0.0
  %564 = vmatpush1.msra.mxu0 0.0
  %565 = vmatprep.mubr.f32.mxu0 0.0
  %566 = vmatmul.mubr.f32.gmra.mrb[0].mxu0 %v496
  %v567 = vpop.f32.mrb[0].mxu0
  %v568 = vadd.f32 0.0, %v567
  %v569 = vpop.f32.mrb[0].mxu0
  %570 = vmatprep.mubr.f32.mxu0 0.0
  %571 = vmatmul.mubr.f32.gmra.mrb[0].mxu0 %v499
  %v572 = vpop.f32.mrb[0].mxu0
  %v573 = vadd.f32 0.0, %v572
  %v574 = vpop.f32.mrb[0].mxu0
  %575 = vdwg.mxu0
  %v576 = vadd.f32 %v478, %v568
  %v577 = vadd.f32 %v479, %v573
  %578 = vrot.lane.b32.xlu0 %v38, 127
  %v579 = vpop.permute.xlu0 %578
  %580 = vrot.lane.b32.xlu0 %v39, 127
  %v581 = vpop.permute.xlu0 %580
  %582 = vrot.lane.b32.xlu0 %v40, 127
  %v583 = vpop.permute.xlu0 %582
  %584 = vrot.lane.b32.xlu0 %v41, 127
  %v585 = vpop.permute.xlu0 %584
  %586 = vrot.lane.b32.xlu0 %v42, 127
  %v587 = vpop.permute.xlu0 %586
  %588 = vrot.lane.b32.xlu0 %v43, 127
  %v589 = vpop.permute.xlu0 %588
  %v591 = vlaneseq
  %v592 = vshrl.u32 %v591, 7
  %v593 = vsub.s32 0, %v592
  %v594 = vrot.slane %v34, %v593
  %v596 = vmul.f32 %v579, %v594
  %v597 = vmul.f32 %v581, %v594
  %v598 = vmul.f32 %v583, %v594
  %v599 = vmul.f32 %v585, %v594
  %v600 = vmul.f32 %v587, %v594
  %v601 = vmul.f32 %v589, %v594
  %s602 = scalar_lea.vmem %s2, 80
  %v603 = vld [vmem:[%s602] sm:$0xff]
  %v604 = vld [vmem:[%s602 + $0x8] sm:$0xff]
  %v606 = vsel %vm97, %v603, 0
  %v609 = vsel %vm97, %v604, 0
  %611 = vmatprep.subr.mxu0 0.0
  %612 = vmatpush1.msra.mxu0 %v596
  %613 = vmatprep.subr.mxu0 0.0
  %614 = vmatpush1.msra.mxu0 %v597
  %615 = vmatprep.subr.mxu0 0.0
  %616 = vmatpush1.msra.mxu0 %v598
  %617 = vmatprep.subr.mxu0 0.0
  %618 = vmatpush1.msra.mxu0 %v599
  %619 = vmatprep.subr.mxu0 0.0
  %620 = vmatpush1.msra.mxu0 %v600
  %621 = vmatprep.subr.mxu0 0.0
  %622 = vmatpush1.msra.mxu0 %v601
  %623 = vmatprep.subr.mxu0 0.0
  %624 = vmatpush1.msra.mxu0 0.0
  %625 = vmatprep.subr.mxu0 0.0
  %626 = vmatpush1.msra.mxu0 0.0
  %627 = vmatprep.subr.mxu0 0.0
  %628 = vmatpush1.msra.mxu0 0.0
  %629 = vmatprep.subr.mxu0 0.0
  %630 = vmatpush1.msra.mxu0 0.0
  %631 = vmatprep.subr.mxu0 0.0
  %632 = vmatpush1.msra.mxu0 0.0
  %633 = vmatprep.subr.mxu0 0.0
  %634 = vmatpush1.msra.mxu0 0.0
  %635 = vmatprep.subr.mxu0 0.0
  %636 = vmatpush1.msra.mxu0 0.0
  %637 = vmatprep.subr.mxu0 0.0
  %638 = vmatpush1.msra.mxu0 0.0
  %639 = vmatprep.subr.mxu0 0.0
  %640 = vmatpush1.msra.mxu0 0.0
  %641 = vmatprep.subr.mxu0 0.0
  %642 = vmatpush1.msra.mxu0 0.0
  %643 = vmatprep.subr.mxu0 0.0
  %644 = vmatpush1.msra.mxu0 0.0
  %645 = vmatprep.subr.mxu0 0.0
  %646 = vmatpush1.msra.mxu0 0.0
  %647 = vmatprep.subr.mxu0 0.0
  %648 = vmatpush1.msra.mxu0 0.0
  %649 = vmatprep.subr.mxu0 0.0
  %650 = vmatpush1.msra.mxu0 0.0
  %651 = vmatprep.subr.mxu0 0.0
  %652 = vmatpush1.msra.mxu0 0.0
  %653 = vmatprep.subr.mxu0 0.0
  %654 = vmatpush1.msra.mxu0 0.0
  %655 = vmatprep.subr.mxu0 0.0
  %656 = vmatpush1.msra.mxu0 0.0
  %657 = vmatprep.subr.mxu0 0.0
  %658 = vmatpush1.msra.mxu0 0.0
  %659 = vmatprep.subr.mxu0 0.0
  %660 = vmatpush1.msra.mxu0 0.0
  %661 = vmatprep.subr.mxu0 0.0
  %662 = vmatpush1.msra.mxu0 0.0
  %663 = vmatprep.subr.mxu0 0.0
  %664 = vmatpush1.msra.mxu0 0.0
  %665 = vmatprep.subr.mxu0 0.0
  %666 = vmatpush1.msra.mxu0 0.0
  %667 = vmatprep.subr.mxu0 0.0
  %668 = vmatpush1.msra.mxu0 0.0
  %669 = vmatprep.subr.mxu0 0.0
  %670 = vmatpush1.msra.mxu0 0.0
  %671 = vmatprep.subr.mxu0 0.0
  %672 = vmatpush1.msra.mxu0 0.0
  %673 = vmatprep.subr.mxu0 0.0
  %674 = vmatpush1.msra.mxu0 0.0
  %675 = vmatprep.mubr.f32.mxu0 0.0
  %676 = vmatmul.mubr.f32.gmra.mrb[0].mxu0 %v606
  %v677 = vpop.f32.mrb[0].mxu0
  %v678 = vadd.f32 0.0, %v677
  %v679 = vpop.f32.mrb[0].mxu0
  %680 = vmatprep.mubr.f32.mxu0 0.0
  %681 = vmatmul.mubr.f32.gmra.mrb[0].mxu0 %v609
  %v682 = vpop.f32.mrb[0].mxu0
  %v683 = vadd.f32 0.0, %v682
  %v684 = vpop.f32.mrb[0].mxu0
  %685 = vdwg.mxu0
  %v686 = vadd.f32 %v576, %v678
  %v687 = vadd.f32 %v577, %v683
  %688 = vrot.lane.b32.xlu0 %v38, 121
  %v689 = vpop.permute.xlu0 %688
  %690 = vrot.lane.b32.xlu0 %v39, 121
  %v691 = vpop.permute.xlu0 %690
  %692 = vrot.lane.b32.xlu0 %v40, 121
  %v693 = vpop.permute.xlu0 %692
  %694 = vrot.lane.b32.xlu0 %v41, 121
  %v695 = vpop.permute.xlu0 %694
  %696 = vrot.lane.b32.xlu0 %v42, 121
  %v697 = vpop.permute.xlu0 %696
  %698 = vrot.lane.b32.xlu0 %v43, 121
  %v699 = vpop.permute.xlu0 %698
  %v701 = vlaneseq
  %v702 = vshrl.u32 %v701, 7
  %v703 = vsub.s32 0, %v702
  %v704 = vrot.slane %v35, %v703
  %v706 = vmul.f32 %v689, %v704
  %v707 = vmul.f32 %v691, %v704
  %v708 = vmul.f32 %v693, %v704
  %v709 = vmul.f32 %v695, %v704
  %v710 = vmul.f32 %v697, %v704
  %v711 = vmul.f32 %v699, %v704
  %s712 = scalar_lea.vmem %s2, 96
  %v713 = vld [vmem:[%s712] sm:$0xff]
  %v714 = vld [vmem:[%s712 + $0x8] sm:$0xff]
  %v716 = vsel %vm97, %v713, 0
  %v719 = vsel %vm97, %v714, 0
  %721 = vmatprep.subr.mxu0 0.0
  %722 = vmatpush1.msra.mxu0 %v706
  %723 = vmatprep.subr.mxu0 0.0
  %724 = vmatpush1.msra.mxu0 %v707
  %725 = vmatprep.subr.mxu0 0.0
  %726 = vmatpush1.msra.mxu0 %v708
  %727 = vmatprep.subr.mxu0 0.0
  %728 = vmatpush1.msra.mxu0 %v709
  %729 = vmatprep.subr.mxu0 0.0
  %730 = vmatpush1.msra.mxu0 %v710
  %731 = vmatprep.subr.mxu0 0.0
  %732 = vmatpush1.msra.mxu0 %v711
  %733 = vmatprep.subr.mxu0 0.0
  %734 = vmatpush1.msra.mxu0 0.0
  %735 = vmatprep.subr.mxu0 0.0
  %736 = vmatpush1.msra.mxu0 0.0
  %737 = vmatprep.subr.mxu0 0.0
  %738 = vmatpush1.msra.mxu0 0.0
  %739 = vmatprep.subr.mxu0 0.0
  %740 = vmatpush1.msra.mxu0 0.0
  %741 = vmatprep.subr.mxu0 0.0
  %742 = vmatpush1.msra.mxu0 0.0
  %743 = vmatprep.subr.mxu0 0.0
  %744 = vmatpush1.msra.mxu0 0.0
  %745 = vmatprep.subr.mxu0 0.0
  %746 = vmatpush1.msra.mxu0 0.0
  %747 = vmatprep.subr.mxu0 0.0
  %748 = vmatpush1.msra.mxu0 0.0
  %749 = vmatprep.subr.mxu0 0.0
  %750 = vmatpush1.msra.mxu0 0.0
  %751 = vmatprep.subr.mxu0 0.0
  %752 = vmatpush1.msra.mxu0 0.0
  %753 = vmatprep.subr.mxu0 0.0
  %754 = vmatpush1.msra.mxu0 0.0
  %755 = vmatprep.subr.mxu0 0.0
  %756 = vmatpush1.msra.mxu0 0.0
  %757 = vmatprep.subr.mxu0 0.0
  %758 = vmatpush1.msra.mxu0 0.0
  %759 = vmatprep.subr.mxu0 0.0
  %760 = vmatpush1.msra.mxu0 0.0
  %761 = vmatprep.subr.mxu0 0.0
  %762 = vmatpush1.msra.mxu0 0.0
  %763 = vmatprep.subr.mxu0 0.0
  %764 = vmatpush1.msra.mxu0 0.0
  %765 = vmatprep.subr.mxu0 0.0
  %766 = vmatpush1.msra.mxu0 0.0
  %767 = vmatprep.subr.mxu0 0.0
  %768 = vmatpush1.msra.mxu0 0.0
  %769 = vmatprep.subr.mxu0 0.0
  %770 = vmatpush1.msra.mxu0 0.0
  %771 = vmatprep.subr.mxu0 0.0
  %772 = vmatpush1.msra.mxu0 0.0
  %773 = vmatprep.subr.mxu0 0.0
  %774 = vmatpush1.msra.mxu0 0.0
  %775 = vmatprep.subr.mxu0 0.0
  %776 = vmatpush1.msra.mxu0 0.0
  %777 = vmatprep.subr.mxu0 0.0
  %778 = vmatpush1.msra.mxu0 0.0
  %779 = vmatprep.subr.mxu0 0.0
  %780 = vmatpush1.msra.mxu0 0.0
  %781 = vmatprep.subr.mxu0 0.0
  %782 = vmatpush1.msra.mxu0 0.0
  %783 = vmatprep.subr.mxu0 0.0
  %784 = vmatpush1.msra.mxu0 0.0
  %785 = vmatprep.mubr.f32.mxu0 0.0
  %786 = vmatmul.mubr.f32.gmra.mrb[0].mxu0 %v716
  %v787 = vpop.f32.mrb[0].mxu0
  %v788 = vadd.f32 0.0, %v787
  %v789 = vpop.f32.mrb[0].mxu0
  %790 = vmatprep.mubr.f32.mxu0 0.0
  %791 = vmatmul.mubr.f32.gmra.mrb[0].mxu0 %v719
  %v792 = vpop.f32.mrb[0].mxu0
  %v793 = vadd.f32 0.0, %v792
  %v794 = vpop.f32.mrb[0].mxu0
  %795 = vdwg.mxu0
  %v796 = vadd.f32 %v686, %v788
  %v797 = vadd.f32 %v687, %v793
  %798 = vrot.lane.b32.xlu0 %v38, 120
  %v799 = vpop.permute.xlu0 %798
  %800 = vrot.lane.b32.xlu0 %v39, 120
  %v801 = vpop.permute.xlu0 %800
  %802 = vrot.lane.b32.xlu0 %v40, 120
  %v803 = vpop.permute.xlu0 %802
  %804 = vrot.lane.b32.xlu0 %v41, 120
  %v805 = vpop.permute.xlu0 %804
  %806 = vrot.lane.b32.xlu0 %v42, 120
  %v807 = vpop.permute.xlu0 %806
  %808 = vrot.lane.b32.xlu0 %v43, 120
  %v809 = vpop.permute.xlu0 %808
  %v811 = vlaneseq
  %v812 = vshrl.u32 %v811, 7
  %v813 = vsub.s32 0, %v812
  %v814 = vrot.slane %v36, %v813
  %v816 = vmul.f32 %v799, %v814
  %v817 = vmul.f32 %v801, %v814
  %v818 = vmul.f32 %v803, %v814
  %v819 = vmul.f32 %v805, %v814
  %v820 = vmul.f32 %v807, %v814
  %v821 = vmul.f32 %v809, %v814
  %s822 = scalar_lea.vmem %s2, 112
  %v823 = vld [vmem:[%s822] sm:$0xff]
  %v824 = vld [vmem:[%s822 + $0x8] sm:$0xff]
  %v826 = vsel %vm97, %v823, 0
  %v829 = vsel %vm97, %v824, 0
  %831 = vmatprep.subr.mxu0 0.0
  %832 = vmatpush1.msra.mxu0 %v816
  %833 = vmatprep.subr.mxu0 0.0
  %834 = vmatpush1.msra.mxu0 %v817
  %835 = vmatprep.subr.mxu0 0.0
  %836 = vmatpush1.msra.mxu0 %v818
  %837 = vmatprep.subr.mxu0 0.0
  %838 = vmatpush1.msra.mxu0 %v819
  %839 = vmatprep.subr.mxu0 0.0
  %840 = vmatpush1.msra.mxu0 %v820
  %841 = vmatprep.subr.mxu0 0.0
  %842 = vmatpush1.msra.mxu0 %v821
  %843 = vmatprep.subr.mxu0 0.0
  %844 = vmatpush1.msra.mxu0 0.0
  %845 = vmatprep.subr.mxu0 0.0
  %846 = vmatpush1.msra.mxu0 0.0
  %847 = vmatprep.subr.mxu0 0.0
  %848 = vmatpush1.msra.mxu0 0.0
  %849 = vmatprep.subr.mxu0 0.0
  %850 = vmatpush1.msra.mxu0 0.0
  %851 = vmatprep.subr.mxu0 0.0
  %852 = vmatpush1.msra.mxu0 0.0
  %853 = vmatprep.subr.mxu0 0.0
  %854 = vmatpush1.msra.mxu0 0.0
  %855 = vmatprep.subr.mxu0 0.0
  %856 = vmatpush1.msra.mxu0 0.0
  %857 = vmatprep.subr.mxu0 0.0
  %858 = vmatpush1.msra.mxu0 0.0
  %859 = vmatprep.subr.mxu0 0.0
  %860 = vmatpush1.msra.mxu0 0.0
  %861 = vmatprep.subr.mxu0 0.0
  %862 = vmatpush1.msra.mxu0 0.0
  %863 = vmatprep.subr.mxu0 0.0
  %864 = vmatpush1.msra.mxu0 0.0
  %865 = vmatprep.subr.mxu0 0.0
  %866 = vmatpush1.msra.mxu0 0.0
  %867 = vmatprep.subr.mxu0 0.0
  %868 = vmatpush1.msra.mxu0 0.0
  %869 = vmatprep.subr.mxu0 0.0
  %870 = vmatpush1.msra.mxu0 0.0
  %871 = vmatprep.subr.mxu0 0.0
  %872 = vmatpush1.msra.mxu0 0.0
  %873 = vmatprep.subr.mxu0 0.0
  %874 = vmatpush1.msra.mxu0 0.0
  %875 = vmatprep.subr.mxu0 0.0
  %876 = vmatpush1.msra.mxu0 0.0
  %877 = vmatprep.subr.mxu0 0.0
  %878 = vmatpush1.msra.mxu0 0.0
  %879 = vmatprep.subr.mxu0 0.0
  %880 = vmatpush1.msra.mxu0 0.0
  %881 = vmatprep.subr.mxu0 0.0
  %882 = vmatpush1.msra.mxu0 0.0
  %883 = vmatprep.subr.mxu0 0.0
  %884 = vmatpush1.msra.mxu0 0.0
  %885 = vmatprep.subr.mxu0 0.0
  %886 = vmatpush1.msra.mxu0 0.0
  %887 = vmatprep.subr.mxu0 0.0
  %888 = vmatpush1.msra.mxu0 0.0
  %889 = vmatprep.subr.mxu0 0.0
  %890 = vmatpush1.msra.mxu0 0.0
  %891 = vmatprep.subr.mxu0 0.0
  %892 = vmatpush1.msra.mxu0 0.0
  %893 = vmatprep.subr.mxu0 0.0
  %894 = vmatpush1.msra.mxu0 0.0
  %895 = vmatprep.mubr.f32.mxu0 0.0
  %896 = vmatmul.mubr.f32.gmra.mrb[0].mxu0 %v826
  %v897 = vpop.f32.mrb[0].mxu0
  %v898 = vadd.f32 0.0, %v897
  %v899 = vpop.f32.mrb[0].mxu0
  %900 = vmatprep.mubr.f32.mxu0 0.0
  %901 = vmatmul.mubr.f32.gmra.mrb[0].mxu0 %v829
  %v902 = vpop.f32.mrb[0].mxu0
  %v903 = vadd.f32 0.0, %v902
  %v904 = vpop.f32.mrb[0].mxu0
  %905 = vdwg.mxu0
  %v906 = vadd.f32 %v796, %v898
  %v907 = vadd.f32 %v797, %v903
  %908 = vrot.lane.b32.xlu0 %v38, 119
  %v909 = vpop.permute.xlu0 %908
  %910 = vrot.lane.b32.xlu0 %v39, 119
  %v911 = vpop.permute.xlu0 %910
  %912 = vrot.lane.b32.xlu0 %v40, 119
  %v913 = vpop.permute.xlu0 %912
  %914 = vrot.lane.b32.xlu0 %v41, 119
  %v915 = vpop.permute.xlu0 %914
  %916 = vrot.lane.b32.xlu0 %v42, 119
  %v917 = vpop.permute.xlu0 %916
  %918 = vrot.lane.b32.xlu0 %v43, 119
  %v919 = vpop.permute.xlu0 %918
  %v921 = vlaneseq
  %v922 = vshrl.u32 %v921, 7
  %v923 = vsub.s32 0, %v922
  %v924 = vrot.slane %v37, %v923
  %v926 = vmul.f32 %v909, %v924
  %v927 = vmul.f32 %v911, %v924
  %v928 = vmul.f32 %v913, %v924
  %v929 = vmul.f32 %v915, %v924
  %v930 = vmul.f32 %v917, %v924
  %v931 = vmul.f32 %v919, %v924
  %s932 = scalar_lea.vmem %s2, 128
  %v933 = vld [vmem:[%s932] sm:$0xff]
  %v934 = vld [vmem:[%s932 + $0x8] sm:$0xff]
  %v936 = vsel %vm97, %v933, 0
  %v939 = vsel %vm97, %v934, 0
  %941 = vmatprep.subr.mxu0 0.0
  %942 = vmatpush1.msra.mxu0 %v926
  %943 = vmatprep.subr.mxu0 0.0
  %944 = vmatpush1.msra.mxu0 %v927
  %945 = vmatprep.subr.mxu0 0.0
  %946 = vmatpush1.msra.mxu0 %v928
  %947 = vmatprep.subr.mxu0 0.0
  %948 = vmatpush1.msra.mxu0 %v929
  %949 = vmatprep.subr.mxu0 0.0
  %950 = vmatpush1.msra.mxu0 %v930
  %951 = vmatprep.subr.mxu0 0.0
  %952 = vmatpush1.msra.mxu0 %v931
  %953 = vmatprep.subr.mxu0 0.0
  %954 = vmatpush1.msra.mxu0 0.0
  %955 = vmatprep.subr.mxu0 0.0
  %956 = vmatpush1.msra.mxu0 0.0
  %957 = vmatprep.subr.mxu0 0.0
  %958 = vmatpush1.msra.mxu0 0.0
  %959 = vmatprep.subr.mxu0 0.0
  %960 = vmatpush1.msra.mxu0 0.0
  %961 = vmatprep.subr.mxu0 0.0
  %962 = vmatpush1.msra.mxu0 0.0
  %963 = vmatprep.subr.mxu0 0.0
  %964 = vmatpush1.msra.mxu0 0.0
  %965 = vmatprep.subr.mxu0 0.0
  %966 = vmatpush1.msra.mxu0 0.0
  %967 = vmatprep.subr.mxu0 0.0
  %968 = vmatpush1.msra.mxu0 0.0
  %969 = vmatprep.subr.mxu0 0.0
  %970 = vmatpush1.msra.mxu0 0.0
  %971 = vmatprep.subr.mxu0 0.0
  %972 = vmatpush1.msra.mxu0 0.0
  %973 = vmatprep.subr.mxu0 0.0
  %974 = vmatpush1.msra.mxu0 0.0
  %975 = vmatprep.subr.mxu0 0.0
  %976 = vmatpush1.msra.mxu0 0.0
  %977 = vmatprep.subr.mxu0 0.0
  %978 = vmatpush1.msra.mxu0 0.0
  %979 = vmatprep.subr.mxu0 0.0
  %980 = vmatpush1.msra.mxu0 0.0
  %981 = vmatprep.subr.mxu0 0.0
  %982 = vmatpush1.msra.mxu0 0.0
  %983 = vmatprep.subr.mxu0 0.0
  %984 = vmatpush1.msra.mxu0 0.0
  %985 = vmatprep.subr.mxu0 0.0
  %986 = vmatpush1.msra.mxu0 0.0
  %987 = vmatprep.subr.mxu0 0.0
  %988 = vmatpush1.msra.mxu0 0.0
  %989 = vmatprep.subr.mxu0 0.0
  %990 = vmatpush1.msra.mxu0 0.0
  %991 = vmatprep.subr.mxu0 0.0
  %992 = vmatpush1.msra.mxu0 0.0
  %993 = vmatprep.subr.mxu0 0.0
  %994 = vmatpush1.msra.mxu0 0.0
  %995 = vmatprep.subr.mxu0 0.0
  %996 = vmatpush1.msra.mxu0 0.0
  %997 = vmatprep.subr.mxu0 0.0
  %998 = vmatpush1.msra.mxu0 0.0
  %999 = vmatprep.subr.mxu0 0.0
  %1000 = vmatpush1.msra.mxu0 0.0
  %1001 = vmatprep.subr.mxu0 0.0
  %1002 = vmatpush1.msra.mxu0 0.0
  %1003 = vmatprep.subr.mxu0 0.0
  %1004 = vmatpush1.msra.mxu0 0.0
  %1005 = vmatprep.mubr.f32.mxu0 0.0
  %1006 = vmatmul.mubr.f32.gmra.mrb[0].mxu0 %v936
  %v1007 = vpop.f32.mrb[0].mxu0
  %v1008 = vadd.f32 0.0, %v1007
  %v1009 = vpop.f32.mrb[0].mxu0
  %1010 = vmatprep.mubr.f32.mxu0 0.0
  %1011 = vmatmul.mubr.f32.gmra.mrb[0].mxu0 %v939
  %v1012 = vpop.f32.mrb[0].mxu0
  %v1013 = vadd.f32 0.0, %v1012
  %v1014 = vpop.f32.mrb[0].mxu0
  %1015 = vdwg.mxu0
  %v1016 = vadd.f32 %v906, %v1008
  %v1017 = vadd.f32 %v907, %v1013
  %v1018 = vld [vmem:[%s3] sm:$0xff]
  %v1019 = vld [vmem:[%s3 + $0x8] sm:$0xff]
  %1021 = vset.pattern.permute.xlu0 0
  %1022 = vperm.xlu0 %1021, %v1018
  %v1023 = vpop.permute.xlu0 %1022
  %1026 = vset.pattern.permute.xlu0 0
  %1027 = vperm.xlu0 %1026, %v1019
  %v1028 = vpop.permute.xlu0 %1027
  %v1030 = vadd.f32 %v1016, %v1023
  %v1031 = vadd.f32 %v1017, %v1028
  %v1032 = vmax.f32 %v1030, 0.0
  %v1033 = vmax.f32 %v1031, 0.0
  %1034 = vrot.lane.b32.xlu0 %v1032, 9
  %v1035 = vpop.permute.xlu0 %1034
  %1036 = vrot.lane.b32.xlu0 %v1033, 9
  %v1037 = vpop.permute.xlu0 %1036
  %v1038 = vmul.f32 %v1035, %v60
  %v1039 = vmul.f32 %v1037, %v60
  %v1040 = vld [vmem:[%s4] sm:$0xff]
  %v1041 = vld [vmem:[%s4 + $0x8] sm:$0xff]
  %v1042 = vld [vmem:[%s4 + $0x10] sm:$0xff]
  %v1043 = vld [vmem:[%s4 + $0x18] sm:$0xff]
  %1044 = vrot.lane.b32.xlu0 %v1032, 8
  %v1045 = vpop.permute.xlu0 %1044
  %1046 = vrot.lane.b32.xlu0 %v1033, 8
  %v1047 = vpop.permute.xlu0 %1046
  %v1048 = vmul.f32 %v1045, %v86
  %v1049 = vmul.f32 %v1047, %v86
  %s1050 = scalar_lea.vmem %s4, 32
  %v1051 = vld [vmem:[%s1050] sm:$0xff]
  %v1052 = vld [vmem:[%s1050 + $0x8] sm:$0xff]
  %v1053 = vld [vmem:[%s1050 + $0x10] sm:$0xff]
  %v1054 = vld [vmem:[%s1050 + $0x18] sm:$0xff]
  %vm1055 = vcmask 130048
  %v1057 = vsel %vm1055, %v1051, 0
  %v1060 = vsel %vm1055, %v1052, 0
  %v1063 = vsel %vm1055, %v1053, 0
  %v1066 = vsel %vm1055, %v1054, 0
  %1068 = vmatprep.subr.mxu0 0.0
  %1069 = vmatpush1.msra.mxu0 %v1048
  %1070 = vmatprep.subr.mxu0 0.0
  %1071 = vmatpush1.msra.mxu0 %v1049
  %1072 = vmatprep.subr.mxu0 0.0
  %1073 = vmatpush1.msra.mxu0 0.0
  %1074 = vmatprep.subr.mxu0 0.0
  %1075 = vmatpush1.msra.mxu0 0.0
  %1076 = vmatprep.subr.mxu0 0.0
  %1077 = vmatpush1.msra.mxu0 0.0
  %1078 = vmatprep.subr.mxu0 0.0
  %1079 = vmatpush1.msra.mxu0 0.0
  %1080 = vmatprep.subr.mxu0 0.0
  %1081 = vmatpush1.msra.mxu0 0.0
  %1082 = vmatprep.subr.mxu0 0.0
  %1083 = vmatpush1.msra.mxu0 0.0
  %1084 = vmatprep.subr.mxu0 0.0
  %1085 = vmatpush1.msra.mxu0 0.0
  %1086 = vmatprep.subr.mxu0 0.0
  %1087 = vmatpush1.msra.mxu0 0.0
  %1088 = vmatprep.subr.mxu0 0.0
  %1089 = vmatpush1.msra.mxu0 0.0
  %1090 = vmatprep.subr.mxu0 0.0
  %1091 = vmatpush1.msra.mxu0 0.0
  %1092 = vmatprep.subr.mxu0 0.0
  %1093 = vmatpush1.msra.mxu0 0.0
  %1094 = vmatprep.subr.mxu0 0.0
  %1095 = vmatpush1.msra.mxu0 0.0
  %1096 = vmatprep.subr.mxu0 0.0
  %1097 = vmatpush1.msra.mxu0 0.0
  %1098 = vmatprep.subr.mxu0 0.0
  %1099 = vmatpush1.msra.mxu0 0.0
  %1100 = vmatprep.subr.mxu0 0.0
  %1101 = vmatpush1.msra.mxu0 0.0
  %1102 = vmatprep.subr.mxu0 0.0
  %1103 = vmatpush1.msra.mxu0 0.0
  %1104 = vmatprep.subr.mxu0 0.0
  %1105 = vmatpush1.msra.mxu0 0.0
  %1106 = vmatprep.subr.mxu0 0.0
  %1107 = vmatpush1.msra.mxu0 0.0
  %1108 = vmatprep.subr.mxu0 0.0
  %1109 = vmatpush1.msra.mxu0 0.0
  %1110 = vmatprep.subr.mxu0 0.0
  %1111 = vmatpush1.msra.mxu0 0.0
  %1112 = vmatprep.subr.mxu0 0.0
  %1113 = vmatpush1.msra.mxu0 0.0
  %1114 = vmatprep.subr.mxu0 0.0
  %1115 = vmatpush1.msra.mxu0 0.0
  %1116 = vmatprep.subr.mxu0 0.0
  %1117 = vmatpush1.msra.mxu0 0.0
  %1118 = vmatprep.subr.mxu0 0.0
  %1119 = vmatpush1.msra.mxu0 0.0
  %1120 = vmatprep.subr.mxu0 0.0
  %1121 = vmatpush1.msra.mxu0 0.0
  %1122 = vmatprep.subr.mxu0 0.0
  %1123 = vmatpush1.msra.mxu0 0.0
  %1124 = vmatprep.subr.mxu0 0.0
  %1125 = vmatpush1.msra.mxu0 0.0
  %1126 = vmatprep.subr.mxu0 0.0
  %1127 = vmatpush1.msra.mxu0 0.0
  %1128 = vmatprep.subr.mxu0 0.0
  %1129 = vmatpush1.msra.mxu0 0.0
  %1130 = vmatprep.subr.mxu0 0.0
  %1131 = vmatpush1.msra.mxu0 0.0
  %1132 = vmatprep.mubr.f32.mxu0 0.0
  %1133 = vmatmul.mubr.f32.gmra.mrb[0].mxu0 %v1057
  %v1134 = vpop.f32.mrb[0].mxu0
  %v1135 = vadd.f32 0.0, %v1134
  %v1136 = vpop.f32.mrb[0].mxu0
  %1137 = vmatprep.mubr.f32.mxu0 0.0
  %1138 = vmatmul.mubr.f32.gmra.mrb[0].mxu0 %v1060
  %v1139 = vpop.f32.mrb[0].mxu0
  %v1140 = vadd.f32 0.0, %v1139
  %v1141 = vpop.f32.mrb[0].mxu0
  %1142 = vmatprep.mubr.f32.mxu0 0.0
  %1143 = vmatmul.mubr.f32.gmra.mrb[0].mxu0 %v1063
  %v1144 = vpop.f32.mrb[0].mxu0
  %v1145 = vadd.f32 0.0, %v1144
  %v1146 = vpop.f32.mrb[0].mxu0
  %1147 = vmatprep.mubr.f32.mxu0 0.0
  %1148 = vmatmul.mubr.f32.gmra.mrb[0].mxu0 %v1066
  %v1149 = vpop.f32.mrb[0].mxu0
  %v1150 = vadd.f32 0.0, %v1149
  %v1151 = vpop.f32.mrb[0].mxu0
  %1152 = vdwg.mxu0
  %v1154 = vsel %vm1055, %v1040, 0
  %v1157 = vsel %vm1055, %v1041, 0
  %v1160 = vsel %vm1055, %v1042, 0
  %v1163 = vsel %vm1055, %v1043, 0
  %1165 = vmatprep.subr.mxu0 0.0
  %1166 = vmatpush1.msra.mxu0 %v1038
  %1167 = vmatprep.subr.mxu0 0.0
  %1168 = vmatpush1.msra.mxu0 %v1039
  %1169 = vmatprep.subr.mxu0 0.0
  %1170 = vmatpush1.msra.mxu0 0.0
  %1171 = vmatprep.subr.mxu0 0.0
  %1172 = vmatpush1.msra.mxu0 0.0
  %1173 = vmatprep.subr.mxu0 0.0
  %1174 = vmatpush1.msra.mxu0 0.0
  %1175 = vmatprep.subr.mxu0 0.0
  %1176 = vmatpush1.msra.mxu0 0.0
  %1177 = vmatprep.subr.mxu0 0.0
  %1178 = vmatpush1.msra.mxu0 0.0
  %1179 = vmatprep.subr.mxu0 0.0
  %1180 = vmatpush1.msra.mxu0 0.0
  %1181 = vmatprep.subr.mxu0 0.0
  %1182 = vmatpush1.msra.mxu0 0.0
  %1183 = vmatprep.subr.mxu0 0.0
  %1184 = vmatpush1.msra.mxu0 0.0
  %1185 = vmatprep.subr.mxu0 0.0
  %1186 = vmatpush1.msra.mxu0 0.0
  %1187 = vmatprep.subr.mxu0 0.0
  %1188 = vmatpush1.msra.mxu0 0.0
  %1189 = vmatprep.subr.mxu0 0.0
  %1190 = vmatpush1.msra.mxu0 0.0
  %1191 = vmatprep.subr.mxu0 0.0
  %1192 = vmatpush1.msra.mxu0 0.0
  %1193 = vmatprep.subr.mxu0 0.0
  %1194 = vmatpush1.msra.mxu0 0.0
  %1195 = vmatprep.subr.mxu0 0.0
  %1196 = vmatpush1.msra.mxu0 0.0
  %1197 = vmatprep.subr.mxu0 0.0
  %1198 = vmatpush1.msra.mxu0 0.0
  %1199 = vmatprep.subr.mxu0 0.0
  %1200 = vmatpush1.msra.mxu0 0.0
  %1201 = vmatprep.subr.mxu0 0.0
  %1202 = vmatpush1.msra.mxu0 0.0
  %1203 = vmatprep.subr.mxu0 0.0
  %1204 = vmatpush1.msra.mxu0 0.0
  %1205 = vmatprep.subr.mxu0 0.0
  %1206 = vmatpush1.msra.mxu0 0.0
  %1207 = vmatprep.subr.mxu0 0.0
  %1208 = vmatpush1.msra.mxu0 0.0
  %1209 = vmatprep.subr.mxu0 0.0
  %1210 = vmatpush1.msra.mxu0 0.0
  %1211 = vmatprep.subr.mxu0 0.0
  %1212 = vmatpush1.msra.mxu0 0.0
  %1213 = vmatprep.subr.mxu0 0.0
  %1214 = vmatpush1.msra.mxu0 0.0
  %1215 = vmatprep.subr.mxu0 0.0
  %1216 = vmatpush1.msra.mxu0 0.0
  %1217 = vmatprep.subr.mxu0 0.0
  %1218 = vmatpush1.msra.mxu0 0.0
  %1219 = vmatprep.subr.mxu0 0.0
  %1220 = vmatpush1.msra.mxu0 0.0
  %1221 = vmatprep.subr.mxu0 0.0
  %1222 = vmatpush1.msra.mxu0 0.0
  %1223 = vmatprep.subr.mxu0 0.0
  %1224 = vmatpush1.msra.mxu0 0.0
  %1225 = vmatprep.subr.mxu0 0.0
  %1226 = vmatpush1.msra.mxu0 0.0
  %1227 = vmatprep.subr.mxu0 0.0
  %1228 = vmatpush1.msra.mxu0 0.0
  %1229 = vmatprep.mubr.f32.mxu0 0.0
  %1230 = vmatmul.mubr.f32.gmra.mrb[0].mxu0 %v1154
  %v1231 = vpop.f32.mrb[0].mxu0
  %v1232 = vadd.f32 %v1135, %v1231
  %v1233 = vpop.f32.mrb[0].mxu0
  %1234 = vmatprep.mubr.f32.mxu0 0.0
  %1235 = vmatmul.mubr.f32.gmra.mrb[0].mxu0 %v1157
  %v1236 = vpop.f32.mrb[0].mxu0
  %v1237 = vadd.f32 %v1140, %v1236
  %v1238 = vpop.f32.mrb[0].mxu0
  %1239 = vmatprep.mubr.f32.mxu0 0.0
  %1240 = vmatmul.mubr.f32.gmra.mrb[0].mxu0 %v1160
  %v1241 = vpop.f32.mrb[0].mxu0
  %v1242 = vadd.f32 %v1145, %v1241
  %v1243 = vpop.f32.mrb[0].mxu0
  %1244 = vmatprep.mubr.f32.mxu0 0.0
  %1245 = vmatmul.mubr.f32.gmra.mrb[0].mxu0 %v1163
  %v1246 = vpop.f32.mrb[0].mxu0
  %v1247 = vadd.f32 %v1150, %v1246
  %v1248 = vpop.f32.mrb[0].mxu0
  %1249 = vdwg.mxu0
  %1250 = vrot.lane.b32.xlu0 %v1032, 7
  %v1251 = vpop.permute.xlu0 %1250
  %1252 = vrot.lane.b32.xlu0 %v1033, 7
  %v1253 = vpop.permute.xlu0 %1252
  %v1254 = vmul.f32 %v1251, %v276
  %v1255 = vmul.f32 %v1253, %v276
  %s1256 = scalar_lea.vmem %s4, 64
  %v1257 = vld [vmem:[%s1256] sm:$0xff]
  %v1258 = vld [vmem:[%s1256 + $0x8] sm:$0xff]
  %v1259 = vld [vmem:[%s1256 + $0x10] sm:$0xff]
  %v1260 = vld [vmem:[%s1256 + $0x18] sm:$0xff]
  %v1262 = vsel %vm1055, %v1257, 0
  %v1265 = vsel %vm1055, %v1258, 0
  %v1268 = vsel %vm1055, %v1259, 0
  %v1271 = vsel %vm1055, %v1260, 0
  %1273 = vmatprep.subr.mxu0 0.0
  %1274 = vmatpush1.msra.mxu0 %v1254
  %1275 = vmatprep.subr.mxu0 0.0
  %1276 = vmatpush1.msra.mxu0 %v1255
  %1277 = vmatprep.subr.mxu0 0.0
  %1278 = vmatpush1.msra.mxu0 0.0
  %1279 = vmatprep.subr.mxu0 0.0
  %1280 = vmatpush1.msra.mxu0 0.0
  %1281 = vmatprep.subr.mxu0 0.0
  %1282 = vmatpush1.msra.mxu0 0.0
  %1283 = vmatprep.subr.mxu0 0.0
  %1284 = vmatpush1.msra.mxu0 0.0
  %1285 = vmatprep.subr.mxu0 0.0
  %1286 = vmatpush1.msra.mxu0 0.0
  %1287 = vmatprep.subr.mxu0 0.0
  %1288 = vmatpush1.msra.mxu0 0.0
  %1289 = vmatprep.subr.mxu0 0.0
  %1290 = vmatpush1.msra.mxu0 0.0
  %1291 = vmatprep.subr.mxu0 0.0
  %1292 = vmatpush1.msra.mxu0 0.0
  %1293 = vmatprep.subr.mxu0 0.0
  %1294 = vmatpush1.msra.mxu0 0.0
  %1295 = vmatprep.subr.mxu0 0.0
  %1296 = vmatpush1.msra.mxu0 0.0
  %1297 = vmatprep.subr.mxu0 0.0
  %1298 = vmatpush1.msra.mxu0 0.0
  %1299 = vmatprep.subr.mxu0 0.0
  %1300 = vmatpush1.msra.mxu0 0.0
  %1301 = vmatprep.subr.mxu0 0.0
  %1302 = vmatpush1.msra.mxu0 0.0
  %1303 = vmatprep.subr.mxu0 0.0
  %1304 = vmatpush1.msra.mxu0 0.0
  %1305 = vmatprep.subr.mxu0 0.0
  %1306 = vmatpush1.msra.mxu0 0.0
  %1307 = vmatprep.subr.mxu0 0.0
  %1308 = vmatpush1.msra.mxu0 0.0
  %1309 = vmatprep.subr.mxu0 0.0
  %1310 = vmatpush1.msra.mxu0 0.0
  %1311 = vmatprep.subr.mxu0 0.0
  %1312 = vmatpush1.msra.mxu0 0.0
  %1313 = vmatprep.subr.mxu0 0.0
  %1314 = vmatpush1.msra.mxu0 0.0
  %1315 = vmatprep.subr.mxu0 0.0
  %1316 = vmatpush1.msra.mxu0 0.0
  %1317 = vmatprep.subr.mxu0 0.0
  %1318 = vmatpush1.msra.mxu0 0.0
  %1319 = vmatprep.subr.mxu0 0.0
  %1320 = vmatpush1.msra.mxu0 0.0
  %1321 = vmatprep.subr.mxu0 0.0
  %1322 = vmatpush1.msra.mxu0 0.0
  %1323 = vmatprep.subr.mxu0 0.0
  %1324 = vmatpush1.msra.mxu0 0.0
  %1325 = vmatprep.subr.mxu0 0.0
  %1326 = vmatpush1.msra.mxu0 0.0
  %1327 = vmatprep.subr.mxu0 0.0
  %1328 = vmatpush1.msra.mxu0 0.0
  %1329 = vmatprep.subr.mxu0 0.0
  %1330 = vmatpush1.msra.mxu0 0.0
  %1331 = vmatprep.subr.mxu0 0.0
  %1332 = vmatpush1.msra.mxu0 0.0
  %1333 = vmatprep.subr.mxu0 0.0
  %1334 = vmatpush1.msra.mxu0 0.0
  %1335 = vmatprep.subr.mxu0 0.0
  %1336 = vmatpush1.msra.mxu0 0.0
  %1337 = vmatprep.mubr.f32.mxu0 0.0
  %1338 = vmatmul.mubr.f32.gmra.mrb[0].mxu0 %v1262
  %v1339 = vpop.f32.mrb[0].mxu0
  %v1340 = vadd.f32 0.0, %v1339
  %v1341 = vpop.f32.mrb[0].mxu0
  %1342 = vmatprep.mubr.f32.mxu0 0.0
  %1343 = vmatmul.mubr.f32.gmra.mrb[0].mxu0 %v1265
  %v1344 = vpop.f32.mrb[0].mxu0
  %v1345 = vadd.f32 0.0, %v1344
  %v1346 = vpop.f32.mrb[0].mxu0
  %1347 = vmatprep.mubr.f32.mxu0 0.0
  %1348 = vmatmul.mubr.f32.gmra.mrb[0].mxu0 %v1268
  %v1349 = vpop.f32.mrb[0].mxu0
  %v1350 = vadd.f32 0.0, %v1349
  %v1351 = vpop.f32.mrb[0].mxu0
  %1352 = vmatprep.mubr.f32.mxu0 0.0
  %1353 = vmatmul.mubr.f32.gmra.mrb[0].mxu0 %v1271
  %v1354 = vpop.f32.mrb[0].mxu0
  %v1355 = vadd.f32 0.0, %v1354
  %v1356 = vpop.f32.mrb[0].mxu0
  %1357 = vdwg.mxu0
  %v1358 = vadd.f32 %v1232, %v1340
  %v1359 = vadd.f32 %v1237, %v1345
  %v1360 = vadd.f32 %v1242, %v1350
  %v1361 = vadd.f32 %v1247, %v1355
  %1362 = vrot.lane.b32.xlu0 %v1032, 1
  %v1363 = vpop.permute.xlu0 %1362
  %1364 = vrot.lane.b32.xlu0 %v1033, 1
  %v1365 = vpop.permute.xlu0 %1364
  %v1366 = vmul.f32 %v1363, %v386
  %v1367 = vmul.f32 %v1365, %v386
  %s1368 = scalar_lea.vmem %s4, 96
  %v1369 = vld [vmem:[%s1368] sm:$0xff]
  %v1370 = vld [vmem:[%s1368 + $0x8] sm:$0xff]
  %v1371 = vld [vmem:[%s1368 + $0x10] sm:$0xff]
  %v1372 = vld [vmem:[%s1368 + $0x18] sm:$0xff]
  %v1374 = vsel %vm1055, %v1369, 0
  %v1377 = vsel %vm1055, %v1370, 0
  %v1380 = vsel %vm1055, %v1371, 0
  %v1383 = vsel %vm1055, %v1372, 0
  %1385 = vmatprep.subr.mxu0 0.0
  %1386 = vmatpush1.msra.mxu0 %v1366
  %1387 = vmatprep.subr.mxu0 0.0
  %1388 = vmatpush1.msra.mxu0 %v1367
  %1389 = vmatprep.subr.mxu0 0.0
  %1390 = vmatpush1.msra.mxu0 0.0
  %1391 = vmatprep.subr.mxu0 0.0
  %1392 = vmatpush1.msra.mxu0 0.0
  %1393 = vmatprep.subr.mxu0 0.0
  %1394 = vmatpush1.msra.mxu0 0.0
  %1395 = vmatprep.subr.mxu0 0.0
  %1396 = vmatpush1.msra.mxu0 0.0
  %1397 = vmatprep.subr.mxu0 0.0
  %1398 = vmatpush1.msra.mxu0 0.0
  %1399 = vmatprep.subr.mxu0 0.0
  %1400 = vmatpush1.msra.mxu0 0.0
  %1401 = vmatprep.subr.mxu0 0.0
  %1402 = vmatpush1.msra.mxu0 0.0
  %1403 = vmatprep.subr.mxu0 0.0
  %1404 = vmatpush1.msra.mxu0 0.0
  %1405 = vmatprep.subr.mxu0 0.0
  %1406 = vmatpush1.msra.mxu0 0.0
  %1407 = vmatprep.subr.mxu0 0.0
  %1408 = vmatpush1.msra.mxu0 0.0
  %1409 = vmatprep.subr.mxu0 0.0
  %1410 = vmatpush1.msra.mxu0 0.0
  %1411 = vmatprep.subr.mxu0 0.0
  %1412 = vmatpush1.msra.mxu0 0.0
  %1413 = vmatprep.subr.mxu0 0.0
  %1414 = vmatpush1.msra.mxu0 0.0
  %1415 = vmatprep.subr.mxu0 0.0
  %1416 = vmatpush1.msra.mxu0 0.0
  %1417 = vmatprep.subr.mxu0 0.0
  %1418 = vmatpush1.msra.mxu0 0.0
  %1419 = vmatprep.subr.mxu0 0.0
  %1420 = vmatpush1.msra.mxu0 0.0
  %1421 = vmatprep.subr.mxu0 0.0
  %1422 = vmatpush1.msra.mxu0 0.0
  %1423 = vmatprep.subr.mxu0 0.0
  %1424 = vmatpush1.msra.mxu0 0.0
  %1425 = vmatprep.subr.mxu0 0.0
  %1426 = vmatpush1.msra.mxu0 0.0
  %1427 = vmatprep.subr.mxu0 0.0
  %1428 = vmatpush1.msra.mxu0 0.0
  %1429 = vmatprep.subr.mxu0 0.0
  %1430 = vmatpush1.msra.mxu0 0.0
  %1431 = vmatprep.subr.mxu0 0.0
  %1432 = vmatpush1.msra.mxu0 0.0
  %1433 = vmatprep.subr.mxu0 0.0
  %1434 = vmatpush1.msra.mxu0 0.0
  %1435 = vmatprep.subr.mxu0 0.0
  %1436 = vmatpush1.msra.mxu0 0.0
  %1437 = vmatprep.subr.mxu0 0.0
  %1438 = vmatpush1.msra.mxu0 0.0
  %1439 = vmatprep.subr.mxu0 0.0
  %1440 = vmatpush1.msra.mxu0 0.0
  %1441 = vmatprep.subr.mxu0 0.0
  %1442 = vmatpush1.msra.mxu0 0.0
  %1443 = vmatprep.subr.mxu0 0.0
  %1444 = vmatpush1.msra.mxu0 0.0
  %1445 = vmatprep.subr.mxu0 0.0
  %1446 = vmatpush1.msra.mxu0 0.0
  %1447 = vmatprep.subr.mxu0 0.0
  %1448 = vmatpush1.msra.mxu0 0.0
  %1449 = vmatprep.mubr.f32.mxu0 0.0
  %1450 = vmatmul.mubr.f32.gmra.mrb[0].mxu0 %v1374
  %v1451 = vpop.f32.mrb[0].mxu0
  %v1452 = vadd.f32 0.0, %v1451
  %v1453 = vpop.f32.mrb[0].mxu0
  %1454 = vmatprep.mubr.f32.mxu0 0.0
  %1455 = vmatmul.mubr.f32.gmra.mrb[0].mxu0 %v1377
  %v1456 = vpop.f32.mrb[0].mxu0
  %v1457 = vadd.f32 0.0, %v1456
  %v1458 = vpop.f32.mrb[0].mxu0
  %1459 = vmatprep.mubr.f32.mxu0 0.0
  %1460 = vmatmul.mubr.f32.gmra.mrb[0].mxu0 %v1380
  %v1461 = vpop.f32.mrb[0].mxu0
  %v1462 = vadd.f32 0.0, %v1461
  %v1463 = vpop.f32.mrb[0].mxu0
  %1464 = vmatprep.mubr.f32.mxu0 0.0
  %1465 = vmatmul.mubr.f32.gmra.mrb[0].mxu0 %v1383
  %v1466 = vpop.f32.mrb[0].mxu0
  %v1467 = vadd.f32 0.0, %v1466
  %v1468 = vpop.f32.mrb[0].mxu0
  %1469 = vdwg.mxu0
  %v1470 = vadd.f32 %v1358, %v1452
  %v1471 = vadd.f32 %v1359, %v1457
  %v1472 = vadd.f32 %v1360, %v1462
  %v1473 = vadd.f32 %v1361, %v1467
  %v1474 = vmul.f32 %v1032, %v484
  %v1475 = vmul.f32 %v1033, %v484
  %s1476 = scalar_lea.vmem %s4, 128
  %v1477 = vld [vmem:[%s1476] sm:$0xff]
  %v1478 = vld [vmem:[%s1476 + $0x8] sm:$0xff]
  %v1479 = vld [vmem:[%s1476 + $0x10] sm:$0xff]
  %v1480 = vld [vmem:[%s1476 + $0x18] sm:$0xff]
  %v1482 = vsel %vm1055, %v1477, 0
  %v1485 = vsel %vm1055, %v1478, 0
  %v1488 = vsel %vm1055, %v1479, 0
  %v1491 = vsel %vm1055, %v1480, 0
  %1493 = vmatprep.subr.mxu0 0.0
  %1494 = vmatpush1.msra.mxu0 %v1474
  %1495 = vmatprep.subr.mxu0 0.0
  %1496 = vmatpush1.msra.mxu0 %v1475
  %1497 = vmatprep.subr.mxu0 0.0
  %1498 = vmatpush1.msra.mxu0 0.0
  %1499 = vmatprep.subr.mxu0 0.0
  %1500 = vmatpush1.msra.mxu0 0.0
  %1501 = vmatprep.subr.mxu0 0.0
  %1502 = vmatpush1.msra.mxu0 0.0
  %1503 = vmatprep.subr.mxu0 0.0
  %1504 = vmatpush1.msra.mxu0 0.0
  %1505 = vmatprep.subr.mxu0 0.0
  %1506 = vmatpush1.msra.mxu0 0.0
  %1507 = vmatprep.subr.mxu0 0.0
  %1508 = vmatpush1.msra.mxu0 0.0
  %1509 = vmatprep.subr.mxu0 0.0
  %1510 = vmatpush1.msra.mxu0 0.0
  %1511 = vmatprep.subr.mxu0 0.0
  %1512 = vmatpush1.msra.mxu0 0.0
  %1513 = vmatprep.subr.mxu0 0.0
  %1514 = vmatpush1.msra.mxu0 0.0
  %1515 = vmatprep.subr.mxu0 0.0
  %1516 = vmatpush1.msra.mxu0 0.0
  %1517 = vmatprep.subr.mxu0 0.0
  %1518 = vmatpush1.msra.mxu0 0.0
  %1519 = vmatprep.subr.mxu0 0.0
  %1520 = vmatpush1.msra.mxu0 0.0
  %1521 = vmatprep.subr.mxu0 0.0
  %1522 = vmatpush1.msra.mxu0 0.0
  %1523 = vmatprep.subr.mxu0 0.0
  %1524 = vmatpush1.msra.mxu0 0.0
  %1525 = vmatprep.subr.mxu0 0.0
  %1526 = vmatpush1.msra.mxu0 0.0
  %1527 = vmatprep.subr.mxu0 0.0
  %1528 = vmatpush1.msra.mxu0 0.0
  %1529 = vmatprep.subr.mxu0 0.0
  %1530 = vmatpush1.msra.mxu0 0.0
  %1531 = vmatprep.subr.mxu0 0.0
  %1532 = vmatpush1.msra.mxu0 0.0
  %1533 = vmatprep.subr.mxu0 0.0
  %1534 = vmatpush1.msra.mxu0 0.0
  %1535 = vmatprep.subr.mxu0 0.0
  %1536 = vmatpush1.msra.mxu0 0.0
  %1537 = vmatprep.subr.mxu0 0.0
  %1538 = vmatpush1.msra.mxu0 0.0
  %1539 = vmatprep.subr.mxu0 0.0
  %1540 = vmatpush1.msra.mxu0 0.0
  %1541 = vmatprep.subr.mxu0 0.0
  %1542 = vmatpush1.msra.mxu0 0.0
  %1543 = vmatprep.subr.mxu0 0.0
  %1544 = vmatpush1.msra.mxu0 0.0
  %1545 = vmatprep.subr.mxu0 0.0
  %1546 = vmatpush1.msra.mxu0 0.0
  %1547 = vmatprep.subr.mxu0 0.0
  %1548 = vmatpush1.msra.mxu0 0.0
  %1549 = vmatprep.subr.mxu0 0.0
  %1550 = vmatpush1.msra.mxu0 0.0
  %1551 = vmatprep.subr.mxu0 0.0
  %1552 = vmatpush1.msra.mxu0 0.0
  %1553 = vmatprep.subr.mxu0 0.0
  %1554 = vmatpush1.msra.mxu0 0.0
  %1555 = vmatprep.subr.mxu0 0.0
  %1556 = vmatpush1.msra.mxu0 0.0
  %1557 = vmatprep.mubr.f32.mxu0 0.0
  %1558 = vmatmul.mubr.f32.gmra.mrb[0].mxu0 %v1482
  %v1559 = vpop.f32.mrb[0].mxu0
  %v1560 = vadd.f32 0.0, %v1559
  %v1561 = vpop.f32.mrb[0].mxu0
  %1562 = vmatprep.mubr.f32.mxu0 0.0
  %1563 = vmatmul.mubr.f32.gmra.mrb[0].mxu0 %v1485
  %v1564 = vpop.f32.mrb[0].mxu0
  %v1565 = vadd.f32 0.0, %v1564
  %v1566 = vpop.f32.mrb[0].mxu0
  %1567 = vmatprep.mubr.f32.mxu0 0.0
  %1568 = vmatmul.mubr.f32.gmra.mrb[0].mxu0 %v1488
  %v1569 = vpop.f32.mrb[0].mxu0
  %v1570 = vadd.f32 0.0, %v1569
  %v1571 = vpop.f32.mrb[0].mxu0
  %1572 = vmatprep.mubr.f32.mxu0 0.0
  %1573 = vmatmul.mubr.f32.gmra.mrb[0].mxu0 %v1491
  %v1574 = vpop.f32.mrb[0].mxu0
  %v1575 = vadd.f32 0.0, %v1574
  %v1576 = vpop.f32.mrb[0].mxu0
  %1577 = vdwg.mxu0
  %v1578 = vadd.f32 %v1470, %v1560
  %v1579 = vadd.f32 %v1471, %v1565
  %v1580 = vadd.f32 %v1472, %v1570
  %v1581 = vadd.f32 %v1473, %v1575
  %1582 = vrot.lane.b32.xlu0 %v1032, 127
  %v1583 = vpop.permute.xlu0 %1582
  %1584 = vrot.lane.b32.xlu0 %v1033, 127
  %v1585 = vpop.permute.xlu0 %1584
  %v1586 = vmul.f32 %v1583, %v594
  %v1587 = vmul.f32 %v1585, %v594
  %s1588 = scalar_lea.vmem %s4, 160
  %v1589 = vld [vmem:[%s1588] sm:$0xff]
  %v1590 = vld [vmem:[%s1588 + $0x8] sm:$0xff]
  %v1591 = vld [vmem:[%s1588 + $0x10] sm:$0xff]
  %v1592 = vld [vmem:[%s1588 + $0x18] sm:$0xff]
  %v1594 = vsel %vm1055, %v1589, 0
  %v1597 = vsel %vm1055, %v1590, 0
  %v1600 = vsel %vm1055, %v1591, 0
  %v1603 = vsel %vm1055, %v1592, 0
  %1605 = vmatprep.subr.mxu0 0.0
  %1606 = vmatpush1.msra.mxu0 %v1586
  %1607 = vmatprep.subr.mxu0 0.0
  %1608 = vmatpush1.msra.mxu0 %v1587
  %1609 = vmatprep.subr.mxu0 0.0
  %1610 = vmatpush1.msra.mxu0 0.0
  %1611 = vmatprep.subr.mxu0 0.0
  %1612 = vmatpush1.msra.mxu0 0.0
  %1613 = vmatprep.subr.mxu0 0.0
  %1614 = vmatpush1.msra.mxu0 0.0
  %1615 = vmatprep.subr.mxu0 0.0
  %1616 = vmatpush1.msra.mxu0 0.0
  %1617 = vmatprep.subr.mxu0 0.0
  %1618 = vmatpush1.msra.mxu0 0.0
  %1619 = vmatprep.subr.mxu0 0.0
  %1620 = vmatpush1.msra.mxu0 0.0
  %1621 = vmatprep.subr.mxu0 0.0
  %1622 = vmatpush1.msra.mxu0 0.0
  %1623 = vmatprep.subr.mxu0 0.0
  %1624 = vmatpush1.msra.mxu0 0.0
  %1625 = vmatprep.subr.mxu0 0.0
  %1626 = vmatpush1.msra.mxu0 0.0
  %1627 = vmatprep.subr.mxu0 0.0
  %1628 = vmatpush1.msra.mxu0 0.0
  %1629 = vmatprep.subr.mxu0 0.0
  %1630 = vmatpush1.msra.mxu0 0.0
  %1631 = vmatprep.subr.mxu0 0.0
  %1632 = vmatpush1.msra.mxu0 0.0
  %1633 = vmatprep.subr.mxu0 0.0
  %1634 = vmatpush1.msra.mxu0 0.0
  %1635 = vmatprep.subr.mxu0 0.0
  %1636 = vmatpush1.msra.mxu0 0.0
  %1637 = vmatprep.subr.mxu0 0.0
  %1638 = vmatpush1.msra.mxu0 0.0
  %1639 = vmatprep.subr.mxu0 0.0
  %1640 = vmatpush1.msra.mxu0 0.0
  %1641 = vmatprep.subr.mxu0 0.0
  %1642 = vmatpush1.msra.mxu0 0.0
  %1643 = vmatprep.subr.mxu0 0.0
  %1644 = vmatpush1.msra.mxu0 0.0
  %1645 = vmatprep.subr.mxu0 0.0
  %1646 = vmatpush1.msra.mxu0 0.0
  %1647 = vmatprep.subr.mxu0 0.0
  %1648 = vmatpush1.msra.mxu0 0.0
  %1649 = vmatprep.subr.mxu0 0.0
  %1650 = vmatpush1.msra.mxu0 0.0
  %1651 = vmatprep.subr.mxu0 0.0
  %1652 = vmatpush1.msra.mxu0 0.0
  %1653 = vmatprep.subr.mxu0 0.0
  %1654 = vmatpush1.msra.mxu0 0.0
  %1655 = vmatprep.subr.mxu0 0.0
  %1656 = vmatpush1.msra.mxu0 0.0
  %1657 = vmatprep.subr.mxu0 0.0
  %1658 = vmatpush1.msra.mxu0 0.0
  %1659 = vmatprep.subr.mxu0 0.0
  %1660 = vmatpush1.msra.mxu0 0.0
  %1661 = vmatprep.subr.mxu0 0.0
  %1662 = vmatpush1.msra.mxu0 0.0
  %1663 = vmatprep.subr.mxu0 0.0
  %1664 = vmatpush1.msra.mxu0 0.0
  %1665 = vmatprep.subr.mxu0 0.0
  %1666 = vmatpush1.msra.mxu0 0.0
  %1667 = vmatprep.subr.mxu0 0.0
  %1668 = vmatpush1.msra.mxu0 0.0
  %1669 = vmatprep.mubr.f32.mxu0 0.0
  %1670 = vmatmul.mubr.f32.gmra.mrb[0].mxu0 %v1594
  %v1671 = vpop.f32.mrb[0].mxu0
  %v1672 = vadd.f32 0.0, %v1671
  %v1673 = vpop.f32.mrb[0].mxu0
  %1674 = vmatprep.mubr.f32.mxu0 0.0
  %1675 = vmatmul.mubr.f32.gmra.mrb[0].mxu0 %v1597
  %v1676 = vpop.f32.mrb[0].mxu0
  %v1677 = vadd.f32 0.0, %v1676
  %v1678 = vpop.f32.mrb[0].mxu0
  %1679 = vmatprep.mubr.f32.mxu0 0.0
  %1680 = vmatmul.mubr.f32.gmra.mrb[0].mxu0 %v1600
  %v1681 = vpop.f32.mrb[0].mxu0
  %v1682 = vadd.f32 0.0, %v1681
  %v1683 = vpop.f32.mrb[0].mxu0
  %1684 = vmatprep.mubr.f32.mxu0 0.0
  %1685 = vmatmul.mubr.f32.gmra.mrb[0].mxu0 %v1603
  %v1686 = vpop.f32.mrb[0].mxu0
  %v1687 = vadd.f32 0.0, %v1686
  %v1688 = vpop.f32.mrb[0].mxu0
  %1689 = vdwg.mxu0
  %v1690 = vadd.f32 %v1578, %v1672
  %v1691 = vadd.f32 %v1579, %v1677
  %v1692 = vadd.f32 %v1580, %v1682
  %v1693 = vadd.f32 %v1581, %v1687
  %1694 = vrot.lane.b32.xlu0 %v1032, 121
  %v1695 = vpop.permute.xlu0 %1694
  %1696 = vrot.lane.b32.xlu0 %v1033, 121
  %v1697 = vpop.permute.xlu0 %1696
  %v1698 = vmul.f32 %v1695, %v704
  %v1699 = vmul.f32 %v1697, %v704
  %s1700 = scalar_lea.vmem %s4, 192
  %v1701 = vld [vmem:[%s1700] sm:$0xff]
  %v1702 = vld [vmem:[%s1700 + $0x8] sm:$0xff]
  %v1703 = vld [vmem:[%s1700 + $0x10] sm:$0xff]
  %v1704 = vld [vmem:[%s1700 + $0x18] sm:$0xff]
  %v1706 = vsel %vm1055, %v1701, 0
  %v1709 = vsel %vm1055, %v1702, 0
  %v1712 = vsel %vm1055, %v1703, 0
  %v1715 = vsel %vm1055, %v1704, 0
  %1717 = vmatprep.subr.mxu0 0.0
  %1718 = vmatpush1.msra.mxu0 %v1698
  %1719 = vmatprep.subr.mxu0 0.0
  %1720 = vmatpush1.msra.mxu0 %v1699
  %1721 = vmatprep.subr.mxu0 0.0
  %1722 = vmatpush1.msra.mxu0 0.0
  %1723 = vmatprep.subr.mxu0 0.0
  %1724 = vmatpush1.msra.mxu0 0.0
  %1725 = vmatprep.subr.mxu0 0.0
  %1726 = vmatpush1.msra.mxu0 0.0
  %1727 = vmatprep.subr.mxu0 0.0
  %1728 = vmatpush1.msra.mxu0 0.0
  %1729 = vmatprep.subr.mxu0 0.0
  %1730 = vmatpush1.msra.mxu0 0.0
  %1731 = vmatprep.subr.mxu0 0.0
  %1732 = vmatpush1.msra.mxu0 0.0
  %1733 = vmatprep.subr.mxu0 0.0
  %1734 = vmatpush1.msra.mxu0 0.0
  %1735 = vmatprep.subr.mxu0 0.0
  %1736 = vmatpush1.msra.mxu0 0.0
  %1737 = vmatprep.subr.mxu0 0.0
  %1738 = vmatpush1.msra.mxu0 0.0
  %1739 = vmatprep.subr.mxu0 0.0
  %1740 = vmatpush1.msra.mxu0 0.0
  %1741 = vmatprep.subr.mxu0 0.0
  %1742 = vmatpush1.msra.mxu0 0.0
  %1743 = vmatprep.subr.mxu0 0.0
  %1744 = vmatpush1.msra.mxu0 0.0
  %1745 = vmatprep.subr.mxu0 0.0
  %1746 = vmatpush1.msra.mxu0 0.0
  %1747 = vmatprep.subr.mxu0 0.0
  %1748 = vmatpush1.msra.mxu0 0.0
  %1749 = vmatprep.subr.mxu0 0.0
  %1750 = vmatpush1.msra.mxu0 0.0
  %1751 = vmatprep.subr.mxu0 0.0
  %1752 = vmatpush1.msra.mxu0 0.0
  %1753 = vmatprep.subr.mxu0 0.0
  %1754 = vmatpush1.msra.mxu0 0.0
  %1755 = vmatprep.subr.mxu0 0.0
  %1756 = vmatpush1.msra.mxu0 0.0
  %1757 = vmatprep.subr.mxu0 0.0
  %1758 = vmatpush1.msra.mxu0 0.0
  %1759 = vmatprep.subr.mxu0 0.0
  %1760 = vmatpush1.msra.mxu0 0.0
  %1761 = vmatprep.subr.mxu0 0.0
  %1762 = vmatpush1.msra.mxu0 0.0
  %1763 = vmatprep.subr.mxu0 0.0
  %1764 = vmatpush1.msra.mxu0 0.0
  %1765 = vmatprep.subr.mxu0 0.0
  %1766 = vmatpush1.msra.mxu0 0.0
  %1767 = vmatprep.subr.mxu0 0.0
  %1768 = vmatpush1.msra.mxu0 0.0
  %1769 = vmatprep.subr.mxu0 0.0
  %1770 = vmatpush1.msra.mxu0 0.0
  %1771 = vmatprep.subr.mxu0 0.0
  %1772 = vmatpush1.msra.mxu0 0.0
  %1773 = vmatprep.subr.mxu0 0.0
  %1774 = vmatpush1.msra.mxu0 0.0
  %1775 = vmatprep.subr.mxu0 0.0
  %1776 = vmatpush1.msra.mxu0 0.0
  %1777 = vmatprep.subr.mxu0 0.0
  %1778 = vmatpush1.msra.mxu0 0.0
  %1779 = vmatprep.subr.mxu0 0.0
  %1780 = vmatpush1.msra.mxu0 0.0
  %1781 = vmatprep.mubr.f32.mxu0 0.0
  %1782 = vmatmul.mubr.f32.gmra.mrb[0].mxu0 %v1706
  %v1783 = vpop.f32.mrb[0].mxu0
  %v1784 = vadd.f32 0.0, %v1783
  %v1785 = vpop.f32.mrb[0].mxu0
  %1786 = vmatprep.mubr.f32.mxu0 0.0
  %1787 = vmatmul.mubr.f32.gmra.mrb[0].mxu0 %v1709
  %v1788 = vpop.f32.mrb[0].mxu0
  %v1789 = vadd.f32 0.0, %v1788
  %v1790 = vpop.f32.mrb[0].mxu0
  %1791 = vmatprep.mubr.f32.mxu0 0.0
  %1792 = vmatmul.mubr.f32.gmra.mrb[0].mxu0 %v1712
  %v1793 = vpop.f32.mrb[0].mxu0
  %v1794 = vadd.f32 0.0, %v1793
  %v1795 = vpop.f32.mrb[0].mxu0
  %1796 = vmatprep.mubr.f32.mxu0 0.0
  %1797 = vmatmul.mubr.f32.gmra.mrb[0].mxu0 %v1715
  %v1798 = vpop.f32.mrb[0].mxu0
  %v1799 = vadd.f32 0.0, %v1798
  %v1800 = vpop.f32.mrb[0].mxu0
  %1801 = vdwg.mxu0
  %v1802 = vadd.f32 %v1690, %v1784
  %v1803 = vadd.f32 %v1691, %v1789
  %v1804 = vadd.f32 %v1692, %v1794
  %v1805 = vadd.f32 %v1693, %v1799
  %1806 = vrot.lane.b32.xlu0 %v1032, 120
  %v1807 = vpop.permute.xlu0 %1806
  %1808 = vrot.lane.b32.xlu0 %v1033, 120
  %v1809 = vpop.permute.xlu0 %1808
  %v1810 = vmul.f32 %v1807, %v814
  %v1811 = vmul.f32 %v1809, %v814
  %s1812 = scalar_lea.vmem %s4, 224
  %v1813 = vld [vmem:[%s1812] sm:$0xff]
  %v1814 = vld [vmem:[%s1812 + $0x8] sm:$0xff]
  %v1815 = vld [vmem:[%s1812 + $0x10] sm:$0xff]
  %v1816 = vld [vmem:[%s1812 + $0x18] sm:$0xff]
  %v1818 = vsel %vm1055, %v1813, 0
  %v1821 = vsel %vm1055, %v1814, 0
  %v1824 = vsel %vm1055, %v1815, 0
  %v1827 = vsel %vm1055, %v1816, 0
  %1829 = vmatprep.subr.mxu0 0.0
  %1830 = vmatpush1.msra.mxu0 %v1810
  %1831 = vmatprep.subr.mxu0 0.0
  %1832 = vmatpush1.msra.mxu0 %v1811
  %1833 = vmatprep.subr.mxu0 0.0
  %1834 = vmatpush1.msra.mxu0 0.0
  %1835 = vmatprep.subr.mxu0 0.0
  %1836 = vmatpush1.msra.mxu0 0.0
  %1837 = vmatprep.subr.mxu0 0.0
  %1838 = vmatpush1.msra.mxu0 0.0
  %1839 = vmatprep.subr.mxu0 0.0
  %1840 = vmatpush1.msra.mxu0 0.0
  %1841 = vmatprep.subr.mxu0 0.0
  %1842 = vmatpush1.msra.mxu0 0.0
  %1843 = vmatprep.subr.mxu0 0.0
  %1844 = vmatpush1.msra.mxu0 0.0
  %1845 = vmatprep.subr.mxu0 0.0
  %1846 = vmatpush1.msra.mxu0 0.0
  %1847 = vmatprep.subr.mxu0 0.0
  %1848 = vmatpush1.msra.mxu0 0.0
  %1849 = vmatprep.subr.mxu0 0.0
  %1850 = vmatpush1.msra.mxu0 0.0
  %1851 = vmatprep.subr.mxu0 0.0
  %1852 = vmatpush1.msra.mxu0 0.0
  %1853 = vmatprep.subr.mxu0 0.0
  %1854 = vmatpush1.msra.mxu0 0.0
  %1855 = vmatprep.subr.mxu0 0.0
  %1856 = vmatpush1.msra.mxu0 0.0
  %1857 = vmatprep.subr.mxu0 0.0
  %1858 = vmatpush1.msra.mxu0 0.0
  %1859 = vmatprep.subr.mxu0 0.0
  %1860 = vmatpush1.msra.mxu0 0.0
  %1861 = vmatprep.subr.mxu0 0.0
  %1862 = vmatpush1.msra.mxu0 0.0
  %1863 = vmatprep.subr.mxu0 0.0
  %1864 = vmatpush1.msra.mxu0 0.0
  %1865 = vmatprep.subr.mxu0 0.0
  %1866 = vmatpush1.msra.mxu0 0.0
  %1867 = vmatprep.subr.mxu0 0.0
  %1868 = vmatpush1.msra.mxu0 0.0
  %1869 = vmatprep.subr.mxu0 0.0
  %1870 = vmatpush1.msra.mxu0 0.0
  %1871 = vmatprep.subr.mxu0 0.0
  %1872 = vmatpush1.msra.mxu0 0.0
  %1873 = vmatprep.subr.mxu0 0.0
  %1874 = vmatpush1.msra.mxu0 0.0
  %1875 = vmatprep.subr.mxu0 0.0
  %1876 = vmatpush1.msra.mxu0 0.0
  %1877 = vmatprep.subr.mxu0 0.0
  %1878 = vmatpush1.msra.mxu0 0.0
  %1879 = vmatprep.subr.mxu0 0.0
  %1880 = vmatpush1.msra.mxu0 0.0
  %1881 = vmatprep.subr.mxu0 0.0
  %1882 = vmatpush1.msra.mxu0 0.0
  %1883 = vmatprep.subr.mxu0 0.0
  %1884 = vmatpush1.msra.mxu0 0.0
  %1885 = vmatprep.subr.mxu0 0.0
  %1886 = vmatpush1.msra.mxu0 0.0
  %1887 = vmatprep.subr.mxu0 0.0
  %1888 = vmatpush1.msra.mxu0 0.0
  %1889 = vmatprep.subr.mxu0 0.0
  %1890 = vmatpush1.msra.mxu0 0.0
  %1891 = vmatprep.subr.mxu0 0.0
  %1892 = vmatpush1.msra.mxu0 0.0
  %1893 = vmatprep.mubr.f32.mxu0 0.0
  %1894 = vmatmul.mubr.f32.gmra.mrb[0].mxu0 %v1818
  %v1895 = vpop.f32.mrb[0].mxu0
  %v1896 = vadd.f32 0.0, %v1895
  %v1897 = vpop.f32.mrb[0].mxu0
  %1898 = vmatprep.mubr.f32.mxu0 0.0
  %1899 = vmatmul.mubr.f32.gmra.mrb[0].mxu0 %v1821
  %v1900 = vpop.f32.mrb[0].mxu0
  %v1901 = vadd.f32 0.0, %v1900
  %v1902 = vpop.f32.mrb[0].mxu0
  %1903 = vmatprep.mubr.f32.mxu0 0.0
  %1904 = vmatmul.mubr.f32.gmra.mrb[0].mxu0 %v1824
  %v1905 = vpop.f32.mrb[0].mxu0
  %v1906 = vadd.f32 0.0, %v1905
  %v1907 = vpop.f32.mrb[0].mxu0
  %1908 = vmatprep.mubr.f32.mxu0 0.0
  %1909 = vmatmul.mubr.f32.gmra.mrb[0].mxu0 %v1827
  %v1910 = vpop.f32.mrb[0].mxu0
  %v1911 = vadd.f32 0.0, %v1910
  %v1912 = vpop.f32.mrb[0].mxu0
  %1913 = vdwg.mxu0
  %v1914 = vadd.f32 %v1802, %v1896
  %v1915 = vadd.f32 %v1803, %v1901
  %v1916 = vadd.f32 %v1804, %v1906
  %v1917 = vadd.f32 %v1805, %v1911
  %1918 = vrot.lane.b32.xlu0 %v1032, 119
  %v1919 = vpop.permute.xlu0 %1918
  %1920 = vrot.lane.b32.xlu0 %v1033, 119
  %v1921 = vpop.permute.xlu0 %1920
  %v1922 = vmul.f32 %v1919, %v924
  %v1923 = vmul.f32 %v1921, %v924
  %s1924 = scalar_lea.vmem %s4, 256
  %v1925 = vld [vmem:[%s1924] sm:$0xff]
  %v1926 = vld [vmem:[%s1924 + $0x8] sm:$0xff]
  %v1927 = vld [vmem:[%s1924 + $0x10] sm:$0xff]
  %v1928 = vld [vmem:[%s1924 + $0x18] sm:$0xff]
  %v1930 = vsel %vm1055, %v1925, 0
  %v1933 = vsel %vm1055, %v1926, 0
  %v1936 = vsel %vm1055, %v1927, 0
  %v1939 = vsel %vm1055, %v1928, 0
  %1941 = vmatprep.subr.mxu0 0.0
  %1942 = vmatpush1.msra.mxu0 %v1922
  %1943 = vmatprep.subr.mxu0 0.0
  %1944 = vmatpush1.msra.mxu0 %v1923
  %1945 = vmatprep.subr.mxu0 0.0
  %1946 = vmatpush1.msra.mxu0 0.0
  %1947 = vmatprep.subr.mxu0 0.0
  %1948 = vmatpush1.msra.mxu0 0.0
  %1949 = vmatprep.subr.mxu0 0.0
  %1950 = vmatpush1.msra.mxu0 0.0
  %1951 = vmatprep.subr.mxu0 0.0
  %1952 = vmatpush1.msra.mxu0 0.0
  %1953 = vmatprep.subr.mxu0 0.0
  %1954 = vmatpush1.msra.mxu0 0.0
  %1955 = vmatprep.subr.mxu0 0.0
  %1956 = vmatpush1.msra.mxu0 0.0
  %1957 = vmatprep.subr.mxu0 0.0
  %1958 = vmatpush1.msra.mxu0 0.0
  %1959 = vmatprep.subr.mxu0 0.0
  %1960 = vmatpush1.msra.mxu0 0.0
  %1961 = vmatprep.subr.mxu0 0.0
  %1962 = vmatpush1.msra.mxu0 0.0
  %1963 = vmatprep.subr.mxu0 0.0
  %1964 = vmatpush1.msra.mxu0 0.0
  %1965 = vmatprep.subr.mxu0 0.0
  %1966 = vmatpush1.msra.mxu0 0.0
  %1967 = vmatprep.subr.mxu0 0.0
  %1968 = vmatpush1.msra.mxu0 0.0
  %1969 = vmatprep.subr.mxu0 0.0
  %1970 = vmatpush1.msra.mxu0 0.0
  %1971 = vmatprep.subr.mxu0 0.0
  %1972 = vmatpush1.msra.mxu0 0.0
  %1973 = vmatprep.subr.mxu0 0.0
  %1974 = vmatpush1.msra.mxu0 0.0
  %1975 = vmatprep.subr.mxu0 0.0
  %1976 = vmatpush1.msra.mxu0 0.0
  %1977 = vmatprep.subr.mxu0 0.0
  %1978 = vmatpush1.msra.mxu0 0.0
  %1979 = vmatprep.subr.mxu0 0.0
  %1980 = vmatpush1.msra.mxu0 0.0
  %1981 = vmatprep.subr.mxu0 0.0
  %1982 = vmatpush1.msra.mxu0 0.0
  %1983 = vmatprep.subr.mxu0 0.0
  %1984 = vmatpush1.msra.mxu0 0.0
  %1985 = vmatprep.subr.mxu0 0.0
  %1986 = vmatpush1.msra.mxu0 0.0
  %1987 = vmatprep.subr.mxu0 0.0
  %1988 = vmatpush1.msra.mxu0 0.0
  %1989 = vmatprep.subr.mxu0 0.0
  %1990 = vmatpush1.msra.mxu0 0.0
  %1991 = vmatprep.subr.mxu0 0.0
  %1992 = vmatpush1.msra.mxu0 0.0
  %1993 = vmatprep.subr.mxu0 0.0
  %1994 = vmatpush1.msra.mxu0 0.0
  %1995 = vmatprep.subr.mxu0 0.0
  %1996 = vmatpush1.msra.mxu0 0.0
  %1997 = vmatprep.subr.mxu0 0.0
  %1998 = vmatpush1.msra.mxu0 0.0
  %1999 = vmatprep.subr.mxu0 0.0
  %2000 = vmatpush1.msra.mxu0 0.0
  %2001 = vmatprep.subr.mxu0 0.0
  %2002 = vmatpush1.msra.mxu0 0.0
  %2003 = vmatprep.subr.mxu0 0.0
  %2004 = vmatpush1.msra.mxu0 0.0
  %2005 = vmatprep.mubr.f32.mxu0 0.0
  %2006 = vmatmul.mubr.f32.gmra.mrb[0].mxu0 %v1930
  %v2007 = vpop.f32.mrb[0].mxu0
  %v2008 = vadd.f32 0.0, %v2007
  %v2009 = vpop.f32.mrb[0].mxu0
  %2010 = vmatprep.mubr.f32.mxu0 0.0
  %2011 = vmatmul.mubr.f32.gmra.mrb[0].mxu0 %v1933
  %v2012 = vpop.f32.mrb[0].mxu0
  %v2013 = vadd.f32 0.0, %v2012
  %v2014 = vpop.f32.mrb[0].mxu0
  %2015 = vmatprep.mubr.f32.mxu0 0.0
  %2016 = vmatmul.mubr.f32.gmra.mrb[0].mxu0 %v1936
  %v2017 = vpop.f32.mrb[0].mxu0
  %v2018 = vadd.f32 0.0, %v2017
  %v2019 = vpop.f32.mrb[0].mxu0
  %2020 = vmatprep.mubr.f32.mxu0 0.0
  %2021 = vmatmul.mubr.f32.gmra.mrb[0].mxu0 %v1939
  %v2022 = vpop.f32.mrb[0].mxu0
  %v2023 = vadd.f32 0.0, %v2022
  %v2024 = vpop.f32.mrb[0].mxu0
  %2025 = vdwg.mxu0
  %v2026 = vadd.f32 %v1914, %v2008
  %v2027 = vadd.f32 %v1915, %v2013
  %v2028 = vadd.f32 %v1916, %v2018
  %v2029 = vadd.f32 %v1917, %v2023
  %v2030 = vld [vmem:[%s5] sm:$0xff]
  %v2031 = vld [vmem:[%s5 + $0x8] sm:$0xff]
  %v2032 = vld [vmem:[%s5 + $0x10] sm:$0xff]
  %v2033 = vld [vmem:[%s5 + $0x18] sm:$0xff]
  %2035 = vset.pattern.permute.xlu0 0
  %2036 = vperm.xlu0 %2035, %v2030
  %v2037 = vpop.permute.xlu0 %2036
  %2040 = vset.pattern.permute.xlu0 0
  %2041 = vperm.xlu0 %2040, %v2031
  %v2042 = vpop.permute.xlu0 %2041
  %2045 = vset.pattern.permute.xlu0 0
  %2046 = vperm.xlu0 %2045, %v2032
  %v2047 = vpop.permute.xlu0 %2046
  %2050 = vset.pattern.permute.xlu0 0
  %2051 = vperm.xlu0 %2050, %v2033
  %v2052 = vpop.permute.xlu0 %2051
  %v2054 = vadd.f32 %v2026, %v2037
  %v2055 = vadd.f32 %v2027, %v2042
  %v2056 = vadd.f32 %v2028, %v2047
  %v2057 = vadd.f32 %v2029, %v2052
  %v2058 = vmax.f32 %v2054, 0.0
  %v2059 = vmax.f32 %v2055, 0.0
  %v2060 = vmax.f32 %v2056, 0.0
  %v2061 = vmax.f32 %v2057, 0.0
  %2062 = vrot.lane.b32.xlu0 %v2058, 9
  %v2063 = vpop.permute.xlu0 %2062
  %2064 = vrot.lane.b32.xlu0 %v2059, 9
  %v2065 = vpop.permute.xlu0 %2064
  %2066 = vrot.lane.b32.xlu0 %v2060, 9
  %v2067 = vpop.permute.xlu0 %2066
  %2068 = vrot.lane.b32.xlu0 %v2061, 9
  %v2069 = vpop.permute.xlu0 %2068
  %v2070 = vmul.f32 %v2063, %v60
  %v2071 = vmul.f32 %v2065, %v60
  %v2072 = vmul.f32 %v2067, %v60
  %v2073 = vmul.f32 %v2069, %v60
  %v2074 = vld [vmem:[%s6] sm:$0xf]
  %2075 = vrot.lane.b32.xlu0 %v2058, 8
  %v2076 = vpop.permute.xlu0 %2075
  %2077 = vrot.lane.b32.xlu0 %v2059, 8
  %v2078 = vpop.permute.xlu0 %2077
  %2079 = vrot.lane.b32.xlu0 %v2060, 8
  %v2080 = vpop.permute.xlu0 %2079
  %2081 = vrot.lane.b32.xlu0 %v2061, 8
  %v2082 = vpop.permute.xlu0 %2081
  %v2083 = vmul.f32 %v2076, %v86
  %v2084 = vmul.f32 %v2078, %v86
  %v2085 = vmul.f32 %v2080, %v86
  %v2086 = vmul.f32 %v2082, %v86
  %s2087 = scalar_lea.vmem %s6, 4
  %v2088 = vld [vmem:[%s2087] sm:$0xf]
  %vm2089 = vcmask 261120
  %v2091 = vsel %vm2089, %v2088, 0
  %2093 = vmatprep.subr.mxu0 0.0
  %2094 = vmatpush1.msra.mxu0 %v2083
  %2095 = vmatprep.subr.mxu0 0.0
  %2096 = vmatpush1.msra.mxu0 %v2084
  %2097 = vmatprep.subr.mxu0 0.0
  %2098 = vmatpush1.msra.mxu0 %v2085
  %2099 = vmatprep.subr.mxu0 0.0
  %2100 = vmatpush1.msra.mxu0 %v2086
  %2101 = vmatprep.subr.mxu0 0.0
  %2102 = vmatpush1.msra.mxu0 0.0
  %2103 = vmatprep.subr.mxu0 0.0
  %2104 = vmatpush1.msra.mxu0 0.0
  %2105 = vmatprep.subr.mxu0 0.0
  %2106 = vmatpush1.msra.mxu0 0.0
  %2107 = vmatprep.subr.mxu0 0.0
  %2108 = vmatpush1.msra.mxu0 0.0
  %2109 = vmatprep.subr.mxu0 0.0
  %2110 = vmatpush1.msra.mxu0 0.0
  %2111 = vmatprep.subr.mxu0 0.0
  %2112 = vmatpush1.msra.mxu0 0.0
  %2113 = vmatprep.subr.mxu0 0.0
  %2114 = vmatpush1.msra.mxu0 0.0
  %2115 = vmatprep.subr.mxu0 0.0
  %2116 = vmatpush1.msra.mxu0 0.0
  %2117 = vmatprep.subr.mxu0 0.0
  %2118 = vmatpush1.msra.mxu0 0.0
  %2119 = vmatprep.subr.mxu0 0.0
  %2120 = vmatpush1.msra.mxu0 0.0
  %2121 = vmatprep.subr.mxu0 0.0
  %2122 = vmatpush1.msra.mxu0 0.0
  %2123 = vmatprep.subr.mxu0 0.0
  %2124 = vmatpush1.msra.mxu0 0.0
  %2125 = vmatprep.subr.mxu0 0.0
  %2126 = vmatpush1.msra.mxu0 0.0
  %2127 = vmatprep.subr.mxu0 0.0
  %2128 = vmatpush1.msra.mxu0 0.0
  %2129 = vmatprep.subr.mxu0 0.0
  %2130 = vmatpush1.msra.mxu0 0.0
  %2131 = vmatprep.subr.mxu0 0.0
  %2132 = vmatpush1.msra.mxu0 0.0
  %2133 = vmatprep.subr.mxu0 0.0
  %2134 = vmatpush1.msra.mxu0 0.0
  %2135 = vmatprep.subr.mxu0 0.0
  %2136 = vmatpush1.msra.mxu0 0.0
  %2137 = vmatprep.subr.mxu0 0.0
  %2138 = vmatpush1.msra.mxu0 0.0
  %2139 = vmatprep.subr.mxu0 0.0
  %2140 = vmatpush1.msra.mxu0 0.0
  %2141 = vmatprep.subr.mxu0 0.0
  %2142 = vmatpush1.msra.mxu0 0.0
  %2143 = vmatprep.subr.mxu0 0.0
  %2144 = vmatpush1.msra.mxu0 0.0
  %2145 = vmatprep.subr.mxu0 0.0
  %2146 = vmatpush1.msra.mxu0 0.0
  %2147 = vmatprep.subr.mxu0 0.0
  %2148 = vmatpush1.msra.mxu0 0.0
  %2149 = vmatprep.subr.mxu0 0.0
  %2150 = vmatpush1.msra.mxu0 0.0
  %2151 = vmatprep.subr.mxu0 0.0
  %2152 = vmatpush1.msra.mxu0 0.0
  %2153 = vmatprep.subr.mxu0 0.0
  %2154 = vmatpush1.msra.mxu0 0.0
  %2155 = vmatprep.subr.mxu0 0.0
  %2156 = vmatpush1.msra.mxu0 0.0
  %2157 = vmatprep.mubr.f32.mxu0 0.0
  %2158 = vmatmul.mubr.f32.gmra.mrb[0].mxu0 %v2091
  %v2159 = vpop.f32.mrb[0].mxu0
  %v2160 = vadd.f32 0.0, %v2159
  %v2161 = vpop.f32.mrb[0].mxu0
  %2162 = vdwg.mxu0
  %v2164 = vsel %vm2089, %v2074, 0
  %2166 = vmatprep.subr.mxu0 0.0
  %2167 = vmatpush1.msra.mxu0 %v2070
  %2168 = vmatprep.subr.mxu0 0.0
  %2169 = vmatpush1.msra.mxu0 %v2071
  %2170 = vmatprep.subr.mxu0 0.0
  %2171 = vmatpush1.msra.mxu0 %v2072
  %2172 = vmatprep.subr.mxu0 0.0
  %2173 = vmatpush1.msra.mxu0 %v2073
  %2174 = vmatprep.subr.mxu0 0.0
  %2175 = vmatpush1.msra.mxu0 0.0
  %2176 = vmatprep.subr.mxu0 0.0
  %2177 = vmatpush1.msra.mxu0 0.0
  %2178 = vmatprep.subr.mxu0 0.0
  %2179 = vmatpush1.msra.mxu0 0.0
  %2180 = vmatprep.subr.mxu0 0.0
  %2181 = vmatpush1.msra.mxu0 0.0
  %2182 = vmatprep.subr.mxu0 0.0
  %2183 = vmatpush1.msra.mxu0 0.0
  %2184 = vmatprep.subr.mxu0 0.0
  %2185 = vmatpush1.msra.mxu0 0.0
  %2186 = vmatprep.subr.mxu0 0.0
  %2187 = vmatpush1.msra.mxu0 0.0
  %2188 = vmatprep.subr.mxu0 0.0
  %2189 = vmatpush1.msra.mxu0 0.0
  %2190 = vmatprep.subr.mxu0 0.0
  %2191 = vmatpush1.msra.mxu0 0.0
  %2192 = vmatprep.subr.mxu0 0.0
  %2193 = vmatpush1.msra.mxu0 0.0
  %2194 = vmatprep.subr.mxu0 0.0
  %2195 = vmatpush1.msra.mxu0 0.0
  %2196 = vmatprep.subr.mxu0 0.0
  %2197 = vmatpush1.msra.mxu0 0.0
  %2198 = vmatprep.subr.mxu0 0.0
  %2199 = vmatpush1.msra.mxu0 0.0
  %2200 = vmatprep.subr.mxu0 0.0
  %2201 = vmatpush1.msra.mxu0 0.0
  %2202 = vmatprep.subr.mxu0 0.0
  %2203 = vmatpush1.msra.mxu0 0.0
  %2204 = vmatprep.subr.mxu0 0.0
  %2205 = vmatpush1.msra.mxu0 0.0
  %2206 = vmatprep.subr.mxu0 0.0
  %2207 = vmatpush1.msra.mxu0 0.0
  %2208 = vmatprep.subr.mxu0 0.0
  %2209 = vmatpush1.msra.mxu0 0.0
  %2210 = vmatprep.subr.mxu0 0.0
  %2211 = vmatpush1.msra.mxu0 0.0
  %2212 = vmatprep.subr.mxu0 0.0
  %2213 = vmatpush1.msra.mxu0 0.0
  %2214 = vmatprep.subr.mxu0 0.0
  %2215 = vmatpush1.msra.mxu0 0.0
  %2216 = vmatprep.subr.mxu0 0.0
  %2217 = vmatpush1.msra.mxu0 0.0
  %2218 = vmatprep.subr.mxu0 0.0
  %2219 = vmatpush1.msra.mxu0 0.0
  %2220 = vmatprep.subr.mxu0 0.0
  %2221 = vmatpush1.msra.mxu0 0.0
  %2222 = vmatprep.subr.mxu0 0.0
  %2223 = vmatpush1.msra.mxu0 0.0
  %2224 = vmatprep.subr.mxu0 0.0
  %2225 = vmatpush1.msra.mxu0 0.0
  %2226 = vmatprep.subr.mxu0 0.0
  %2227 = vmatpush1.msra.mxu0 0.0
  %2228 = vmatprep.subr.mxu0 0.0
  %2229 = vmatpush1.msra.mxu0 0.0
  %2230 = vmatprep.mubr.f32.mxu0 0.0
  %2231 = vmatmul.mubr.f32.gmra.mrb[0].mxu0 %v2164
  %v2232 = vpop.f32.mrb[0].mxu0
  %v2233 = vadd.f32 %v2160, %v2232
  %v2234 = vpop.f32.mrb[0].mxu0
  %2235 = vdwg.mxu0
  %2236 = vrot.lane.b32.xlu0 %v2058, 7
  %v2237 = vpop.permute.xlu0 %2236
  %2238 = vrot.lane.b32.xlu0 %v2059, 7
  %v2239 = vpop.permute.xlu0 %2238
  %2240 = vrot.lane.b32.xlu0 %v2060, 7
  %v2241 = vpop.permute.xlu0 %2240
  %2242 = vrot.lane.b32.xlu0 %v2061, 7
  %v2243 = vpop.permute.xlu0 %2242
  %v2244 = vmul.f32 %v2237, %v276
  %v2245 = vmul.f32 %v2239, %v276
  %v2246 = vmul.f32 %v2241, %v276
  %v2247 = vmul.f32 %v2243, %v276
  %s2248 = scalar_lea.vmem %s6, 8
  %v2249 = vld [vmem:[%s2248] sm:$0xf]
  %v2251 = vsel %vm2089, %v2249, 0
  %2253 = vmatprep.subr.mxu0 0.0
  %2254 = vmatpush1.msra.mxu0 %v2244
  %2255 = vmatprep.subr.mxu0 0.0
  %2256 = vmatpush1.msra.mxu0 %v2245
  %2257 = vmatprep.subr.mxu0 0.0
  %2258 = vmatpush1.msra.mxu0 %v2246
  %2259 = vmatprep.subr.mxu0 0.0
  %2260 = vmatpush1.msra.mxu0 %v2247
  %2261 = vmatprep.subr.mxu0 0.0
  %2262 = vmatpush1.msra.mxu0 0.0
  %2263 = vmatprep.subr.mxu0 0.0
  %2264 = vmatpush1.msra.mxu0 0.0
  %2265 = vmatprep.subr.mxu0 0.0
  %2266 = vmatpush1.msra.mxu0 0.0
  %2267 = vmatprep.subr.mxu0 0.0
  %2268 = vmatpush1.msra.mxu0 0.0
  %2269 = vmatprep.subr.mxu0 0.0
  %2270 = vmatpush1.msra.mxu0 0.0
  %2271 = vmatprep.subr.mxu0 0.0
  %2272 = vmatpush1.msra.mxu0 0.0
  %2273 = vmatprep.subr.mxu0 0.0
  %2274 = vmatpush1.msra.mxu0 0.0
  %2275 = vmatprep.subr.mxu0 0.0
  %2276 = vmatpush1.msra.mxu0 0.0
  %2277 = vmatprep.subr.mxu0 0.0
  %2278 = vmatpush1.msra.mxu0 0.0
  %2279 = vmatprep.subr.mxu0 0.0
  %2280 = vmatpush1.msra.mxu0 0.0
  %2281 = vmatprep.subr.mxu0 0.0
  %2282 = vmatpush1.msra.mxu0 0.0
  %2283 = vmatprep.subr.mxu0 0.0
  %2284 = vmatpush1.msra.mxu0 0.0
  %2285 = vmatprep.subr.mxu0 0.0
  %2286 = vmatpush1.msra.mxu0 0.0
  %2287 = vmatprep.subr.mxu0 0.0
  %2288 = vmatpush1.msra.mxu0 0.0
  %2289 = vmatprep.subr.mxu0 0.0
  %2290 = vmatpush1.msra.mxu0 0.0
  %2291 = vmatprep.subr.mxu0 0.0
  %2292 = vmatpush1.msra.mxu0 0.0
  %2293 = vmatprep.subr.mxu0 0.0
  %2294 = vmatpush1.msra.mxu0 0.0
  %2295 = vmatprep.subr.mxu0 0.0
  %2296 = vmatpush1.msra.mxu0 0.0
  %2297 = vmatprep.subr.mxu0 0.0
  %2298 = vmatpush1.msra.mxu0 0.0
  %2299 = vmatprep.subr.mxu0 0.0
  %2300 = vmatpush1.msra.mxu0 0.0
  %2301 = vmatprep.subr.mxu0 0.0
  %2302 = vmatpush1.msra.mxu0 0.0
  %2303 = vmatprep.subr.mxu0 0.0
  %2304 = vmatpush1.msra.mxu0 0.0
  %2305 = vmatprep.subr.mxu0 0.0
  %2306 = vmatpush1.msra.mxu0 0.0
  %2307 = vmatprep.subr.mxu0 0.0
  %2308 = vmatpush1.msra.mxu0 0.0
  %2309 = vmatprep.subr.mxu0 0.0
  %2310 = vmatpush1.msra.mxu0 0.0
  %2311 = vmatprep.subr.mxu0 0.0
  %2312 = vmatpush1.msra.mxu0 0.0
  %2313 = vmatprep.subr.mxu0 0.0
  %2314 = vmatpush1.msra.mxu0 0.0
  %2315 = vmatprep.subr.mxu0 0.0
  %2316 = vmatpush1.msra.mxu0 0.0
  %2317 = vmatprep.mubr.f32.mxu0 0.0
  %2318 = vmatmul.mubr.f32.gmra.mrb[0].mxu0 %v2251
  %v2319 = vpop.f32.mrb[0].mxu0
  %v2320 = vadd.f32 0.0, %v2319
  %v2321 = vpop.f32.mrb[0].mxu0
  %2322 = vdwg.mxu0
  %v2323 = vadd.f32 %v2233, %v2320
  %2324 = vrot.lane.b32.xlu0 %v2058, 1
  %v2325 = vpop.permute.xlu0 %2324
  %2326 = vrot.lane.b32.xlu0 %v2059, 1
  %v2327 = vpop.permute.xlu0 %2326
  %2328 = vrot.lane.b32.xlu0 %v2060, 1
  %v2329 = vpop.permute.xlu0 %2328
  %2330 = vrot.lane.b32.xlu0 %v2061, 1
  %v2331 = vpop.permute.xlu0 %2330
  %v2332 = vmul.f32 %v2325, %v386
  %v2333 = vmul.f32 %v2327, %v386
  %v2334 = vmul.f32 %v2329, %v386
  %v2335 = vmul.f32 %v2331, %v386
  %s2336 = scalar_lea.vmem %s6, 12
  %v2337 = vld [vmem:[%s2336] sm:$0xf]
  %v2339 = vsel %vm2089, %v2337, 0
  %2341 = vmatprep.subr.mxu0 0.0
  %2342 = vmatpush1.msra.mxu0 %v2332
  %2343 = vmatprep.subr.mxu0 0.0
  %2344 = vmatpush1.msra.mxu0 %v2333
  %2345 = vmatprep.subr.mxu0 0.0
  %2346 = vmatpush1.msra.mxu0 %v2334
  %2347 = vmatprep.subr.mxu0 0.0
  %2348 = vmatpush1.msra.mxu0 %v2335
  %2349 = vmatprep.subr.mxu0 0.0
  %2350 = vmatpush1.msra.mxu0 0.0
  %2351 = vmatprep.subr.mxu0 0.0
  %2352 = vmatpush1.msra.mxu0 0.0
  %2353 = vmatprep.subr.mxu0 0.0
  %2354 = vmatpush1.msra.mxu0 0.0
  %2355 = vmatprep.subr.mxu0 0.0
  %2356 = vmatpush1.msra.mxu0 0.0
  %2357 = vmatprep.subr.mxu0 0.0
  %2358 = vmatpush1.msra.mxu0 0.0
  %2359 = vmatprep.subr.mxu0 0.0
  %2360 = vmatpush1.msra.mxu0 0.0
  %2361 = vmatprep.subr.mxu0 0.0
  %2362 = vmatpush1.msra.mxu0 0.0
  %2363 = vmatprep.subr.mxu0 0.0
  %2364 = vmatpush1.msra.mxu0 0.0
  %2365 = vmatprep.subr.mxu0 0.0
  %2366 = vmatpush1.msra.mxu0 0.0
  %2367 = vmatprep.subr.mxu0 0.0
  %2368 = vmatpush1.msra.mxu0 0.0
  %2369 = vmatprep.subr.mxu0 0.0
  %2370 = vmatpush1.msra.mxu0 0.0
  %2371 = vmatprep.subr.mxu0 0.0
  %2372 = vmatpush1.msra.mxu0 0.0
  %2373 = vmatprep.subr.mxu0 0.0
  %2374 = vmatpush1.msra.mxu0 0.0
  %2375 = vmatprep.subr.mxu0 0.0
  %2376 = vmatpush1.msra.mxu0 0.0
  %2377 = vmatprep.subr.mxu0 0.0
  %2378 = vmatpush1.msra.mxu0 0.0
  %2379 = vmatprep.subr.mxu0 0.0
  %2380 = vmatpush1.msra.mxu0 0.0
  %2381 = vmatprep.subr.mxu0 0.0
  %2382 = vmatpush1.msra.mxu0 0.0
  %2383 = vmatprep.subr.mxu0 0.0
  %2384 = vmatpush1.msra.mxu0 0.0
  %2385 = vmatprep.subr.mxu0 0.0
  %2386 = vmatpush1.msra.mxu0 0.0
  %2387 = vmatprep.subr.mxu0 0.0
  %2388 = vmatpush1.msra.mxu0 0.0
  %2389 = vmatprep.subr.mxu0 0.0
  %2390 = vmatpush1.msra.mxu0 0.0
  %2391 = vmatprep.subr.mxu0 0.0
  %2392 = vmatpush1.msra.mxu0 0.0
  %2393 = vmatprep.subr.mxu0 0.0
  %2394 = vmatpush1.msra.mxu0 0.0
  %2395 = vmatprep.subr.mxu0 0.0
  %2396 = vmatpush1.msra.mxu0 0.0
  %2397 = vmatprep.subr.mxu0 0.0
  %2398 = vmatpush1.msra.mxu0 0.0
  %2399 = vmatprep.subr.mxu0 0.0
  %2400 = vmatpush1.msra.mxu0 0.0
  %2401 = vmatprep.subr.mxu0 0.0
  %2402 = vmatpush1.msra.mxu0 0.0
  %2403 = vmatprep.subr.mxu0 0.0
  %2404 = vmatpush1.msra.mxu0 0.0
  %2405 = vmatprep.mubr.f32.mxu0 0.0
  %2406 = vmatmul.mubr.f32.gmra.mrb[0].mxu0 %v2339
  %v2407 = vpop.f32.mrb[0].mxu0
  %v2408 = vadd.f32 0.0, %v2407
  %v2409 = vpop.f32.mrb[0].mxu0
  %2410 = vdwg.mxu0
  %v2411 = vadd.f32 %v2323, %v2408
  %v2412 = vmul.f32 %v2058, %v484
  %v2413 = vmul.f32 %v2059, %v484
  %v2414 = vmul.f32 %v2060, %v484
  %v2415 = vmul.f32 %v2061, %v484
  %s2416 = scalar_lea.vmem %s6, 16
  %v2417 = vld [vmem:[%s2416] sm:$0xf]
  %v2419 = vsel %vm2089, %v2417, 0
  %2421 = vmatprep.subr.mxu0 0.0
  %2422 = vmatpush1.msra.mxu0 %v2412
  %2423 = vmatprep.subr.mxu0 0.0
  %2424 = vmatpush1.msra.mxu0 %v2413
  %2425 = vmatprep.subr.mxu0 0.0
  %2426 = vmatpush1.msra.mxu0 %v2414
  %2427 = vmatprep.subr.mxu0 0.0
  %2428 = vmatpush1.msra.mxu0 %v2415
  %2429 = vmatprep.subr.mxu0 0.0
  %2430 = vmatpush1.msra.mxu0 0.0
  %2431 = vmatprep.subr.mxu0 0.0
  %2432 = vmatpush1.msra.mxu0 0.0
  %2433 = vmatprep.subr.mxu0 0.0
  %2434 = vmatpush1.msra.mxu0 0.0
  %2435 = vmatprep.subr.mxu0 0.0
  %2436 = vmatpush1.msra.mxu0 0.0
  %2437 = vmatprep.subr.mxu0 0.0
  %2438 = vmatpush1.msra.mxu0 0.0
  %2439 = vmatprep.subr.mxu0 0.0
  %2440 = vmatpush1.msra.mxu0 0.0
  %2441 = vmatprep.subr.mxu0 0.0
  %2442 = vmatpush1.msra.mxu0 0.0
  %2443 = vmatprep.subr.mxu0 0.0
  %2444 = vmatpush1.msra.mxu0 0.0
  %2445 = vmatprep.subr.mxu0 0.0
  %2446 = vmatpush1.msra.mxu0 0.0
  %2447 = vmatprep.subr.mxu0 0.0
  %2448 = vmatpush1.msra.mxu0 0.0
  %2449 = vmatprep.subr.mxu0 0.0
  %2450 = vmatpush1.msra.mxu0 0.0
  %2451 = vmatprep.subr.mxu0 0.0
  %2452 = vmatpush1.msra.mxu0 0.0
  %2453 = vmatprep.subr.mxu0 0.0
  %2454 = vmatpush1.msra.mxu0 0.0
  %2455 = vmatprep.subr.mxu0 0.0
  %2456 = vmatpush1.msra.mxu0 0.0
  %2457 = vmatprep.subr.mxu0 0.0
  %2458 = vmatpush1.msra.mxu0 0.0
  %2459 = vmatprep.subr.mxu0 0.0
  %2460 = vmatpush1.msra.mxu0 0.0
  %2461 = vmatprep.subr.mxu0 0.0
  %2462 = vmatpush1.msra.mxu0 0.0
  %2463 = vmatprep.subr.mxu0 0.0
  %2464 = vmatpush1.msra.mxu0 0.0
  %2465 = vmatprep.subr.mxu0 0.0
  %2466 = vmatpush1.msra.mxu0 0.0
  %2467 = vmatprep.subr.mxu0 0.0
  %2468 = vmatpush1.msra.mxu0 0.0
  %2469 = vmatprep.subr.mxu0 0.0
  %2470 = vmatpush1.msra.mxu0 0.0
  %2471 = vmatprep.subr.mxu0 0.0
  %2472 = vmatpush1.msra.mxu0 0.0
  %2473 = vmatprep.subr.mxu0 0.0
  %2474 = vmatpush1.msra.mxu0 0.0
  %2475 = vmatprep.subr.mxu0 0.0
  %2476 = vmatpush1.msra.mxu0 0.0
  %2477 = vmatprep.subr.mxu0 0.0
  %2478 = vmatpush1.msra.mxu0 0.0
  %2479 = vmatprep.subr.mxu0 0.0
  %2480 = vmatpush1.msra.mxu0 0.0
  %2481 = vmatprep.subr.mxu0 0.0
  %2482 = vmatpush1.msra.mxu0 0.0
  %2483 = vmatprep.subr.mxu0 0.0
  %2484 = vmatpush1.msra.mxu0 0.0
  %2485 = vmatprep.mubr.f32.mxu0 0.0
  %2486 = vmatmul.mubr.f32.gmra.mrb[0].mxu0 %v2419
  %v2487 = vpop.f32.mrb[0].mxu0
  %v2488 = vadd.f32 0.0, %v2487
  %v2489 = vpop.f32.mrb[0].mxu0
  %2490 = vdwg.mxu0
  %v2491 = vadd.f32 %v2411, %v2488
  %2492 = vrot.lane.b32.xlu0 %v2058, 127
  %v2493 = vpop.permute.xlu0 %2492
  %2494 = vrot.lane.b32.xlu0 %v2059, 127
  %v2495 = vpop.permute.xlu0 %2494
  %2496 = vrot.lane.b32.xlu0 %v2060, 127
  %v2497 = vpop.permute.xlu0 %2496
  %2498 = vrot.lane.b32.xlu0 %v2061, 127
  %v2499 = vpop.permute.xlu0 %2498
  %v2500 = vmul.f32 %v2493, %v594
  %v2501 = vmul.f32 %v2495, %v594
  %v2502 = vmul.f32 %v2497, %v594
  %v2503 = vmul.f32 %v2499, %v594
  %s2504 = scalar_lea.vmem %s6, 20
  %v2505 = vld [vmem:[%s2504] sm:$0xf]
  %v2507 = vsel %vm2089, %v2505, 0
  %2509 = vmatprep.subr.mxu0 0.0
  %2510 = vmatpush1.msra.mxu0 %v2500
  %2511 = vmatprep.subr.mxu0 0.0
  %2512 = vmatpush1.msra.mxu0 %v2501
  %2513 = vmatprep.subr.mxu0 0.0
  %2514 = vmatpush1.msra.mxu0 %v2502
  %2515 = vmatprep.subr.mxu0 0.0
  %2516 = vmatpush1.msra.mxu0 %v2503
  %2517 = vmatprep.subr.mxu0 0.0
  %2518 = vmatpush1.msra.mxu0 0.0
  %2519 = vmatprep.subr.mxu0 0.0
  %2520 = vmatpush1.msra.mxu0 0.0
  %2521 = vmatprep.subr.mxu0 0.0
  %2522 = vmatpush1.msra.mxu0 0.0
  %2523 = vmatprep.subr.mxu0 0.0
  %2524 = vmatpush1.msra.mxu0 0.0
  %2525 = vmatprep.subr.mxu0 0.0
  %2526 = vmatpush1.msra.mxu0 0.0
  %2527 = vmatprep.subr.mxu0 0.0
  %2528 = vmatpush1.msra.mxu0 0.0
  %2529 = vmatprep.subr.mxu0 0.0
  %2530 = vmatpush1.msra.mxu0 0.0
  %2531 = vmatprep.subr.mxu0 0.0
  %2532 = vmatpush1.msra.mxu0 0.0
  %2533 = vmatprep.subr.mxu0 0.0
  %2534 = vmatpush1.msra.mxu0 0.0
  %2535 = vmatprep.subr.mxu0 0.0
  %2536 = vmatpush1.msra.mxu0 0.0
  %2537 = vmatprep.subr.mxu0 0.0
  %2538 = vmatpush1.msra.mxu0 0.0
  %2539 = vmatprep.subr.mxu0 0.0
  %2540 = vmatpush1.msra.mxu0 0.0
  %2541 = vmatprep.subr.mxu0 0.0
  %2542 = vmatpush1.msra.mxu0 0.0
  %2543 = vmatprep.subr.mxu0 0.0
  %2544 = vmatpush1.msra.mxu0 0.0
  %2545 = vmatprep.subr.mxu0 0.0
  %2546 = vmatpush1.msra.mxu0 0.0
  %2547 = vmatprep.subr.mxu0 0.0
  %2548 = vmatpush1.msra.mxu0 0.0
  %2549 = vmatprep.subr.mxu0 0.0
  %2550 = vmatpush1.msra.mxu0 0.0
  %2551 = vmatprep.subr.mxu0 0.0
  %2552 = vmatpush1.msra.mxu0 0.0
  %2553 = vmatprep.subr.mxu0 0.0
  %2554 = vmatpush1.msra.mxu0 0.0
  %2555 = vmatprep.subr.mxu0 0.0
  %2556 = vmatpush1.msra.mxu0 0.0
  %2557 = vmatprep.subr.mxu0 0.0
  %2558 = vmatpush1.msra.mxu0 0.0
  %2559 = vmatprep.subr.mxu0 0.0
  %2560 = vmatpush1.msra.mxu0 0.0
  %2561 = vmatprep.subr.mxu0 0.0
  %2562 = vmatpush1.msra.mxu0 0.0
  %2563 = vmatprep.subr.mxu0 0.0
  %2564 = vmatpush1.msra.mxu0 0.0
  %2565 = vmatprep.subr.mxu0 0.0
  %2566 = vmatpush1.msra.mxu0 0.0
  %2567 = vmatprep.subr.mxu0 0.0
  %2568 = vmatpush1.msra.mxu0 0.0
  %2569 = vmatprep.subr.mxu0 0.0
  %2570 = vmatpush1.msra.mxu0 0.0
  %2571 = vmatprep.subr.mxu0 0.0
  %2572 = vmatpush1.msra.mxu0 0.0
  %2573 = vmatprep.mubr.f32.mxu0 0.0
  %2574 = vmatmul.mubr.f32.gmra.mrb[0].mxu0 %v2507
  %v2575 = vpop.f32.mrb[0].mxu0
  %v2576 = vadd.f32 0.0, %v2575
  %v2577 = vpop.f32.mrb[0].mxu0
  %2578 = vdwg.mxu0
  %v2579 = vadd.f32 %v2491, %v2576
  %2580 = vrot.lane.b32.xlu0 %v2058, 121
  %v2581 = vpop.permute.xlu0 %2580
  %2582 = vrot.lane.b32.xlu0 %v2059, 121
  %v2583 = vpop.permute.xlu0 %2582
  %2584 = vrot.lane.b32.xlu0 %v2060, 121
  %v2585 = vpop.permute.xlu0 %2584
  %2586 = vrot.lane.b32.xlu0 %v2061, 121
  %v2587 = vpop.permute.xlu0 %2586
  %v2588 = vmul.f32 %v2581, %v704
  %v2589 = vmul.f32 %v2583, %v704
  %v2590 = vmul.f32 %v2585, %v704
  %v2591 = vmul.f32 %v2587, %v704
  %s2592 = scalar_lea.vmem %s6, 24
  %v2593 = vld [vmem:[%s2592] sm:$0xf]
  %v2595 = vsel %vm2089, %v2593, 0
  %2597 = vmatprep.subr.mxu0 0.0
  %2598 = vmatpush1.msra.mxu0 %v2588
  %2599 = vmatprep.subr.mxu0 0.0
  %2600 = vmatpush1.msra.mxu0 %v2589
  %2601 = vmatprep.subr.mxu0 0.0
  %2602 = vmatpush1.msra.mxu0 %v2590
  %2603 = vmatprep.subr.mxu0 0.0
  %2604 = vmatpush1.msra.mxu0 %v2591
  %2605 = vmatprep.subr.mxu0 0.0
  %2606 = vmatpush1.msra.mxu0 0.0
  %2607 = vmatprep.subr.mxu0 0.0
  %2608 = vmatpush1.msra.mxu0 0.0
  %2609 = vmatprep.subr.mxu0 0.0
  %2610 = vmatpush1.msra.mxu0 0.0
  %2611 = vmatprep.subr.mxu0 0.0
  %2612 = vmatpush1.msra.mxu0 0.0
  %2613 = vmatprep.subr.mxu0 0.0
  %2614 = vmatpush1.msra.mxu0 0.0
  %2615 = vmatprep.subr.mxu0 0.0
  %2616 = vmatpush1.msra.mxu0 0.0
  %2617 = vmatprep.subr.mxu0 0.0
  %2618 = vmatpush1.msra.mxu0 0.0
  %2619 = vmatprep.subr.mxu0 0.0
  %2620 = vmatpush1.msra.mxu0 0.0
  %2621 = vmatprep.subr.mxu0 0.0
  %2622 = vmatpush1.msra.mxu0 0.0
  %2623 = vmatprep.subr.mxu0 0.0
  %2624 = vmatpush1.msra.mxu0 0.0
  %2625 = vmatprep.subr.mxu0 0.0
  %2626 = vmatpush1.msra.mxu0 0.0
  %2627 = vmatprep.subr.mxu0 0.0
  %2628 = vmatpush1.msra.mxu0 0.0
  %2629 = vmatprep.subr.mxu0 0.0
  %2630 = vmatpush1.msra.mxu0 0.0
  %2631 = vmatprep.subr.mxu0 0.0
  %2632 = vmatpush1.msra.mxu0 0.0
  %2633 = vmatprep.subr.mxu0 0.0
  %2634 = vmatpush1.msra.mxu0 0.0
  %2635 = vmatprep.subr.mxu0 0.0
  %2636 = vmatpush1.msra.mxu0 0.0
  %2637 = vmatprep.subr.mxu0 0.0
  %2638 = vmatpush1.msra.mxu0 0.0
  %2639 = vmatprep.subr.mxu0 0.0
  %2640 = vmatpush1.msra.mxu0 0.0
  %2641 = vmatprep.subr.mxu0 0.0
  %2642 = vmatpush1.msra.mxu0 0.0
  %2643 = vmatprep.subr.mxu0 0.0
  %2644 = vmatpush1.msra.mxu0 0.0
  %2645 = vmatprep.subr.mxu0 0.0
  %2646 = vmatpush1.msra.mxu0 0.0
  %2647 = vmatprep.subr.mxu0 0.0
  %2648 = vmatpush1.msra.mxu0 0.0
  %2649 = vmatprep.subr.mxu0 0.0
  %2650 = vmatpush1.msra.mxu0 0.0
  %2651 = vmatprep.subr.mxu0 0.0
  %2652 = vmatpush1.msra.mxu0 0.0
  %2653 = vmatprep.subr.mxu0 0.0
  %2654 = vmatpush1.msra.mxu0 0.0
  %2655 = vmatprep.subr.mxu0 0.0
  %2656 = vmatpush1.msra.mxu0 0.0
  %2657 = vmatprep.subr.mxu0 0.0
  %2658 = vmatpush1.msra.mxu0 0.0
  %2659 = vmatprep.subr.mxu0 0.0
  %2660 = vmatpush1.msra.mxu0 0.0
  %2661 = vmatprep.mubr.f32.mxu0 0.0
  %2662 = vmatmul.mubr.f32.gmra.mrb[0].mxu0 %v2595
  %v2663 = vpop.f32.mrb[0].mxu0
  %v2664 = vadd.f32 0.0, %v2663
  %v2665 = vpop.f32.mrb[0].mxu0
  %2666 = vdwg.mxu0
  %v2667 = vadd.f32 %v2579, %v2664
  %2668 = vrot.lane.b32.xlu0 %v2058, 120
  %v2669 = vpop.permute.xlu0 %2668
  %2670 = vrot.lane.b32.xlu0 %v2059, 120
  %v2671 = vpop.permute.xlu0 %2670
  %2672 = vrot.lane.b32.xlu0 %v2060, 120
  %v2673 = vpop.permute.xlu0 %2672
  %2674 = vrot.lane.b32.xlu0 %v2061, 120
  %v2675 = vpop.permute.xlu0 %2674
  %v2676 = vmul.f32 %v2669, %v814
  %v2677 = vmul.f32 %v2671, %v814
  %v2678 = vmul.f32 %v2673, %v814
  %v2679 = vmul.f32 %v2675, %v814
  %s2680 = scalar_lea.vmem %s6, 28
  %v2681 = vld [vmem:[%s2680] sm:$0xf]
  %v2683 = vsel %vm2089, %v2681, 0
  %2685 = vmatprep.subr.mxu0 0.0
  %2686 = vmatpush1.msra.mxu0 %v2676
  %2687 = vmatprep.subr.mxu0 0.0
  %2688 = vmatpush1.msra.mxu0 %v2677
  %2689 = vmatprep.subr.mxu0 0.0
  %2690 = vmatpush1.msra.mxu0 %v2678
  %2691 = vmatprep.subr.mxu0 0.0
  %2692 = vmatpush1.msra.mxu0 %v2679
  %2693 = vmatprep.subr.mxu0 0.0
  %2694 = vmatpush1.msra.mxu0 0.0
  %2695 = vmatprep.subr.mxu0 0.0
  %2696 = vmatpush1.msra.mxu0 0.0
  %2697 = vmatprep.subr.mxu0 0.0
  %2698 = vmatpush1.msra.mxu0 0.0
  %2699 = vmatprep.subr.mxu0 0.0
  %2700 = vmatpush1.msra.mxu0 0.0
  %2701 = vmatprep.subr.mxu0 0.0
  %2702 = vmatpush1.msra.mxu0 0.0
  %2703 = vmatprep.subr.mxu0 0.0
  %2704 = vmatpush1.msra.mxu0 0.0
  %2705 = vmatprep.subr.mxu0 0.0
  %2706 = vmatpush1.msra.mxu0 0.0
  %2707 = vmatprep.subr.mxu0 0.0
  %2708 = vmatpush1.msra.mxu0 0.0
  %2709 = vmatprep.subr.mxu0 0.0
  %2710 = vmatpush1.msra.mxu0 0.0
  %2711 = vmatprep.subr.mxu0 0.0
  %2712 = vmatpush1.msra.mxu0 0.0
  %2713 = vmatprep.subr.mxu0 0.0
  %2714 = vmatpush1.msra.mxu0 0.0
  %2715 = vmatprep.subr.mxu0 0.0
  %2716 = vmatpush1.msra.mxu0 0.0
  %2717 = vmatprep.subr.mxu0 0.0
  %2718 = vmatpush1.msra.mxu0 0.0
  %2719 = vmatprep.subr.mxu0 0.0
  %2720 = vmatpush1.msra.mxu0 0.0
  %2721 = vmatprep.subr.mxu0 0.0
  %2722 = vmatpush1.msra.mxu0 0.0
  %2723 = vmatprep.subr.mxu0 0.0
  %2724 = vmatpush1.msra.mxu0 0.0
  %2725 = vmatprep.subr.mxu0 0.0
  %2726 = vmatpush1.msra.mxu0 0.0
  %2727 = vmatprep.subr.mxu0 0.0
  %2728 = vmatpush1.msra.mxu0 0.0
  %2729 = vmatprep.subr.mxu0 0.0
  %2730 = vmatpush1.msra.mxu0 0.0
  %2731 = vmatprep.subr.mxu0 0.0
  %2732 = vmatpush1.msra.mxu0 0.0
  %2733 = vmatprep.subr.mxu0 0.0
  %2734 = vmatpush1.msra.mxu0 0.0
  %2735 = vmatprep.subr.mxu0 0.0
  %2736 = vmatpush1.msra.mxu0 0.0
  %2737 = vmatprep.subr.mxu0 0.0
  %2738 = vmatpush1.msra.mxu0 0.0
  %2739 = vmatprep.subr.mxu0 0.0
  %2740 = vmatpush1.msra.mxu0 0.0
  %2741 = vmatprep.subr.mxu0 0.0
  %2742 = vmatpush1.msra.mxu0 0.0
  %2743 = vmatprep.subr.mxu0 0.0
  %2744 = vmatpush1.msra.mxu0 0.0
  %2745 = vmatprep.subr.mxu0 0.0
  %2746 = vmatpush1.msra.mxu0 0.0
  %2747 = vmatprep.subr.mxu0 0.0
  %2748 = vmatpush1.msra.mxu0 0.0
  %2749 = vmatprep.mubr.f32.mxu0 0.0
  %2750 = vmatmul.mubr.f32.gmra.mrb[0].mxu0 %v2683
  %v2751 = vpop.f32.mrb[0].mxu0
  %v2752 = vadd.f32 0.0, %v2751
  %v2753 = vpop.f32.mrb[0].mxu0
  %2754 = vdwg.mxu0
  %v2755 = vadd.f32 %v2667, %v2752
  %2756 = vrot.lane.b32.xlu0 %v2058, 119
  %v2757 = vpop.permute.xlu0 %2756
  %2758 = vrot.lane.b32.xlu0 %v2059, 119
  %v2759 = vpop.permute.xlu0 %2758
  %2760 = vrot.lane.b32.xlu0 %v2060, 119
  %v2761 = vpop.permute.xlu0 %2760
  %2762 = vrot.lane.b32.xlu0 %v2061, 119
  %v2763 = vpop.permute.xlu0 %2762
  %v2764 = vmul.f32 %v2757, %v924
  %v2765 = vmul.f32 %v2759, %v924
  %v2766 = vmul.f32 %v2761, %v924
  %v2767 = vmul.f32 %v2763, %v924
  %s2768 = scalar_lea.vmem %s6, 32
  %v2769 = vld [vmem:[%s2768] sm:$0xf]
  %v2771 = vsel %vm2089, %v2769, 0
  %2773 = vmatprep.subr.mxu0 0.0
  %2774 = vmatpush1.msra.mxu0 %v2764
  %2775 = vmatprep.subr.mxu0 0.0
  %2776 = vmatpush1.msra.mxu0 %v2765
  %2777 = vmatprep.subr.mxu0 0.0
  %2778 = vmatpush1.msra.mxu0 %v2766
  %2779 = vmatprep.subr.mxu0 0.0
  %2780 = vmatpush1.msra.mxu0 %v2767
  %2781 = vmatprep.subr.mxu0 0.0
  %2782 = vmatpush1.msra.mxu0 0.0
  %2783 = vmatprep.subr.mxu0 0.0
  %2784 = vmatpush1.msra.mxu0 0.0
  %2785 = vmatprep.subr.mxu0 0.0
  %2786 = vmatpush1.msra.mxu0 0.0
  %2787 = vmatprep.subr.mxu0 0.0
  %2788 = vmatpush1.msra.mxu0 0.0
  %2789 = vmatprep.subr.mxu0 0.0
  %2790 = vmatpush1.msra.mxu0 0.0
  %2791 = vmatprep.subr.mxu0 0.0
  %2792 = vmatpush1.msra.mxu0 0.0
  %2793 = vmatprep.subr.mxu0 0.0
  %2794 = vmatpush1.msra.mxu0 0.0
  %2795 = vmatprep.subr.mxu0 0.0
  %2796 = vmatpush1.msra.mxu0 0.0
  %2797 = vmatprep.subr.mxu0 0.0
  %2798 = vmatpush1.msra.mxu0 0.0
  %2799 = vmatprep.subr.mxu0 0.0
  %2800 = vmatpush1.msra.mxu0 0.0
  %2801 = vmatprep.subr.mxu0 0.0
  %2802 = vmatpush1.msra.mxu0 0.0
  %2803 = vmatprep.subr.mxu0 0.0
  %2804 = vmatpush1.msra.mxu0 0.0
  %2805 = vmatprep.subr.mxu0 0.0
  %2806 = vmatpush1.msra.mxu0 0.0
  %2807 = vmatprep.subr.mxu0 0.0
  %2808 = vmatpush1.msra.mxu0 0.0
  %2809 = vmatprep.subr.mxu0 0.0
  %2810 = vmatpush1.msra.mxu0 0.0
  %2811 = vmatprep.subr.mxu0 0.0
  %2812 = vmatpush1.msra.mxu0 0.0
  %2813 = vmatprep.subr.mxu0 0.0
  %2814 = vmatpush1.msra.mxu0 0.0
  %2815 = vmatprep.subr.mxu0 0.0
  %2816 = vmatpush1.msra.mxu0 0.0
  %2817 = vmatprep.subr.mxu0 0.0
  %2818 = vmatpush1.msra.mxu0 0.0
  %2819 = vmatprep.subr.mxu0 0.0
  %2820 = vmatpush1.msra.mxu0 0.0
  %2821 = vmatprep.subr.mxu0 0.0
  %2822 = vmatpush1.msra.mxu0 0.0
  %2823 = vmatprep.subr.mxu0 0.0
  %2824 = vmatpush1.msra.mxu0 0.0
  %2825 = vmatprep.subr.mxu0 0.0
  %2826 = vmatpush1.msra.mxu0 0.0
  %2827 = vmatprep.subr.mxu0 0.0
  %2828 = vmatpush1.msra.mxu0 0.0
  %2829 = vmatprep.subr.mxu0 0.0
  %2830 = vmatpush1.msra.mxu0 0.0
  %2831 = vmatprep.subr.mxu0 0.0
  %2832 = vmatpush1.msra.mxu0 0.0
  %2833 = vmatprep.subr.mxu0 0.0
  %2834 = vmatpush1.msra.mxu0 0.0
  %2835 = vmatprep.subr.mxu0 0.0
  %2836 = vmatpush1.msra.mxu0 0.0
  %2837 = vmatprep.mubr.f32.mxu0 0.0
  %2838 = vmatmul.mubr.f32.gmra.mrb[0].mxu0 %v2771
  %v2839 = vpop.f32.mrb[0].mxu0
  %v2840 = vadd.f32 0.0, %v2839
  %v2841 = vpop.f32.mrb[0].mxu0
  %2842 = vdwg.mxu0
  %v2843 = vadd.f32 %v2755, %v2840
  %v2844 = vld [vmem:[%s7] sm:$0xf]
  %2846 = vset.pattern.permute.xlu0 0
  %2847 = vperm.xlu0 %2846, %v2844
  %v2848 = vpop.permute.xlu0 %2847
  %v2850 = vadd.f32 %v2843, %v2848
  %v2851 = vxor.u32 %v2850, 2147483648
  %v2852 = vmul.f32 %v2851, 1.442695
  %v2853 = vpow.pop %v2852
  %v2854 = vadd.f32 %v2853, 1.0
  %v2855 = vrcp.pop %v2854
  %v2856 = vmul.f32 1.0, %v2855
  %2857 = vst [vmem:[%s8] sm:$0xf] %v2856
  // Predicated region
  $region34: #{condition_net_forward.1} parent=0 // pred_check
    _
  $region35: #{condition_net_forward.1} parent=0 // pred_check_branch
    %2859 = sbr.rel (0) target = $region37
  $region36: #{condition_net_forward.1} parent=0 // pred_region
    _
  $region37: #{condition_net_forward.1} parent=0 // pred_fallthru
    _
  // Predicated region
  $region38: #{condition_net_forward.1} parent=0 // pred_check
    _
  $region39: #{condition_net_forward.1} parent=0 // pred_check_branch
    %2861 = sbr.rel (0) target = $region41
  $region40: #{condition_net_forward.1} parent=0 // pred_region
    _
  $region41: #{condition_net_forward.1} parent=0 // pred_fallthru
    _

</llo_original>
